<compile_context>
chip_gen: v6e
topology: v6e:2x2x1
jax: 0.10.0
libtpu: 0.0.40
codegen_flags: <defaults>
</compile_context>

<pallas_src>
import functools

import jax
import jax.numpy as jnp
from jax import lax
from jax.experimental import pallas as pl
from jax.experimental.pallas import tpu as pltpu


def _round_up(x, m):
    return ((x + m - 1) // m) * m


# ----------------------------- Pallas kernel ---------------------------------
def _conv_lrelu_kernel(ph_ref, w_ref, b_ref, o_ref, *, ks, th, wo_pad, cin, cout,
                       negative_slope):
    """One grid step = TH output rows x WO_pad output cols of one image.

    ph_ref : (4, PH, PW, Cin)    stride-phase decomposed padded input (VMEM)
    w_ref  : (ks*ks, Cin, Cout)  per-tap weight matrices (VMEM)
    b_ref  : (1, Cout)           bias (VMEM)
    o_ref  : (TH*WO_pad, Cout)   output tile
    """
    t = pl.program_id(1)
    row0 = t * th
    tm = th * wo_pad

    # Bias folded into the accumulator init; all epilogue math stays in f32.
    acc = jnp.broadcast_to(b_ref[...].astype(jnp.float32), (tm, cout))

    # In-kernel tap accumulation: 25 small matmuls, no im2col materialization.
    for kh in range(ks):
        for kw in range(ks):
            p = (kh % 2) * 2 + (kw % 2)          # which stride phase
            dh, dw = kh // 2, kw // 2            # offset inside that phase
            lhs = ph_ref[p, pl.ds(row0 + dh, th), dw:dw + wo_pad, :]  # (th, wo_pad, cin)
            lhs2 = lhs.reshape(tm, cin)          # wo_pad is a multiple of 8 -> trivial merge
            acc = acc + jnp.dot(lhs2, w_ref[kh * ks + kw],
                                preferred_element_type=jnp.float32)

    o_ref[...] = jnp.where(acc >= 0.0, acc, negative_slope * acc).astype(o_ref.dtype)


# ------------------------------- forward --------------------------------------
def downscale_forward(x_nchw, weight, bias, kernel_size, *, compute_dtype=jnp.float32,
                      negative_slope=0.1):
    ks = kernel_size
    stride = 2
    pad = ks // 2
    dmax = (ks - 1) // 2                         # max kh//2 / kw//2 offset

    N, Cin, H, W = x_nchw.shape
    Cout = bias.shape[0]
    Ho = (H + 2 * pad - ks) // stride + 1
    Wo = (W + 2 * pad - ks) // stride + 1

    # --- output tiling (VMEM-budgeted, tail-safe, >=2 grid steps) -------------
    wo_pad = _round_up(Wo, 8)                    # sublane-aligned W tile
    th = max(1, min(Ho, max(1, 512 // wo_pad)))  # target ~512 output rows / step
    if N == 1 and th >= Ho and Ho > 1:
        th = (Ho + 1) // 2                       # keep >=2 steps for v7x megacore
    ho_pad = _round_up(Ho, th)
    ht = ho_pad // th
    ph_h = ho_pad + dmax                         # phase array spatial extents
    ph_w = wo_pad + dmax
    tm = th * wo_pad

    # --- glue: pad + stride-phase decomposition (≈1x input bytes, no im2col) ---
    x_nhwc = jnp.transpose(x_nchw, (0, 2, 3, 1))
    hp_t, wp_t = stride * ph_h, stride * ph_w
    xp = jnp.pad(x_nhwc, ((0, 0), (pad, hp_t - H - pad), (pad, wp_t - W - pad), (0, 0)))
    phases = jnp.stack([xp[:, a::2, b::2, :] for a in (0, 1) for b in (0, 1)],
                       axis=1).astype(compute_dtype)          # (N, 4, ph_h, ph_w, Cin)

    # (Cout, Cin, KH, KW) -> (KH*KW, Cin, Cout) per-tap matrices
    w_taps = jnp.transpose(weight, (2, 3, 1, 0)).reshape(ks * ks, Cin, Cout)
    w_taps = w_taps.astype(compute_dtype)
    bias2d = bias.reshape(1, Cout).astype(jnp.float32)

    out_dtype = x_nchw.dtype
    kernel = functools.partial(_conv_lrelu_kernel, ks=ks, th=th, wo_pad=wo_pad,
                               cin=Cin, cout=Cout, negative_slope=negative_slope)

    # --- VMEM budget / compiler params ----------------------------------------
    in_item = jnp.dtype(compute_dtype).itemsize
    out_item = jnp.dtype(out_dtype).itemsize
    block_bytes = (4 * ph_h * ph_w * Cin * in_item        # phases block
                   + ks * ks * Cin * Cout * in_item       # weights
                   + Cout * 4                             # bias
                   + tm * Cout * out_item)                # output block
    vmem_est = 2 * block_bytes + tm * Cout * 4            # double-buffer + f32 acc
    cp_kwargs = dict(dimension_semantics=("parallel", "parallel"))
    if vmem_est > 24 * 1024 * 1024:
        cp_kwargs["vmem_limit_bytes"] = min(int(vmem_est * 3 // 2), 60 * 1024 * 1024)

    cost = pl.CostEstimate(
        flops=2 * N * ho_pad * wo_pad * ks * ks * Cin * Cout,
        transcendentals=0,
        bytes_accessed=int(phases.size * in_item + w_taps.size * in_item
                           + bias2d.size * 4 + N * ho_pad * wo_pad * Cout * out_item))

    out_flat = pl.pallas_call(
        kernel,
        out_shape=jax.ShapeDtypeStruct((N, ho_pad * wo_pad, Cout), out_dtype),
        grid_spec=pltpu.PrefetchScalarGridSpec(
            num_scalar_prefetch=0,
            grid=(N, ht),
            in_specs=[
                pl.BlockSpec((None, 4, ph_h, ph_w, Cin), lambda n, t: (n, 0, 0, 0, 0)),
                pl.BlockSpec((ks * ks, Cin, Cout), lambda n, t: (0, 0, 0)),
                pl.BlockSpec((1, Cout), lambda n, t: (0, 0)),
            ],
            out_specs=pl.BlockSpec((None, tm, Cout), lambda n, t: (n, t, 0)),
        ),
        compiler_params=pltpu.CompilerParams(**cp_kwargs),
        cost_estimate=cost,
    )(phases, w_taps, bias2d)

    out = out_flat.reshape(N, ho_pad, wo_pad, Cout)[:, :Ho, :Wo, :]
    return jnp.transpose(out, (0, 3, 1, 2))               # back to NCHW


# ------------------------------- module ----------------------------------------
class Downscale:
    """JAX/Pallas port of the PyTorch Downscale module (Conv2d s=2 + LeakyReLU 0.1)."""

    def __init__(self, in_channels, out_channels, kernel_size=5, key=None,
                 compute_dtype=jnp.float32):
        assert kernel_size % 2 == 1
        self.in_ch = in_channels
        self.out_ch = out_channels
        self.kernel_size = kernel_size
        self.stride = 2
        self.pad = kernel_size // 2
        self.compute_dtype = compute_dtype
        if key is None:
            key = jax.random.PRNGKey(0)
        kw_, kb_ = jax.random.split(key)
        fan_in = in_channels * kernel_size * kernel_size
        bound = 1.0 / (fan_in ** 0.5)
        # PyTorch conv weight layout: (Cout, Cin, KH, KW)
        self.weight = jax.random.uniform(
            kw_, (out_channels, in_channels, kernel_size, kernel_size),
            dtype=jnp.float32, minval=-bound, maxval=bound)
        self.bias = jax.random.uniform(
            kb_, (out_channels,), dtype=jnp.float32, minval=-bound, maxval=bound)

    def __call__(self, x_nchw):
        N, C, H, W = x_nchw.shape
        assert C == self.in_ch
        return downscale_forward(x_nchw, self.weight, self.bias, self.kernel_size,
                                 compute_dtype=self.compute_dtype)

    def get_output_channels(self):
        return self.out_ch


# -------------------------------- main ------------------------------------------
if __name__ == "__main__":
    key = jax.random.PRNGKey(0)
    k_in, k_params = jax.random.split(key)

    N, Cin, H, W = 2, 4, 16, 16
    Cout = 8
    x = jax.random.normal(k_in, (N, Cin, H, W), dtype=jnp.float32)

    mod = Downscale(Cin, Cout, kernel_size=5, key=k_params)
    y = jax.block_until_ready(mod(x))

    # Reference: XLA conv + leaky relu (same semantics as the PyTorch forward).
    ref = lax.conv_general_dilated(
        x, mod.weight, window_strides=(2, 2),
        padding=((2, 2), (2, 2)),
        dimension_numbers=("NCHW", "OIHW", "NCHW"))
    ref = ref + mod.bias.reshape(1, Cout, 1, 1)
    ref = jnp.where(ref >= 0.0, ref, 0.1 * ref)

    assert y.shape == (N, Cout, H // 2, W // 2), y.shape
    assert jnp.allclose(y, ref, atol=1e-4, rtol=1e-4), float(jnp.max(jnp.abs(y - ref)))
    print("KERNEL_OK")
</pallas_src>

<mosaic_0001>
module attributes {stable_mosaic.version = 11 : i64} {
  func.func @_conv_lrelu_kernel(%arg0: i32, %arg1: i32, %arg2: memref<1x4x10x10x4xf32, #tpu.memory_space<vmem>>, %arg3: memref<25x4x8xf32, #tpu.memory_space<vmem>>, %arg4: memref<1x8xf32, #tpu.memory_space<vmem>>, %arg5: memref<1x64x8xf32, #tpu.memory_space<vmem>>) attributes {dimension_semantics = [#tpu.dimension_semantics<parallel>, #tpu.dimension_semantics<parallel>], iteration_bounds = array<i64: 2, 1>, scalar_prefetch = 0 : i64, scratch_operands = 0 : i64, tpu.core_type = #tpu.core_type<tc>, window_params = [{transform_indices = @transform_0, window_bounds = array<i64: 1, 4, 10, 10, 4>}, {pipeline_mode = #tpu.pipeline_mode<synchronous>, transform_indices = @transform_1, window_bounds = array<i64: 25, 4, 8>}, {pipeline_mode = #tpu.pipeline_mode<synchronous>, transform_indices = @transform_2, window_bounds = array<i64: 1, 8>}, {transform_indices = @transform_3, window_bounds = array<i64: 1, 64, 8>}]} {
    %c8_i32 = arith.constant 8 : i32
    %0 = arith.muli %arg1, %c8_i32 : i32
    %c0 = arith.constant 0 : index
    %c0_0 = arith.constant 0 : index
    %1 = vector.load %arg4[%c0, %c0_0] : memref<1x8xf32, #tpu.memory_space<vmem>>, vector<1x8xf32>
    %2 = vector.shape_cast %1 : vector<1x8xf32> to vector<1x8xf32>
    %3 = vector.broadcast %2 : vector<1x8xf32> to vector<64x8xf32>
    %c0_i32 = arith.constant 0 : i32
    %4 = arith.addi %0, %c0_i32 : i32
    %c0_1 = arith.constant 0 : index
    %c0_2 = arith.constant 0 : index
    %5 = arith.index_cast %4 : i32 to index
    %c0_3 = arith.constant 0 : index
    %c0_4 = arith.constant 0 : index
    %6 = vector.load %arg2[%c0_1, %c0_2, %5, %c0_3, %c0_4] : memref<1x4x10x10x4xf32, #tpu.memory_space<vmem>>, vector<1x1x8x8x4xf32>
    %7 = vector.shape_cast %6 : vector<1x1x8x8x4xf32> to vector<8x8x4xf32>
    %8 = vector.shape_cast %7 : vector<8x8x4xf32> to vector<64x4xf32>
    %c0_5 = arith.constant 0 : index
    %c0_6 = arith.constant 0 : index
    %c0_7 = arith.constant 0 : index
    %9 = vector.load %arg3[%c0_5, %c0_6, %c0_7] : memref<25x4x8xf32, #tpu.memory_space<vmem>>, vector<1x4x8xf32>
    %10 = vector.shape_cast %9 : vector<1x4x8xf32> to vector<4x8xf32>
    %cst = arith.constant dense<0.000000e+00> : vector<64x8xf32>
    %11 = tpu.matmul %8, %10, %cst {dimension_numbers = #tpu.dot_dimension_numbers<[1], [0], [0], [1], [0, 0, 1, 1], [], []>} : vector<64x4xf32>, vector<4x8xf32>, vector<64x8xf32> -> vector<64x8xf32>
    %12 = arith.addf %3, %11 : vector<64x8xf32>
    %c0_i32_8 = arith.constant 0 : i32
    %13 = arith.addi %0, %c0_i32_8 : i32
    %c0_9 = arith.constant 0 : index
    %c1 = arith.constant 1 : index
    %14 = arith.index_cast %13 : i32 to index
    %c0_10 = arith.constant 0 : index
    %c0_11 = arith.constant 0 : index
    %15 = vector.load %arg2[%c0_9, %c1, %14, %c0_10, %c0_11] : memref<1x4x10x10x4xf32, #tpu.memory_space<vmem>>, vector<1x1x8x8x4xf32>
    %16 = vector.shape_cast %15 : vector<1x1x8x8x4xf32> to vector<8x8x4xf32>
    %17 = vector.shape_cast %16 : vector<8x8x4xf32> to vector<64x4xf32>
    %c1_12 = arith.constant 1 : index
    %c0_13 = arith.constant 0 : index
    %c0_14 = arith.constant 0 : index
    %18 = vector.load %arg3[%c1_12, %c0_13, %c0_14] : memref<25x4x8xf32, #tpu.memory_space<vmem>>, vector<1x4x8xf32>
    %19 = vector.shape_cast %18 : vector<1x4x8xf32> to vector<4x8xf32>
    %cst_15 = arith.constant dense<0.000000e+00> : vector<64x8xf32>
    %20 = tpu.matmul %17, %19, %cst_15 {dimension_numbers = #tpu.dot_dimension_numbers<[1], [0], [0], [1], [0, 0, 1, 1], [], []>} : vector<64x4xf32>, vector<4x8xf32>, vector<64x8xf32> -> vector<64x8xf32>
    %21 = arith.addf %12, %20 : vector<64x8xf32>
    %c0_i32_16 = arith.constant 0 : i32
    %22 = arith.addi %0, %c0_i32_16 : i32
    %c0_17 = arith.constant 0 : index
    %c0_18 = arith.constant 0 : index
    %23 = arith.index_cast %22 : i32 to index
    %c1_19 = arith.constant 1 : index
    %c0_20 = arith.constant 0 : index
    %24 = vector.load %arg2[%c0_17, %c0_18, %23, %c1_19, %c0_20] : memref<1x4x10x10x4xf32, #tpu.memory_space<vmem>>, vector<1x1x8x8x4xf32>
    %25 = vector.shape_cast %24 : vector<1x1x8x8x4xf32> to vector<8x8x4xf32>
    %26 = vector.shape_cast %25 : vector<8x8x4xf32> to vector<64x4xf32>
    %c2 = arith.constant 2 : index
    %c0_21 = arith.constant 0 : index
    %c0_22 = arith.constant 0 : index
    %27 = vector.load %arg3[%c2, %c0_21, %c0_22] : memref<25x4x8xf32, #tpu.memory_space<vmem>>, vector<1x4x8xf32>
    %28 = vector.shape_cast %27 : vector<1x4x8xf32> to vector<4x8xf32>
    %cst_23 = arith.constant dense<0.000000e+00> : vector<64x8xf32>
    %29 = tpu.matmul %26, %28, %cst_23 {dimension_numbers = #tpu.dot_dimension_numbers<[1], [0], [0], [1], [0, 0, 1, 1], [], []>} : vector<64x4xf32>, vector<4x8xf32>, vector<64x8xf32> -> vector<64x8xf32>
    %30 = arith.addf %21, %29 : vector<64x8xf32>
    %c0_i32_24 = arith.constant 0 : i32
    %31 = arith.addi %0, %c0_i32_24 : i32
    %c0_25 = arith.constant 0 : index
    %c1_26 = arith.constant 1 : index
    %32 = arith.index_cast %31 : i32 to index
    %c1_27 = arith.constant 1 : index
    %c0_28 = arith.constant 0 : index
    %33 = vector.load %arg2[%c0_25, %c1_26, %32, %c1_27, %c0_28] : memref<1x4x10x10x4xf32, #tpu.memory_space<vmem>>, vector<1x1x8x8x4xf32>
    %34 = vector.shape_cast %33 : vector<1x1x8x8x4xf32> to vector<8x8x4xf32>
    %35 = vector.shape_cast %34 : vector<8x8x4xf32> to vector<64x4xf32>
    %c3 = arith.constant 3 : index
    %c0_29 = arith.constant 0 : index
    %c0_30 = arith.constant 0 : index
    %36 = vector.load %arg3[%c3, %c0_29, %c0_30] : memref<25x4x8xf32, #tpu.memory_space<vmem>>, vector<1x4x8xf32>
    %37 = vector.shape_cast %36 : vector<1x4x8xf32> to vector<4x8xf32>
    %cst_31 = arith.constant dense<0.000000e+00> : vector<64x8xf32>
    %38 = tpu.matmul %35, %37, %cst_31 {dimension_numbers = #tpu.dot_dimension_numbers<[1], [0], [0], [1], [0, 0, 1, 1], [], []>} : vector<64x4xf32>, vector<4x8xf32>, vector<64x8xf32> -> vector<64x8xf32>
    %39 = arith.addf %30, %38 : vector<64x8xf32>
    %c0_i32_32 = arith.constant 0 : i32
    %40 = arith.addi %0, %c0_i32_32 : i32
    %c0_33 = arith.constant 0 : index
    %c0_34 = arith.constant 0 : index
    %41 = arith.index_cast %40 : i32 to index
    %c2_35 = arith.constant 2 : index
    %c0_36 = arith.constant 0 : index
    %42 = vector.load %arg2[%c0_33, %c0_34, %41, %c2_35, %c0_36] : memref<1x4x10x10x4xf32, #tpu.memory_space<vmem>>, vector<1x1x8x8x4xf32>
    %43 = vector.shape_cast %42 : vector<1x1x8x8x4xf32> to vector<8x8x4xf32>
    %44 = vector.shape_cast %43 : vector<8x8x4xf32> to vector<64x4xf32>
    %c4 = arith.constant 4 : index
    %c0_37 = arith.constant 0 : index
    %c0_38 = arith.constant 0 : index
    %45 = vector.load %arg3[%c4, %c0_37, %c0_38] : memref<25x4x8xf32, #tpu.memory_space<vmem>>, vector<1x4x8xf32>
    %46 = vector.shape_cast %45 : vector<1x4x8xf32> to vector<4x8xf32>
    %cst_39 = arith.constant dense<0.000000e+00> : vector<64x8xf32>
    %47 = tpu.matmul %44, %46, %cst_39 {dimension_numbers = #tpu.dot_dimension_numbers<[1], [0], [0], [1], [0, 0, 1, 1], [], []>} : vector<64x4xf32>, vector<4x8xf32>, vector<64x8xf32> -> vector<64x8xf32>
    %48 = arith.addf %39, %47 : vector<64x8xf32>
    %c0_i32_40 = arith.constant 0 : i32
    %49 = arith.addi %0, %c0_i32_40 : i32
    %c0_41 = arith.constant 0 : index
    %c2_42 = arith.constant 2 : index
    %50 = arith.index_cast %49 : i32 to index
    %c0_43 = arith.constant 0 : index
    %c0_44 = arith.constant 0 : index
    %51 = vector.load %arg2[%c0_41, %c2_42, %50, %c0_43, %c0_44] : memref<1x4x10x10x4xf32, #tpu.memory_space<vmem>>, vector<1x1x8x8x4xf32>
    %52 = vector.shape_cast %51 : vector<1x1x8x8x4xf32> to vector<8x8x4xf32>
    %53 = vector.shape_cast %52 : vector<8x8x4xf32> to vector<64x4xf32>
    %c5 = arith.constant 5 : index
    %c0_45 = arith.constant 0 : index
    %c0_46 = arith.constant 0 : index
    %54 = vector.load %arg3[%c5, %c0_45, %c0_46] : memref<25x4x8xf32, #tpu.memory_space<vmem>>, vector<1x4x8xf32>
    %55 = vector.shape_cast %54 : vector<1x4x8xf32> to vector<4x8xf32>
    %cst_47 = arith.constant dense<0.000000e+00> : vector<64x8xf32>
    %56 = tpu.matmul %53, %55, %cst_47 {dimension_numbers = #tpu.dot_dimension_numbers<[1], [0], [0], [1], [0, 0, 1, 1], [], []>} : vector<64x4xf32>, vector<4x8xf32>, vector<64x8xf32> -> vector<64x8xf32>
    %57 = arith.addf %48, %56 : vector<64x8xf32>
    %c0_i32_48 = arith.constant 0 : i32
    %58 = arith.addi %0, %c0_i32_48 : i32
    %c0_49 = arith.constant 0 : index
    %c3_50 = arith.constant 3 : index
    %59 = arith.index_cast %58 : i32 to index
    %c0_51 = arith.constant 0 : index
    %c0_52 = arith.constant 0 : index
    %60 = vector.load %arg2[%c0_49, %c3_50, %59, %c0_51, %c0_52] : memref<1x4x10x10x4xf32, #tpu.memory_space<vmem>>, vector<1x1x8x8x4xf32>
    %61 = vector.shape_cast %60 : vector<1x1x8x8x4xf32> to vector<8x8x4xf32>
    %62 = vector.shape_cast %61 : vector<8x8x4xf32> to vector<64x4xf32>
    %c6 = arith.constant 6 : index
    %c0_53 = arith.constant 0 : index
    %c0_54 = arith.constant 0 : index
    %63 = vector.load %arg3[%c6, %c0_53, %c0_54] : memref<25x4x8xf32, #tpu.memory_space<vmem>>, vector<1x4x8xf32>
    %64 = vector.shape_cast %63 : vector<1x4x8xf32> to vector<4x8xf32>
    %cst_55 = arith.constant dense<0.000000e+00> : vector<64x8xf32>
    %65 = tpu.matmul %62, %64, %cst_55 {dimension_numbers = #tpu.dot_dimension_numbers<[1], [0], [0], [1], [0, 0, 1, 1], [], []>} : vector<64x4xf32>, vector<4x8xf32>, vector<64x8xf32> -> vector<64x8xf32>
    %66 = arith.addf %57, %65 : vector<64x8xf32>
    %c0_i32_56 = arith.constant 0 : i32
    %67 = arith.addi %0, %c0_i32_56 : i32
    %c0_57 = arith.constant 0 : index
    %c2_58 = arith.constant 2 : index
    %68 = arith.index_cast %67 : i32 to index
    %c1_59 = arith.constant 1 : index
    %c0_60 = arith.constant 0 : index
    %69 = vector.load %arg2[%c0_57, %c2_58, %68, %c1_59, %c0_60] : memref<1x4x10x10x4xf32, #tpu.memory_space<vmem>>, vector<1x1x8x8x4xf32>
    %70 = vector.shape_cast %69 : vector<1x1x8x8x4xf32> to vector<8x8x4xf32>
    %71 = vector.shape_cast %70 : vector<8x8x4xf32> to vector<64x4xf32>
    %c7 = arith.constant 7 : index
    %c0_61 = arith.constant 0 : index
    %c0_62 = arith.constant 0 : index
    %72 = vector.load %arg3[%c7, %c0_61, %c0_62] : memref<25x4x8xf32, #tpu.memory_space<vmem>>, vector<1x4x8xf32>
    %73 = vector.shape_cast %72 : vector<1x4x8xf32> to vector<4x8xf32>
    %cst_63 = arith.constant dense<0.000000e+00> : vector<64x8xf32>
    %74 = tpu.matmul %71, %73, %cst_63 {dimension_numbers = #tpu.dot_dimension_numbers<[1], [0], [0], [1], [0, 0, 1, 1], [], []>} : vector<64x4xf32>, vector<4x8xf32>, vector<64x8xf32> -> vector<64x8xf32>
    %75 = arith.addf %66, %74 : vector<64x8xf32>
    %c0_i32_64 = arith.constant 0 : i32
    %76 = arith.addi %0, %c0_i32_64 : i32
    %c0_65 = arith.constant 0 : index
    %c3_66 = arith.constant 3 : index
    %77 = arith.index_cast %76 : i32 to index
    %c1_67 = arith.constant 1 : index
    %c0_68 = arith.constant 0 : index
    %78 = vector.load %arg2[%c0_65, %c3_66, %77, %c1_67, %c0_68] : memref<1x4x10x10x4xf32, #tpu.memory_space<vmem>>, vector<1x1x8x8x4xf32>
    %79 = vector.shape_cast %78 : vector<1x1x8x8x4xf32> to vector<8x8x4xf32>
    %80 = vector.shape_cast %79 : vector<8x8x4xf32> to vector<64x4xf32>
    %c8 = arith.constant 8 : index
    %c0_69 = arith.constant 0 : index
    %c0_70 = arith.constant 0 : index
    %81 = vector.load %arg3[%c8, %c0_69, %c0_70] : memref<25x4x8xf32, #tpu.memory_space<vmem>>, vector<1x4x8xf32>
    %82 = vector.shape_cast %81 : vector<1x4x8xf32> to vector<4x8xf32>
    %cst_71 = arith.constant dense<0.000000e+00> : vector<64x8xf32>
    %83 = tpu.matmul %80, %82, %cst_71 {dimension_numbers = #tpu.dot_dimension_numbers<[1], [0], [0], [1], [0, 0, 1, 1], [], []>} : vector<64x4xf32>, vector<4x8xf32>, vector<64x8xf32> -> vector<64x8xf32>
    %84 = arith.addf %75, %83 : vector<64x8xf32>
    %c0_i32_72 = arith.constant 0 : i32
    %85 = arith.addi %0, %c0_i32_72 : i32
    %c0_73 = arith.constant 0 : index
    %c2_74 = arith.constant 2 : index
    %86 = arith.index_cast %85 : i32 to index
    %c2_75 = arith.constant 2 : index
    %c0_76 = arith.constant 0 : index
    %87 = vector.load %arg2[%c0_73, %c2_74, %86, %c2_75, %c0_76] : memref<1x4x10x10x4xf32, #tpu.memory_space<vmem>>, vector<1x1x8x8x4xf32>
    %88 = vector.shape_cast %87 : vector<1x1x8x8x4xf32> to vector<8x8x4xf32>
    %89 = vector.shape_cast %88 : vector<8x8x4xf32> to vector<64x4xf32>
    %c9 = arith.constant 9 : index
    %c0_77 = arith.constant 0 : index
    %c0_78 = arith.constant 0 : index
    %90 = vector.load %arg3[%c9, %c0_77, %c0_78] : memref<25x4x8xf32, #tpu.memory_space<vmem>>, vector<1x4x8xf32>
    %91 = vector.shape_cast %90 : vector<1x4x8xf32> to vector<4x8xf32>
    %cst_79 = arith.constant dense<0.000000e+00> : vector<64x8xf32>
    %92 = tpu.matmul %89, %91, %cst_79 {dimension_numbers = #tpu.dot_dimension_numbers<[1], [0], [0], [1], [0, 0, 1, 1], [], []>} : vector<64x4xf32>, vector<4x8xf32>, vector<64x8xf32> -> vector<64x8xf32>
    %93 = arith.addf %84, %92 : vector<64x8xf32>
    %c1_i32 = arith.constant 1 : i32
    %94 = arith.addi %0, %c1_i32 : i32
    %c0_80 = arith.constant 0 : index
    %c0_81 = arith.constant 0 : index
    %95 = arith.index_cast %94 : i32 to index
    %c0_82 = arith.constant 0 : index
    %c0_83 = arith.constant 0 : index
    %96 = vector.load %arg2[%c0_80, %c0_81, %95, %c0_82, %c0_83] : memref<1x4x10x10x4xf32, #tpu.memory_space<vmem>>, vector<1x1x8x8x4xf32>
    %97 = vector.shape_cast %96 : vector<1x1x8x8x4xf32> to vector<8x8x4xf32>
    %98 = vector.shape_cast %97 : vector<8x8x4xf32> to vector<64x4xf32>
    %c10 = arith.constant 10 : index
    %c0_84 = arith.constant 0 : index
    %c0_85 = arith.constant 0 : index
    %99 = vector.load %arg3[%c10, %c0_84, %c0_85] : memref<25x4x8xf32, #tpu.memory_space<vmem>>, vector<1x4x8xf32>
    %100 = vector.shape_cast %99 : vector<1x4x8xf32> to vector<4x8xf32>
    %cst_86 = arith.constant dense<0.000000e+00> : vector<64x8xf32>
    %101 = tpu.matmul %98, %100, %cst_86 {dimension_numbers = #tpu.dot_dimension_numbers<[1], [0], [0], [1], [0, 0, 1, 1], [], []>} : vector<64x4xf32>, vector<4x8xf32>, vector<64x8xf32> -> vector<64x8xf32>
    %102 = arith.addf %93, %101 : vector<64x8xf32>
    %c1_i32_87 = arith.constant 1 : i32
    %103 = arith.addi %0, %c1_i32_87 : i32
    %c0_88 = arith.constant 0 : index
    %c1_89 = arith.constant 1 : index
    %104 = arith.index_cast %103 : i32 to index
    %c0_90 = arith.constant 0 : index
    %c0_91 = arith.constant 0 : index
    %105 = vector.load %arg2[%c0_88, %c1_89, %104, %c0_90, %c0_91] : memref<1x4x10x10x4xf32, #tpu.memory_space<vmem>>, vector<1x1x8x8x4xf32>
    %106 = vector.shape_cast %105 : vector<1x1x8x8x4xf32> to vector<8x8x4xf32>
    %107 = vector.shape_cast %106 : vector<8x8x4xf32> to vector<64x4xf32>
    %c11 = arith.constant 11 : index
    %c0_92 = arith.constant 0 : index
    %c0_93 = arith.constant 0 : index
    %108 = vector.load %arg3[%c11, %c0_92, %c0_93] : memref<25x4x8xf32, #tpu.memory_space<vmem>>, vector<1x4x8xf32>
    %109 = vector.shape_cast %108 : vector<1x4x8xf32> to vector<4x8xf32>
    %cst_94 = arith.constant dense<0.000000e+00> : vector<64x8xf32>
    %110 = tpu.matmul %107, %109, %cst_94 {dimension_numbers = #tpu.dot_dimension_numbers<[1], [0], [0], [1], [0, 0, 1, 1], [], []>} : vector<64x4xf32>, vector<4x8xf32>, vector<64x8xf32> -> vector<64x8xf32>
    %111 = arith.addf %102, %110 : vector<64x8xf32>
    %c1_i32_95 = arith.constant 1 : i32
    %112 = arith.addi %0, %c1_i32_95 : i32
    %c0_96 = arith.constant 0 : index
    %c0_97 = arith.constant 0 : index
    %113 = arith.index_cast %112 : i32 to index
    %c1_98 = arith.constant 1 : index
    %c0_99 = arith.constant 0 : index
    %114 = vector.load %arg2[%c0_96, %c0_97, %113, %c1_98, %c0_99] : memref<1x4x10x10x4xf32, #tpu.memory_space<vmem>>, vector<1x1x8x8x4xf32>
    %115 = vector.shape_cast %114 : vector<1x1x8x8x4xf32> to vector<8x8x4xf32>
    %116 = vector.shape_cast %115 : vector<8x8x4xf32> to vector<64x4xf32>
    %c12 = arith.constant 12 : index
    %c0_100 = arith.constant 0 : index
    %c0_101 = arith.constant 0 : index
    %117 = vector.load %arg3[%c12, %c0_100, %c0_101] : memref<25x4x8xf32, #tpu.memory_space<vmem>>, vector<1x4x8xf32>
    %118 = vector.shape_cast %117 : vector<1x4x8xf32> to vector<4x8xf32>
    %cst_102 = arith.constant dense<0.000000e+00> : vector<64x8xf32>
    %119 = tpu.matmul %116, %118, %cst_102 {dimension_numbers = #tpu.dot_dimension_numbers<[1], [0], [0], [1], [0, 0, 1, 1], [], []>} : vector<64x4xf32>, vector<4x8xf32>, vector<64x8xf32> -> vector<64x8xf32>
    %120 = arith.addf %111, %119 : vector<64x8xf32>
    %c1_i32_103 = arith.constant 1 : i32
    %121 = arith.addi %0, %c1_i32_103 : i32
    %c0_104 = arith.constant 0 : index
    %c1_105 = arith.constant 1 : index
    %122 = arith.index_cast %121 : i32 to index
    %c1_106 = arith.constant 1 : index
    %c0_107 = arith.constant 0 : index
    %123 = vector.load %arg2[%c0_104, %c1_105, %122, %c1_106, %c0_107] : memref<1x4x10x10x4xf32, #tpu.memory_space<vmem>>, vector<1x1x8x8x4xf32>
    %124 = vector.shape_cast %123 : vector<1x1x8x8x4xf32> to vector<8x8x4xf32>
    %125 = vector.shape_cast %124 : vector<8x8x4xf32> to vector<64x4xf32>
    %c13 = arith.constant 13 : index
    %c0_108 = arith.constant 0 : index
    %c0_109 = arith.constant 0 : index
    %126 = vector.load %arg3[%c13, %c0_108, %c0_109] : memref<25x4x8xf32, #tpu.memory_space<vmem>>, vector<1x4x8xf32>
    %127 = vector.shape_cast %126 : vector<1x4x8xf32> to vector<4x8xf32>
    %cst_110 = arith.constant dense<0.000000e+00> : vector<64x8xf32>
    %128 = tpu.matmul %125, %127, %cst_110 {dimension_numbers = #tpu.dot_dimension_numbers<[1], [0], [0], [1], [0, 0, 1, 1], [], []>} : vector<64x4xf32>, vector<4x8xf32>, vector<64x8xf32> -> vector<64x8xf32>
    %129 = arith.addf %120, %128 : vector<64x8xf32>
    %c1_i32_111 = arith.constant 1 : i32
    %130 = arith.addi %0, %c1_i32_111 : i32
    %c0_112 = arith.constant 0 : index
    %c0_113 = arith.constant 0 : index
    %131 = arith.index_cast %130 : i32 to index
    %c2_114 = arith.constant 2 : index
    %c0_115 = arith.constant 0 : index
    %132 = vector.load %arg2[%c0_112, %c0_113, %131, %c2_114, %c0_115] : memref<1x4x10x10x4xf32, #tpu.memory_space<vmem>>, vector<1x1x8x8x4xf32>
    %133 = vector.shape_cast %132 : vector<1x1x8x8x4xf32> to vector<8x8x4xf32>
    %134 = vector.shape_cast %133 : vector<8x8x4xf32> to vector<64x4xf32>
    %c14 = arith.constant 14 : index
    %c0_116 = arith.constant 0 : index
    %c0_117 = arith.constant 0 : index
    %135 = vector.load %arg3[%c14, %c0_116, %c0_117] : memref<25x4x8xf32, #tpu.memory_space<vmem>>, vector<1x4x8xf32>
    %136 = vector.shape_cast %135 : vector<1x4x8xf32> to vector<4x8xf32>
    %cst_118 = arith.constant dense<0.000000e+00> : vector<64x8xf32>
    %137 = tpu.matmul %134, %136, %cst_118 {dimension_numbers = #tpu.dot_dimension_numbers<[1], [0], [0], [1], [0, 0, 1, 1], [], []>} : vector<64x4xf32>, vector<4x8xf32>, vector<64x8xf32> -> vector<64x8xf32>
    %138 = arith.addf %129, %137 : vector<64x8xf32>
    %c1_i32_119 = arith.constant 1 : i32
    %139 = arith.addi %0, %c1_i32_119 : i32
    %c0_120 = arith.constant 0 : index
    %c2_121 = arith.constant 2 : index
    %140 = arith.index_cast %139 : i32 to index
    %c0_122 = arith.constant 0 : index
    %c0_123 = arith.constant 0 : index
    %141 = vector.load %arg2[%c0_120, %c2_121, %140, %c0_122, %c0_123] : memref<1x4x10x10x4xf32, #tpu.memory_space<vmem>>, vector<1x1x8x8x4xf32>
    %142 = vector.shape_cast %141 : vector<1x1x8x8x4xf32> to vector<8x8x4xf32>
    %143 = vector.shape_cast %142 : vector<8x8x4xf32> to vector<64x4xf32>
    %c15 = arith.constant 15 : index
    %c0_124 = arith.constant 0 : index
    %c0_125 = arith.constant 0 : index
    %144 = vector.load %arg3[%c15, %c0_124, %c0_125] : memref<25x4x8xf32, #tpu.memory_space<vmem>>, vector<1x4x8xf32>
    %145 = vector.shape_cast %144 : vector<1x4x8xf32> to vector<4x8xf32>
    %cst_126 = arith.constant dense<0.000000e+00> : vector<64x8xf32>
    %146 = tpu.matmul %143, %145, %cst_126 {dimension_numbers = #tpu.dot_dimension_numbers<[1], [0], [0], [1], [0, 0, 1, 1], [], []>} : vector<64x4xf32>, vector<4x8xf32>, vector<64x8xf32> -> vector<64x8xf32>
    %147 = arith.addf %138, %146 : vector<64x8xf32>
    %c1_i32_127 = arith.constant 1 : i32
    %148 = arith.addi %0, %c1_i32_127 : i32
    %c0_128 = arith.constant 0 : index
    %c3_129 = arith.constant 3 : index
    %149 = arith.index_cast %148 : i32 to index
    %c0_130 = arith.constant 0 : index
    %c0_131 = arith.constant 0 : index
    %150 = vector.load %arg2[%c0_128, %c3_129, %149, %c0_130, %c0_131] : memref<1x4x10x10x4xf32, #tpu.memory_space<vmem>>, vector<1x1x8x8x4xf32>
    %151 = vector.shape_cast %150 : vector<1x1x8x8x4xf32> to vector<8x8x4xf32>
    %152 = vector.shape_cast %151 : vector<8x8x4xf32> to vector<64x4xf32>
    %c16 = arith.constant 16 : index
    %c0_132 = arith.constant 0 : index
    %c0_133 = arith.constant 0 : index
    %153 = vector.load %arg3[%c16, %c0_132, %c0_133] : memref<25x4x8xf32, #tpu.memory_space<vmem>>, vector<1x4x8xf32>
    %154 = vector.shape_cast %153 : vector<1x4x8xf32> to vector<4x8xf32>
    %cst_134 = arith.constant dense<0.000000e+00> : vector<64x8xf32>
    %155 = tpu.matmul %152, %154, %cst_134 {dimension_numbers = #tpu.dot_dimension_numbers<[1], [0], [0], [1], [0, 0, 1, 1], [], []>} : vector<64x4xf32>, vector<4x8xf32>, vector<64x8xf32> -> vector<64x8xf32>
    %156 = arith.addf %147, %155 : vector<64x8xf32>
    %c1_i32_135 = arith.constant 1 : i32
    %157 = arith.addi %0, %c1_i32_135 : i32
    %c0_136 = arith.constant 0 : index
    %c2_137 = arith.constant 2 : index
    %158 = arith.index_cast %157 : i32 to index
    %c1_138 = arith.constant 1 : index
    %c0_139 = arith.constant 0 : index
    %159 = vector.load %arg2[%c0_136, %c2_137, %158, %c1_138, %c0_139] : memref<1x4x10x10x4xf32, #tpu.memory_space<vmem>>, vector<1x1x8x8x4xf32>
    %160 = vector.shape_cast %159 : vector<1x1x8x8x4xf32> to vector<8x8x4xf32>
    %161 = vector.shape_cast %160 : vector<8x8x4xf32> to vector<64x4xf32>
    %c17 = arith.constant 17 : index
    %c0_140 = arith.constant 0 : index
    %c0_141 = arith.constant 0 : index
    %162 = vector.load %arg3[%c17, %c0_140, %c0_141] : memref<25x4x8xf32, #tpu.memory_space<vmem>>, vector<1x4x8xf32>
    %163 = vector.shape_cast %162 : vector<1x4x8xf32> to vector<4x8xf32>
    %cst_142 = arith.constant dense<0.000000e+00> : vector<64x8xf32>
    %164 = tpu.matmul %161, %163, %cst_142 {dimension_numbers = #tpu.dot_dimension_numbers<[1], [0], [0], [1], [0, 0, 1, 1], [], []>} : vector<64x4xf32>, vector<4x8xf32>, vector<64x8xf32> -> vector<64x8xf32>
    %165 = arith.addf %156, %164 : vector<64x8xf32>
    %c1_i32_143 = arith.constant 1 : i32
    %166 = arith.addi %0, %c1_i32_143 : i32
    %c0_144 = arith.constant 0 : index
    %c3_145 = arith.constant 3 : index
    %167 = arith.index_cast %166 : i32 to index
    %c1_146 = arith.constant 1 : index
    %c0_147 = arith.constant 0 : index
    %168 = vector.load %arg2[%c0_144, %c3_145, %167, %c1_146, %c0_147] : memref<1x4x10x10x4xf32, #tpu.memory_space<vmem>>, vector<1x1x8x8x4xf32>
    %169 = vector.shape_cast %168 : vector<1x1x8x8x4xf32> to vector<8x8x4xf32>
    %170 = vector.shape_cast %169 : vector<8x8x4xf32> to vector<64x4xf32>
    %c18 = arith.constant 18 : index
    %c0_148 = arith.constant 0 : index
    %c0_149 = arith.constant 0 : index
    %171 = vector.load %arg3[%c18, %c0_148, %c0_149] : memref<25x4x8xf32, #tpu.memory_space<vmem>>, vector<1x4x8xf32>
    %172 = vector.shape_cast %171 : vector<1x4x8xf32> to vector<4x8xf32>
    %cst_150 = arith.constant dense<0.000000e+00> : vector<64x8xf32>
    %173 = tpu.matmul %170, %172, %cst_150 {dimension_numbers = #tpu.dot_dimension_numbers<[1], [0], [0], [1], [0, 0, 1, 1], [], []>} : vector<64x4xf32>, vector<4x8xf32>, vector<64x8xf32> -> vector<64x8xf32>
    %174 = arith.addf %165, %173 : vector<64x8xf32>
    %c1_i32_151 = arith.constant 1 : i32
    %175 = arith.addi %0, %c1_i32_151 : i32
    %c0_152 = arith.constant 0 : index
    %c2_153 = arith.constant 2 : index
    %176 = arith.index_cast %175 : i32 to index
    %c2_154 = arith.constant 2 : index
    %c0_155 = arith.constant 0 : index
    %177 = vector.load %arg2[%c0_152, %c2_153, %176, %c2_154, %c0_155] : memref<1x4x10x10x4xf32, #tpu.memory_space<vmem>>, vector<1x1x8x8x4xf32>
    %178 = vector.shape_cast %177 : vector<1x1x8x8x4xf32> to vector<8x8x4xf32>
    %179 = vector.shape_cast %178 : vector<8x8x4xf32> to vector<64x4xf32>
    %c19 = arith.constant 19 : index
    %c0_156 = arith.constant 0 : index
    %c0_157 = arith.constant 0 : index
    %180 = vector.load %arg3[%c19, %c0_156, %c0_157] : memref<25x4x8xf32, #tpu.memory_space<vmem>>, vector<1x4x8xf32>
    %181 = vector.shape_cast %180 : vector<1x4x8xf32> to vector<4x8xf32>
    %cst_158 = arith.constant dense<0.000000e+00> : vector<64x8xf32>
    %182 = tpu.matmul %179, %181, %cst_158 {dimension_numbers = #tpu.dot_dimension_numbers<[1], [0], [0], [1], [0, 0, 1, 1], [], []>} : vector<64x4xf32>, vector<4x8xf32>, vector<64x8xf32> -> vector<64x8xf32>
    %183 = arith.addf %174, %182 : vector<64x8xf32>
    %c2_i32 = arith.constant 2 : i32
    %184 = arith.addi %0, %c2_i32 : i32
    %c0_159 = arith.constant 0 : index
    %c0_160 = arith.constant 0 : index
    %185 = arith.index_cast %184 : i32 to index
    %c0_161 = arith.constant 0 : index
    %c0_162 = arith.constant 0 : index
    %186 = vector.load %arg2[%c0_159, %c0_160, %185, %c0_161, %c0_162] : memref<1x4x10x10x4xf32, #tpu.memory_space<vmem>>, vector<1x1x8x8x4xf32>
    %187 = vector.shape_cast %186 : vector<1x1x8x8x4xf32> to vector<8x8x4xf32>
    %188 = vector.shape_cast %187 : vector<8x8x4xf32> to vector<64x4xf32>
    %c20 = arith.constant 20 : index
    %c0_163 = arith.constant 0 : index
    %c0_164 = arith.constant 0 : index
    %189 = vector.load %arg3[%c20, %c0_163, %c0_164] : memref<25x4x8xf32, #tpu.memory_space<vmem>>, vector<1x4x8xf32>
    %190 = vector.shape_cast %189 : vector<1x4x8xf32> to vector<4x8xf32>
    %cst_165 = arith.constant dense<0.000000e+00> : vector<64x8xf32>
    %191 = tpu.matmul %188, %190, %cst_165 {dimension_numbers = #tpu.dot_dimension_numbers<[1], [0], [0], [1], [0, 0, 1, 1], [], []>} : vector<64x4xf32>, vector<4x8xf32>, vector<64x8xf32> -> vector<64x8xf32>
    %192 = arith.addf %183, %191 : vector<64x8xf32>
    %c2_i32_166 = arith.constant 2 : i32
    %193 = arith.addi %0, %c2_i32_166 : i32
    %c0_167 = arith.constant 0 : index
    %c1_168 = arith.constant 1 : index
    %194 = arith.index_cast %193 : i32 to index
    %c0_169 = arith.constant 0 : index
    %c0_170 = arith.constant 0 : index
    %195 = vector.load %arg2[%c0_167, %c1_168, %194, %c0_169, %c0_170] : memref<1x4x10x10x4xf32, #tpu.memory_space<vmem>>, vector<1x1x8x8x4xf32>
    %196 = vector.shape_cast %195 : vector<1x1x8x8x4xf32> to vector<8x8x4xf32>
    %197 = vector.shape_cast %196 : vector<8x8x4xf32> to vector<64x4xf32>
    %c21 = arith.constant 21 : index
    %c0_171 = arith.constant 0 : index
    %c0_172 = arith.constant 0 : index
    %198 = vector.load %arg3[%c21, %c0_171, %c0_172] : memref<25x4x8xf32, #tpu.memory_space<vmem>>, vector<1x4x8xf32>
    %199 = vector.shape_cast %198 : vector<1x4x8xf32> to vector<4x8xf32>
    %cst_173 = arith.constant dense<0.000000e+00> : vector<64x8xf32>
    %200 = tpu.matmul %197, %199, %cst_173 {dimension_numbers = #tpu.dot_dimension_numbers<[1], [0], [0], [1], [0, 0, 1, 1], [], []>} : vector<64x4xf32>, vector<4x8xf32>, vector<64x8xf32> -> vector<64x8xf32>
    %201 = arith.addf %192, %200 : vector<64x8xf32>
    %c2_i32_174 = arith.constant 2 : i32
    %202 = arith.addi %0, %c2_i32_174 : i32
    %c0_175 = arith.constant 0 : index
    %c0_176 = arith.constant 0 : index
    %203 = arith.index_cast %202 : i32 to index
    %c1_177 = arith.constant 1 : index
    %c0_178 = arith.constant 0 : index
    %204 = vector.load %arg2[%c0_175, %c0_176, %203, %c1_177, %c0_178] : memref<1x4x10x10x4xf32, #tpu.memory_space<vmem>>, vector<1x1x8x8x4xf32>
    %205 = vector.shape_cast %204 : vector<1x1x8x8x4xf32> to vector<8x8x4xf32>
    %206 = vector.shape_cast %205 : vector<8x8x4xf32> to vector<64x4xf32>
    %c22 = arith.constant 22 : index
    %c0_179 = arith.constant 0 : index
    %c0_180 = arith.constant 0 : index
    %207 = vector.load %arg3[%c22, %c0_179, %c0_180] : memref<25x4x8xf32, #tpu.memory_space<vmem>>, vector<1x4x8xf32>
    %208 = vector.shape_cast %207 : vector<1x4x8xf32> to vector<4x8xf32>
    %cst_181 = arith.constant dense<0.000000e+00> : vector<64x8xf32>
    %209 = tpu.matmul %206, %208, %cst_181 {dimension_numbers = #tpu.dot_dimension_numbers<[1], [0], [0], [1], [0, 0, 1, 1], [], []>} : vector<64x4xf32>, vector<4x8xf32>, vector<64x8xf32> -> vector<64x8xf32>
    %210 = arith.addf %201, %209 : vector<64x8xf32>
    %c2_i32_182 = arith.constant 2 : i32
    %211 = arith.addi %0, %c2_i32_182 : i32
    %c0_183 = arith.constant 0 : index
    %c1_184 = arith.constant 1 : index
    %212 = arith.index_cast %211 : i32 to index
    %c1_185 = arith.constant 1 : index
    %c0_186 = arith.constant 0 : index
    %213 = vector.load %arg2[%c0_183, %c1_184, %212, %c1_185, %c0_186] : memref<1x4x10x10x4xf32, #tpu.memory_space<vmem>>, vector<1x1x8x8x4xf32>
    %214 = vector.shape_cast %213 : vector<1x1x8x8x4xf32> to vector<8x8x4xf32>
    %215 = vector.shape_cast %214 : vector<8x8x4xf32> to vector<64x4xf32>
    %c23 = arith.constant 23 : index
    %c0_187 = arith.constant 0 : index
    %c0_188 = arith.constant 0 : index
    %216 = vector.load %arg3[%c23, %c0_187, %c0_188] : memref<25x4x8xf32, #tpu.memory_space<vmem>>, vector<1x4x8xf32>
    %217 = vector.shape_cast %216 : vector<1x4x8xf32> to vector<4x8xf32>
    %cst_189 = arith.constant dense<0.000000e+00> : vector<64x8xf32>
    %218 = tpu.matmul %215, %217, %cst_189 {dimension_numbers = #tpu.dot_dimension_numbers<[1], [0], [0], [1], [0, 0, 1, 1], [], []>} : vector<64x4xf32>, vector<4x8xf32>, vector<64x8xf32> -> vector<64x8xf32>
    %219 = arith.addf %210, %218 : vector<64x8xf32>
    %c2_i32_190 = arith.constant 2 : i32
    %220 = arith.addi %0, %c2_i32_190 : i32
    %c0_191 = arith.constant 0 : index
    %c0_192 = arith.constant 0 : index
    %221 = arith.index_cast %220 : i32 to index
    %c2_193 = arith.constant 2 : index
    %c0_194 = arith.constant 0 : index
    %222 = vector.load %arg2[%c0_191, %c0_192, %221, %c2_193, %c0_194] : memref<1x4x10x10x4xf32, #tpu.memory_space<vmem>>, vector<1x1x8x8x4xf32>
    %223 = vector.shape_cast %222 : vector<1x1x8x8x4xf32> to vector<8x8x4xf32>
    %224 = vector.shape_cast %223 : vector<8x8x4xf32> to vector<64x4xf32>
    %c24 = arith.constant 24 : index
    %c0_195 = arith.constant 0 : index
    %c0_196 = arith.constant 0 : index
    %225 = vector.load %arg3[%c24, %c0_195, %c0_196] : memref<25x4x8xf32, #tpu.memory_space<vmem>>, vector<1x4x8xf32>
    %226 = vector.shape_cast %225 : vector<1x4x8xf32> to vector<4x8xf32>
    %cst_197 = arith.constant dense<0.000000e+00> : vector<64x8xf32>
    %227 = tpu.matmul %224, %226, %cst_197 {dimension_numbers = #tpu.dot_dimension_numbers<[1], [0], [0], [1], [0, 0, 1, 1], [], []>} : vector<64x4xf32>, vector<4x8xf32>, vector<64x8xf32> -> vector<64x8xf32>
    %228 = arith.addf %219, %227 : vector<64x8xf32>
    %cst_198 = arith.constant 0.000000e+00 : f32
    %229 = vector.broadcast %cst_198 : f32 to vector<64x8xf32>
    %230 = arith.cmpf oge, %228, %229 : vector<64x8xf32>
    %cst_199 = arith.constant 1.000000e-01 : f32
    %231 = vector.broadcast %cst_199 : f32 to vector<64x8xf32>
    %232 = arith.mulf %231, %228 : vector<64x8xf32>
    %233 = arith.select %230, %228, %232 : vector<64x8xi1>, vector<64x8xf32>
    %c0_200 = arith.constant 0 : index
    %c0_201 = arith.constant 0 : index
    %c0_202 = arith.constant 0 : index
    %234 = vector.load %arg5[%c0_200, %c0_201, %c0_202] : memref<1x64x8xf32, #tpu.memory_space<vmem>>, vector<1x64x8xf32>
    %235 = vector.shape_cast %234 : vector<1x64x8xf32> to vector<64x8xf32>
    %236 = vector.shape_cast %233 : vector<64x8xf32> to vector<1x64x8xf32>
    tpu.vector_store %arg5[%c0_200, %c0_201, %c0_202], %236 {strides = array<i32>} : memref<1x64x8xf32, #tpu.memory_space<vmem>>, vector<1x64x8xf32>,
    return
  }
  func.func @transform_0(%arg0: i32, %arg1: i32) -> (i32, i32, i32, i32, i32) {
    %c0_i32 = arith.constant 0 : i32
    %c0_i32_0 = arith.constant 0 : i32
    %c0_i32_1 = arith.constant 0 : i32
    %c0_i32_2 = arith.constant 0 : i32
    %c0_i32_3 = arith.constant 0 : i32
    return %arg0, %c0_i32, %c0_i32_0, %c0_i32_1, %c0_i32_2 : i32, i32, i32, i32, i32
  }
  func.func @transform_1(%arg0: i32, %arg1: i32) -> (i32, i32, i32) {
    %c0_i32 = arith.constant 0 : i32
    %c0_i32_0 = arith.constant 0 : i32
    %c0_i32_1 = arith.constant 0 : i32
    %c0_i32_2 = arith.constant 0 : i32
    return %c0_i32, %c0_i32_0, %c0_i32_1 : i32, i32, i32
  }
  func.func @transform_2(%arg0: i32, %arg1: i32) -> (i32, i32) {
    %c0_i32 = arith.constant 0 : i32
    %c0_i32_0 = arith.constant 0 : i32
    %c0_i32_1 = arith.constant 0 : i32
    return %c0_i32, %c0_i32_0 : i32, i32
  }
  func.func @transform_3(%arg0: i32, %arg1: i32) -> (i32, i32, i32) {
    %c0_i32 = arith.constant 0 : i32
    %c0_i32_0 = arith.constant 0 : i32
    return %arg0, %arg1, %c0_i32 : i32, i32, i32
  }
}

</mosaic_0001>

<llo_original>
// kernel: tpu_custom_call.1
$region0: #{tpu_custom_call.1}
  #allocation0 [shape = 'u32[]', space=smem, size = 0x4, offset = 0x4, fixed_abs, tag = 'smem constant byte address 0x4 - core index']
  #allocation1 [shape = 'u32[144,128]{1,0:T(1,128)}', space=vmem, size = 0x12000, scoped, tag = 'internal scratch']
  %s0 = inlined_call_operand.vmem [shape: f32[2,4,10,10,4], index: 0, kind: input, shape index: {}]
  %s1 = inlined_call_operand.vmem [shape: f32[25,4,8], index: 1, kind: input, shape index: {}]
  %s2 = inlined_call_operand.vmem [shape: f32[1,8], index: 2, kind: input, shape index: {}]
  %s3 = inlined_call_operand.vmem [shape: f32[2,64,8], index: 3, kind: output, shape index: {}]
  %s4 = sld [smem:[#allocation0]]
  $region45: #{tpu_custom_call.1} parent=0
    _
  %s6 = ssub.s32 1, %s4
  %s7 = scalar_select 0, %s6, %s4
  loop: start=0, step=1, limit=4
  $region2: #{tpu_custom_call.1} parent=0 // loop_pre_header
    _
  $region3: #{tpu_custom_call.1} parent=0 // loop_header
    %s9 = sphi 0, %s13
    %p10 = scmp.ge.s32.totalorder %s9, 4
    %s16 = sphi 0, %s28
    %s17 = sphi 0, %s24
    %s18 = sphi 0, %s16
    %s19 = sphi 0, %s17
    %s20 = sphi 0, %s18
    %s21 = sphi 0, %s19
    %s31 = sphi 0, %s33
    %s34 = sphi 0, %s31
    %s35 = sphi 0, %s34
    %s51 = sphi 0, %s35
    %s55 = sphi 0, %s55
    %s57 = sphi 0, %s55
    %s58 = sphi 0, %s57
    %s72 = sphi 0, %s58
    %s76 = sphi 0, %s76
    %s78 = sphi 0, %s76
    %s79 = sphi 0, %s78
    %s93 = sphi 0, %s79
    %s101 = sphi 0, %s103
    %s104 = sphi 0, %s101
    %s105 = sphi 0, %s104
    %s121 = sphi 0, %s105
  $region4: #{tpu_custom_call.1} parent=0 // loop_header_branch
    %12 = sbr.rel (%p10) target = $region8
  $region5: #{tpu_custom_call.1} parent=0 // loop_body
    %s14 = ssub.s32 %s9, 1
    %s15 = ssub.s32 %s9, 2
    %s22 = sadd.s32 1, %s17
    %p23 = scmp.ge.s32.totalorder %s22, 1
    %s24 = scalar_select %p23, 0, %s22
    %s25 = sadd.s32 1, %s16
    %s26 = scalar_select %p23, %s25, %s16
    %p27 = scmp.ge.s32.totalorder %s26, 2
    %s28 = scalar_select %p27, 0, %s26
    %s29 = ssub.s32 %s16, %s28
    %p30 = scmp.eq.s32.totalorder %s29, 0
    %s32 = sadd.s32 %s31, 1
    %s33 = scalar_select %p30, %s31, %s32
    %p36 = pneg %p30
    %p37 = scmp.eq.s32.totalorder %s9, 1
    %p38 = por %p36, %p37
    %p39 = scmp.ne.s32.totalorder %s31, %s34
    %p40 = scmp.eq.s32.totalorder %s9, 0
    %p41 = por %p39, %p40
    %p42 = scmp.ne.s32.totalorder %s31, %s34
    %p43 = scmp.eq.s32.totalorder %s14, 1
    %p44 = por %p42, %p43
    %p45 = scmp.ne.s32.totalorder %s34, %s35
    %p46 = scmp.eq.s32.totalorder %s14, 0
    %p47 = por %p45, %p46
    %p48 = scmp.ne.s32.totalorder %s34, %s35
    %p49 = scmp.eq.s32.totalorder %s15, 1
    %p50 = por %p48, %p49
    %p52 = scmp.ne.s32.totalorder %s35, %s51
    %p53 = scmp.eq.s32.totalorder %s15, 0
    %p54 = por %p52, %p53
    %s56 = sadd.s32 %s55, 1
    %p59 = scmp.eq.s32.totalorder %s9, 1
    %p60 = scmp.ne.s32.totalorder %s55, %s57
    %p61 = scmp.eq.s32.totalorder %s9, 0
    %p62 = por %p60, %p61
    %p63 = scmp.ne.s32.totalorder %s55, %s57
    %p64 = scmp.eq.s32.totalorder %s14, 1
    %p65 = por %p63, %p64
    %p66 = scmp.ne.s32.totalorder %s57, %s58
    %p67 = scmp.eq.s32.totalorder %s14, 0
    %p68 = por %p66, %p67
    %p69 = scmp.ne.s32.totalorder %s57, %s58
    %p70 = scmp.eq.s32.totalorder %s15, 1
    %p71 = por %p69, %p70
    %p73 = scmp.ne.s32.totalorder %s58, %s72
    %p74 = scmp.eq.s32.totalorder %s15, 0
    %p75 = por %p73, %p74
    %s77 = sadd.s32 %s76, 1
    %p80 = scmp.eq.s32.totalorder %s9, 1
    %p81 = scmp.ne.s32.totalorder %s76, %s78
    %p82 = scmp.eq.s32.totalorder %s9, 0
    %p83 = por %p81, %p82
    %p84 = scmp.ne.s32.totalorder %s76, %s78
    %p85 = scmp.eq.s32.totalorder %s14, 1
    %p86 = por %p84, %p85
    %p87 = scmp.ne.s32.totalorder %s78, %s79
    %p88 = scmp.eq.s32.totalorder %s14, 0
    %p89 = por %p87, %p88
    %p90 = scmp.ne.s32.totalorder %s78, %s79
    %p91 = scmp.eq.s32.totalorder %s15, 1
    %p92 = por %p90, %p91
    %p94 = scmp.ne.s32.totalorder %s79, %s93
    %p95 = scmp.eq.s32.totalorder %s15, 0
    %p96 = por %p94, %p95
    %s97 = ssub.s32 %s16, %s28
    %s98 = ssub.s32 %s17, %s24
    %s99 = sor.u32 %s97, %s98
    %p100 = scmp.eq.s32.totalorder %s99, 0
    %s102 = sadd.s32 %s101, 1
    %s103 = scalar_select %p100, %s101, %s102
    %p106 = pneg %p100
    %p107 = scmp.eq.s32.totalorder %s9, 1
    %p108 = por %p106, %p107
    %p109 = scmp.ne.s32.totalorder %s101, %s104
    %p110 = scmp.eq.s32.totalorder %s9, 0
    %p111 = por %p109, %p110
    %p112 = scmp.ne.s32.totalorder %s101, %s104
    %p113 = scmp.eq.s32.totalorder %s14, 1
    %p114 = por %p112, %p113
    %p115 = scmp.ne.s32.totalorder %s104, %s105
    %p116 = scmp.eq.s32.totalorder %s14, 0
    %p117 = por %p115, %p116
    %p118 = scmp.ne.s32.totalorder %s104, %s105
    %p119 = scmp.eq.s32.totalorder %s15, 1
    %p120 = por %p118, %p119
    %p122 = scmp.ne.s32.totalorder %s105, %s121
    %p123 = scmp.eq.s32.totalorder %s15, 0
    %p124 = por %p122, %p123
    %p125 = scmp.le.s32.totalorder 1, %s9
    %p126 = scmp.lt.s32.totalorder %s9, 3
    %p127 = pnand %p125, %p126
    %p128 = pneg %p127
    // Predicated region
    $region9: #{tpu_custom_call.1} parent=5 // pred_check
      _
    $region10: #{tpu_custom_call.1} parent=5 // pred_check_branch
      %130 = sbr.rel (%p127) target = $region12
    $region11: #{tpu_custom_call.1} parent=5 // pred_region
      %s131 = ssub.s32 %s9, 1
      // Predicated region
      $region13: #{tpu_custom_call.1} parent=11 // pred_check
        %p132 = pneg %p68
      $region14: #{tpu_custom_call.1} parent=11 // pred_check_branch
        %134 = sbr.rel (%p132) target = $region16
      $region15: #{tpu_custom_call.1} parent=11 // pred_region
        _
      $region16: #{tpu_custom_call.1} parent=11 // pred_fallthru
        _
      // Predicated region
      $region17: #{tpu_custom_call.1} parent=11 // pred_check
        %p135 = pneg %p89
      $region18: #{tpu_custom_call.1} parent=11 // pred_check_branch
        %137 = sbr.rel (%p135) target = $region20
      $region19: #{tpu_custom_call.1} parent=11 // pred_region
        _
      $region20: #{tpu_custom_call.1} parent=11 // pred_fallthru
        _
    $region12: #{tpu_custom_call.1} parent=5 // pred_fallthru
      _
    %p138 = scmp.lt.s32.totalorder %s9, 2
    // Predicated region
    $region21: #{tpu_custom_call.1} parent=5 // pred_check
      %p139 = pneg %p138
    $region22: #{tpu_custom_call.1} parent=5 // pred_check_branch
      %141 = sbr.rel (%p139) target = $region24
    $region23: #{tpu_custom_call.1} parent=5 // pred_region
      // Predicated region
      $region25: #{tpu_custom_call.1} parent=23 // pred_check
        %p142 = pneg %p41
      $region26: #{tpu_custom_call.1} parent=23 // pred_check_branch
        %144 = sbr.rel (%p142) target = $region28
      $region27: #{tpu_custom_call.1} parent=23 // pred_region
        %p145 = scmp.lt.s32.totalorder %s16, 1
        %s146 = scalar_select %p145, %s16, 1
        %s147 = smul.addr %s146, 80
        %s148 = smul.addr %s147, 8
        %s149 = scalar_lea.vmem %s0, %s148
      $region28: #{tpu_custom_call.1} parent=23 // pred_fallthru
        _
    $region24: #{tpu_custom_call.1} parent=5 // pred_fallthru
      _
    %p150 = scmp.le.s32.totalorder 1, %s9
    %p151 = scmp.lt.s32.totalorder %s9, 3
    %p152 = pnand %p150, %p151
    %p153 = pneg %p152
    // Predicated region
    $region29: #{tpu_custom_call.1} parent=5 // pred_check
      _
    $region30: #{tpu_custom_call.1} parent=5 // pred_check_branch
      %155 = sbr.rel (%p152) target = $region32
    $region31: #{tpu_custom_call.1} parent=5 // pred_region
      %s156 = ssub.s32 %s9, 1
      %p157 = scmp.lt.s32.totalorder %s18, 1
      %s158 = scalar_select %p157, %s18, 1
      %s159 = smul.addr %s158, 80
      %s160 = smul.addr %s159, 8
      %s161 = scalar_lea.vmem %s0, %s160
      %p162 = pneg %p47
      %p163 = pneg %p44
      %p164 = pneg %p68
      %p165 = pneg %p65
      %p166 = pneg %p89
      %p167 = pneg %p86
      %p168 = pneg %p117
      %p169 = pneg %p114
      %s170 = smul.u32 8, %s19
      %p171 = scmp.lt.s32.totalorder %s18, 1
      %s172 = scalar_select %p171, %s18, 1
      %p173 = scmp.lt.s32.totalorder %s170, 7
      %s174 = scalar_select %p173, %s170, 7
      %s175 = smul.addr %s172, 8
      %s176 = sadd.s32 %s174, %s175
      %s177 = smul.addr %s176, 8
      %s178 = scalar_lea.vmem %s3, %s177
      %p179 = scmp.lt.s32.totalorder %s18, 1
      %s180 = scalar_select %p179, %s18, 1
      %s181 = smul.addr %s180, 80
      %s182 = smul.addr %s181, 8
      %s183 = scalar_lea.vmem %s0, %s182
      %s184 = smul.u32 8, %s19
      %p185 = scmp.lt.s32.totalorder %s18, 1
      %s186 = scalar_select %p185, %s18, 1
      %p187 = scmp.lt.s32.totalorder %s184, 7
      %s188 = scalar_select %p187, %s184, 7
      %s189 = smul.addr %s186, 8
      %s190 = sadd.s32 %s188, %s189
      %s191 = smul.addr %s190, 8
      %s192 = scalar_lea.vmem %s3, %s191
      %s193 = smul.u32 8, %s19
      %s194 = smul.u32 %s19, 8
      %v195 = vld [vmem:[%s2] sm:$0x1]
      %v197 = vlaneseq
      %v198 = vshrl.u32 %v197, 7
      %v199 = vsub.s32 0, %v198
      %v200 = vrot.slane %v195, %v199
      %s202 = smul.u32 %s194, 16
      %s203 = scalar_lea.vmem %s183, %s202
      %v204 = vld [vmem:[%s203] sm:$0xff]
      %v205 = vld [vmem:[%s203 + $0x10] sm:$0xff]
      %v206 = vld [vmem:[%s203 + $0x20] sm:$0xff]
      %v207 = vld [vmem:[%s203 + $0x30] sm:$0xff]
      %v208 = vld [vmem:[%s203 + $0x40] sm:$0xff]
      %v209 = vld [vmem:[%s203 + $0x50] sm:$0xff]
      %v210 = vld [vmem:[%s203 + $0x60] sm:$0xff]
      %v211 = vld [vmem:[%s203 + $0x70] sm:$0xff]
      %v212 = vld [vmem:[%s1] sm:$0xf]
      %vm213 = vcmask 31744
      %v215 = vsel %vm213, %v204, 0
      %v218 = vsel %vm213, %v205, 0
      %v221 = vsel %vm213, %v206, 0
      %v224 = vsel %vm213, %v207, 0
      %v227 = vsel %vm213, %v208, 0
      %v230 = vsel %vm213, %v209, 0
      %v233 = vsel %vm213, %v210, 0
      %v236 = vsel %vm213, %v211, 0
      %vm238 = vcmask 1043456
      %v240 = vsel %vm238, %v212, 0
      %242 = vmatprep.subr.mxu0 0.0
      %243 = vmatpush1.msra.mxu0 0.0
      %244 = vmatprep.subr.mxu0 0.0
      %245 = vmatpush1.msra.mxu0 0.0
      %246 = vmatprep.subr.mxu0 0.0
      %247 = vmatpush1.msra.mxu0 0.0
      %248 = vmatprep.subr.mxu0 0.0
      %249 = vmatpush1.msra.mxu0 0.0
      %250 = vmatprep.subr.mxu0 0.0
      %251 = vmatpush1.msra.mxu0 0.0
      %252 = vmatprep.subr.mxu0 0.0
      %253 = vmatpush1.msra.mxu0 0.0
      %254 = vmatprep.subr.mxu0 0.0
      %255 = vmatpush1.msra.mxu0 0.0
      %256 = vmatprep.subr.mxu0 0.0
      %257 = vmatpush1.msra.mxu0 0.0
      %258 = vmatprep.subr.mxu0 0.0
      %259 = vmatpush1.msra.mxu0 0.0
      %260 = vmatprep.subr.mxu0 0.0
      %261 = vmatpush1.msra.mxu0 0.0
      %262 = vmatprep.subr.mxu0 0.0
      %263 = vmatpush1.msra.mxu0 0.0
      %264 = vmatprep.subr.mxu0 0.0
      %265 = vmatpush1.msra.mxu0 0.0
      %266 = vmatprep.subr.mxu0 0.0
      %267 = vmatpush1.msra.mxu0 0.0
      %268 = vmatprep.subr.mxu0 0.0
      %269 = vmatpush1.msra.mxu0 0.0
      %270 = vmatprep.subr.mxu0 0.0
      %271 = vmatpush1.msra.mxu0 0.0
      %272 = vmatprep.subr.mxu0 0.0
      %273 = vmatpush1.msra.mxu0 %v240
      %274 = vmatprep.subr.mxu0 0.0
      %275 = vmatpush2.msra.mxu0 0.0
      %276 = vmatprep.subr.mxu0 0.0
      %277 = vmatpush2.msra.mxu0 0.0
      %278 = vmatprep.subr.mxu0 0.0
      %279 = vmatpush2.msra.mxu0 0.0
      %280 = vmatprep.subr.mxu0 0.0
      %281 = vmatpush2.msra.mxu0 0.0
      %282 = vmatprep.subr.mxu0 0.0
      %283 = vmatpush2.msra.mxu0 0.0
      %284 = vmatprep.subr.mxu0 0.0
      %285 = vmatpush2.msra.mxu0 0.0
      %286 = vmatprep.subr.mxu0 0.0
      %287 = vmatpush2.msra.mxu0 0.0
      %288 = vmatprep.subr.mxu0 0.0
      %289 = vmatpush2.msra.mxu0 0.0
      %290 = vmatprep.subr.mxu0 0.0
      %291 = vmatpush2.msra.mxu0 0.0
      %292 = vmatprep.subr.mxu0 0.0
      %293 = vmatpush2.msra.mxu0 0.0
      %294 = vmatprep.subr.mxu0 0.0
      %295 = vmatpush2.msra.mxu0 0.0
      %296 = vmatprep.subr.mxu0 0.0
      %297 = vmatpush2.msra.mxu0 0.0
      %298 = vmatprep.subr.mxu0 0.0
      %299 = vmatpush2.msra.mxu0 0.0
      %300 = vmatprep.subr.mxu0 0.0
      %301 = vmatpush2.msra.mxu0 0.0
      %302 = vmatprep.subr.mxu0 0.0
      %303 = vmatpush2.msra.mxu0 0.0
      %304 = vmatprep.subr.mxu0 0.0
      %305 = vmatpush2.msra.mxu0 0.0
      %306 = vmatprep.mubr.f32.mxu0 0.0
      %307 = vmatmul.mubr.f32.gmra.mxu0 %v215
      %v308 = vpop.f32.mrf.mxu0
      %v309 = vadd.f32 0.0, %v308
      %v310 = vpop.f32.mrf.mxu0
      %311 = vmatprep.mubr.f32.mxu0 0.0
      %312 = vmatmul.mubr.f32.gmra.mxu0 %v218
      %v313 = vpop.f32.mrf.mxu0
      %v314 = vadd.f32 0.0, %v313
      %v315 = vpop.f32.mrf.mxu0
      %316 = vmatprep.mubr.f32.mxu0 0.0
      %317 = vmatmul.mubr.f32.gmra.mxu0 %v221
      %v318 = vpop.f32.mrf.mxu0
      %v319 = vadd.f32 0.0, %v318
      %v320 = vpop.f32.mrf.mxu0
      %321 = vmatprep.mubr.f32.mxu0 0.0
      %322 = vmatmul.mubr.f32.gmra.mxu0 %v224
      %v323 = vpop.f32.mrf.mxu0
      %v324 = vadd.f32 0.0, %v323
      %v325 = vpop.f32.mrf.mxu0
      %326 = vmatprep.mubr.f32.mxu0 0.0
      %327 = vmatmul.mubr.f32.gmra.mxu0 %v227
      %v328 = vpop.f32.mrf.mxu0
      %v329 = vadd.f32 0.0, %v328
      %v330 = vpop.f32.mrf.mxu0
      %331 = vmatprep.mubr.f32.mxu0 0.0
      %332 = vmatmul.mubr.f32.gmra.mxu0 %v230
      %v333 = vpop.f32.mrf.mxu0
      %v334 = vadd.f32 0.0, %v333
      %v335 = vpop.f32.mrf.mxu0
      %336 = vmatprep.mubr.f32.mxu0 0.0
      %337 = vmatmul.mubr.f32.gmra.mxu0 %v233
      %v338 = vpop.f32.mrf.mxu0
      %v339 = vadd.f32 0.0, %v338
      %v340 = vpop.f32.mrf.mxu0
      %341 = vmatprep.mubr.f32.mxu0 0.0
      %342 = vmatmul.mubr.f32.gmra.mxu0 %v236
      %v343 = vpop.f32.mrf.mxu0
      %v344 = vadd.f32 0.0, %v343
      %v345 = vpop.f32.mrf.mxu0
      %346 = vdwg.mxu0
      %v347 = vadd.f32 %v200, %v309
      %v348 = vadd.f32 %v200, %v314
      %v349 = vadd.f32 %v200, %v319
      %v350 = vadd.f32 %v200, %v324
      %v351 = vadd.f32 %v200, %v329
      %v352 = vadd.f32 %v200, %v334
      %v353 = vadd.f32 %v200, %v339
      %v354 = vadd.f32 %v200, %v344
      %s355 = sadd.s32 %s202, 160
      %s356 = scalar_lea.vmem %s183, %s355
      %v357 = vld [vmem:[%s356] sm:$0xff]
      %v358 = vld [vmem:[%s356 + $0x10] sm:$0xff]
      %v359 = vld [vmem:[%s356 + $0x20] sm:$0xff]
      %v360 = vld [vmem:[%s356 + $0x30] sm:$0xff]
      %v361 = vld [vmem:[%s356 + $0x40] sm:$0xff]
      %v362 = vld [vmem:[%s356 + $0x50] sm:$0xff]
      %v363 = vld [vmem:[%s356 + $0x60] sm:$0xff]
      %v364 = vld [vmem:[%s356 + $0x70] sm:$0xff]
      %s365 = scalar_lea.vmem %s1, 4
      %v366 = vld [vmem:[%s365] sm:$0xf]
      %v368 = vsel %vm213, %v357, 0
      %v371 = vsel %vm213, %v358, 0
      %v374 = vsel %vm213, %v359, 0
      %v377 = vsel %vm213, %v360, 0
      %v380 = vsel %vm213, %v361, 0
      %v383 = vsel %vm213, %v362, 0
      %v386 = vsel %vm213, %v363, 0
      %v389 = vsel %vm213, %v364, 0
      %v392 = vsel %vm238, %v366, 0
      %394 = vmatprep.subr.mxu0 0.0
      %395 = vmatpush1.msra.mxu0 0.0
      %396 = vmatprep.subr.mxu0 0.0
      %397 = vmatpush1.msra.mxu0 0.0
      %398 = vmatprep.subr.mxu0 0.0
      %399 = vmatpush1.msra.mxu0 0.0
      %400 = vmatprep.subr.mxu0 0.0
      %401 = vmatpush1.msra.mxu0 0.0
      %402 = vmatprep.subr.mxu0 0.0
      %403 = vmatpush1.msra.mxu0 0.0
      %404 = vmatprep.subr.mxu0 0.0
      %405 = vmatpush1.msra.mxu0 0.0
      %406 = vmatprep.subr.mxu0 0.0
      %407 = vmatpush1.msra.mxu0 0.0
      %408 = vmatprep.subr.mxu0 0.0
      %409 = vmatpush1.msra.mxu0 0.0
      %410 = vmatprep.subr.mxu0 0.0
      %411 = vmatpush1.msra.mxu0 0.0
      %412 = vmatprep.subr.mxu0 0.0
      %413 = vmatpush1.msra.mxu0 0.0
      %414 = vmatprep.subr.mxu0 0.0
      %415 = vmatpush1.msra.mxu0 0.0
      %416 = vmatprep.subr.mxu0 0.0
      %417 = vmatpush1.msra.mxu0 0.0
      %418 = vmatprep.subr.mxu0 0.0
      %419 = vmatpush1.msra.mxu0 0.0
      %420 = vmatprep.subr.mxu0 0.0
      %421 = vmatpush1.msra.mxu0 0.0
      %422 = vmatprep.subr.mxu0 0.0
      %423 = vmatpush1.msra.mxu0 0.0
      %424 = vmatprep.subr.mxu0 0.0
      %425 = vmatpush1.msra.mxu0 %v392
      %426 = vmatprep.subr.mxu0 0.0
      %427 = vmatpush2.msra.mxu0 0.0
      %428 = vmatprep.subr.mxu0 0.0
      %429 = vmatpush2.msra.mxu0 0.0
      %430 = vmatprep.subr.mxu0 0.0
      %431 = vmatpush2.msra.mxu0 0.0
      %432 = vmatprep.subr.mxu0 0.0
      %433 = vmatpush2.msra.mxu0 0.0
      %434 = vmatprep.subr.mxu0 0.0
      %435 = vmatpush2.msra.mxu0 0.0
      %436 = vmatprep.subr.mxu0 0.0
      %437 = vmatpush2.msra.mxu0 0.0
      %438 = vmatprep.subr.mxu0 0.0
      %439 = vmatpush2.msra.mxu0 0.0
      %440 = vmatprep.subr.mxu0 0.0
      %441 = vmatpush2.msra.mxu0 0.0
      %442 = vmatprep.subr.mxu0 0.0
      %443 = vmatpush2.msra.mxu0 0.0
      %444 = vmatprep.subr.mxu0 0.0
      %445 = vmatpush2.msra.mxu0 0.0
      %446 = vmatprep.subr.mxu0 0.0
      %447 = vmatpush2.msra.mxu0 0.0
      %448 = vmatprep.subr.mxu0 0.0
      %449 = vmatpush2.msra.mxu0 0.0
      %450 = vmatprep.subr.mxu0 0.0
      %451 = vmatpush2.msra.mxu0 0.0
      %452 = vmatprep.subr.mxu0 0.0
      %453 = vmatpush2.msra.mxu0 0.0
      %454 = vmatprep.subr.mxu0 0.0
      %455 = vmatpush2.msra.mxu0 0.0
      %456 = vmatprep.subr.mxu0 0.0
      %457 = vmatpush2.msra.mxu0 0.0
      %458 = vmatprep.mubr.f32.mxu0 0.0
      %459 = vmatmul.mubr.f32.gmra.mxu0 %v368
      %v460 = vpop.f32.mrf.mxu0
      %v461 = vadd.f32 0.0, %v460
      %v462 = vpop.f32.mrf.mxu0
      %463 = vmatprep.mubr.f32.mxu0 0.0
      %464 = vmatmul.mubr.f32.gmra.mxu0 %v371
      %v465 = vpop.f32.mrf.mxu0
      %v466 = vadd.f32 0.0, %v465
      %v467 = vpop.f32.mrf.mxu0
      %468 = vmatprep.mubr.f32.mxu0 0.0
      %469 = vmatmul.mubr.f32.gmra.mxu0 %v374
      %v470 = vpop.f32.mrf.mxu0
      %v471 = vadd.f32 0.0, %v470
      %v472 = vpop.f32.mrf.mxu0
      %473 = vmatprep.mubr.f32.mxu0 0.0
      %474 = vmatmul.mubr.f32.gmra.mxu0 %v377
      %v475 = vpop.f32.mrf.mxu0
      %v476 = vadd.f32 0.0, %v475
      %v477 = vpop.f32.mrf.mxu0
      %478 = vmatprep.mubr.f32.mxu0 0.0
      %479 = vmatmul.mubr.f32.gmra.mxu0 %v380
      %v480 = vpop.f32.mrf.mxu0
      %v481 = vadd.f32 0.0, %v480
      %v482 = vpop.f32.mrf.mxu0
      %483 = vmatprep.mubr.f32.mxu0 0.0
      %484 = vmatmul.mubr.f32.gmra.mxu0 %v383
      %v485 = vpop.f32.mrf.mxu0
      %v486 = vadd.f32 0.0, %v485
      %v487 = vpop.f32.mrf.mxu0
      %488 = vmatprep.mubr.f32.mxu0 0.0
      %489 = vmatmul.mubr.f32.gmra.mxu0 %v386
      %v490 = vpop.f32.mrf.mxu0
      %v491 = vadd.f32 0.0, %v490
      %v492 = vpop.f32.mrf.mxu0
      %493 = vmatprep.mubr.f32.mxu0 0.0
      %494 = vmatmul.mubr.f32.gmra.mxu0 %v389
      %v495 = vpop.f32.mrf.mxu0
      %v496 = vadd.f32 0.0, %v495
      %v497 = vpop.f32.mrf.mxu0
      %498 = vdwg.mxu0
      %v499 = vadd.f32 %v347, %v461
      %v500 = vadd.f32 %v348, %v466
      %v501 = vadd.f32 %v349, %v471
      %v502 = vadd.f32 %v350, %v476
      %v503 = vadd.f32 %v351, %v481
      %v504 = vadd.f32 %v352, %v486
      %v505 = vadd.f32 %v353, %v491
      %v506 = vadd.f32 %v354, %v496
      %v507 = vld [vmem:[%s203 + $0x1] sm:$0xff]
      %v508 = vld [vmem:[%s203 + $0x11] sm:$0xff]
      %v509 = vld [vmem:[%s203 + $0x21] sm:$0xff]
      %v510 = vld [vmem:[%s203 + $0x31] sm:$0xff]
      %v511 = vld [vmem:[%s203 + $0x41] sm:$0xff]
      %v512 = vld [vmem:[%s203 + $0x51] sm:$0xff]
      %v513 = vld [vmem:[%s203 + $0x61] sm:$0xff]
      %v514 = vld [vmem:[%s203 + $0x71] sm:$0xff]
      %s515 = scalar_lea.vmem %s1, 8
      %v516 = vld [vmem:[%s515] sm:$0xf]
      %v518 = vsel %vm213, %v507, 0
      %v521 = vsel %vm213, %v508, 0
      %v524 = vsel %vm213, %v509, 0
      %v527 = vsel %vm213, %v510, 0
      %v530 = vsel %vm213, %v511, 0
      %v533 = vsel %vm213, %v512, 0
      %v536 = vsel %vm213, %v513, 0
      %v539 = vsel %vm213, %v514, 0
      %v542 = vsel %vm238, %v516, 0
      %544 = vmatprep.subr.mxu0 0.0
      %545 = vmatpush1.msra.mxu0 0.0
      %546 = vmatprep.subr.mxu0 0.0
      %547 = vmatpush1.msra.mxu0 0.0
      %548 = vmatprep.subr.mxu0 0.0
      %549 = vmatpush1.msra.mxu0 0.0
      %550 = vmatprep.subr.mxu0 0.0
      %551 = vmatpush1.msra.mxu0 0.0
      %552 = vmatprep.subr.mxu0 0.0
      %553 = vmatpush1.msra.mxu0 0.0
      %554 = vmatprep.subr.mxu0 0.0
      %555 = vmatpush1.msra.mxu0 0.0
      %556 = vmatprep.subr.mxu0 0.0
      %557 = vmatpush1.msra.mxu0 0.0
      %558 = vmatprep.subr.mxu0 0.0
      %559 = vmatpush1.msra.mxu0 0.0
      %560 = vmatprep.subr.mxu0 0.0
      %561 = vmatpush1.msra.mxu0 0.0
      %562 = vmatprep.subr.mxu0 0.0
      %563 = vmatpush1.msra.mxu0 0.0
      %564 = vmatprep.subr.mxu0 0.0
      %565 = vmatpush1.msra.mxu0 0.0
      %566 = vmatprep.subr.mxu0 0.0
      %567 = vmatpush1.msra.mxu0 0.0
      %568 = vmatprep.subr.mxu0 0.0
      %569 = vmatpush1.msra.mxu0 0.0
      %570 = vmatprep.subr.mxu0 0.0
      %571 = vmatpush1.msra.mxu0 0.0
      %572 = vmatprep.subr.mxu0 0.0
      %573 = vmatpush1.msra.mxu0 0.0
      %574 = vmatprep.subr.mxu0 0.0
      %575 = vmatpush1.msra.mxu0 %v542
      %576 = vmatprep.subr.mxu0 0.0
      %577 = vmatpush2.msra.mxu0 0.0
      %578 = vmatprep.subr.mxu0 0.0
      %579 = vmatpush2.msra.mxu0 0.0
      %580 = vmatprep.subr.mxu0 0.0
      %581 = vmatpush2.msra.mxu0 0.0
      %582 = vmatprep.subr.mxu0 0.0
      %583 = vmatpush2.msra.mxu0 0.0
      %584 = vmatprep.subr.mxu0 0.0
      %585 = vmatpush2.msra.mxu0 0.0
      %586 = vmatprep.subr.mxu0 0.0
      %587 = vmatpush2.msra.mxu0 0.0
      %588 = vmatprep.subr.mxu0 0.0
      %589 = vmatpush2.msra.mxu0 0.0
      %590 = vmatprep.subr.mxu0 0.0
      %591 = vmatpush2.msra.mxu0 0.0
      %592 = vmatprep.subr.mxu0 0.0
      %593 = vmatpush2.msra.mxu0 0.0
      %594 = vmatprep.subr.mxu0 0.0
      %595 = vmatpush2.msra.mxu0 0.0
      %596 = vmatprep.subr.mxu0 0.0
      %597 = vmatpush2.msra.mxu0 0.0
      %598 = vmatprep.subr.mxu0 0.0
      %599 = vmatpush2.msra.mxu0 0.0
      %600 = vmatprep.subr.mxu0 0.0
      %601 = vmatpush2.msra.mxu0 0.0
      %602 = vmatprep.subr.mxu0 0.0
      %603 = vmatpush2.msra.mxu0 0.0
      %604 = vmatprep.subr.mxu0 0.0
      %605 = vmatpush2.msra.mxu0 0.0
      %606 = vmatprep.subr.mxu0 0.0
      %607 = vmatpush2.msra.mxu0 0.0
      %608 = vmatprep.mubr.f32.mxu0 0.0
      %609 = vmatmul.mubr.f32.gmra.mxu0 %v518
      %v610 = vpop.f32.mrf.mxu0
      %v611 = vadd.f32 0.0, %v610
      %v612 = vpop.f32.mrf.mxu0
      %613 = vmatprep.mubr.f32.mxu0 0.0
      %614 = vmatmul.mubr.f32.gmra.mxu0 %v521
      %v615 = vpop.f32.mrf.mxu0
      %v616 = vadd.f32 0.0, %v615
      %v617 = vpop.f32.mrf.mxu0
      %618 = vmatprep.mubr.f32.mxu0 0.0
      %619 = vmatmul.mubr.f32.gmra.mxu0 %v524
      %v620 = vpop.f32.mrf.mxu0
      %v621 = vadd.f32 0.0, %v620
      %v622 = vpop.f32.mrf.mxu0
      %623 = vmatprep.mubr.f32.mxu0 0.0
      %624 = vmatmul.mubr.f32.gmra.mxu0 %v527
      %v625 = vpop.f32.mrf.mxu0
      %v626 = vadd.f32 0.0, %v625
      %v627 = vpop.f32.mrf.mxu0
      %628 = vmatprep.mubr.f32.mxu0 0.0
      %629 = vmatmul.mubr.f32.gmra.mxu0 %v530
      %v630 = vpop.f32.mrf.mxu0
      %v631 = vadd.f32 0.0, %v630
      %v632 = vpop.f32.mrf.mxu0
      %633 = vmatprep.mubr.f32.mxu0 0.0
      %634 = vmatmul.mubr.f32.gmra.mxu0 %v533
      %v635 = vpop.f32.mrf.mxu0
      %v636 = vadd.f32 0.0, %v635
      %v637 = vpop.f32.mrf.mxu0
      %638 = vmatprep.mubr.f32.mxu0 0.0
      %639 = vmatmul.mubr.f32.gmra.mxu0 %v536
      %v640 = vpop.f32.mrf.mxu0
      %v641 = vadd.f32 0.0, %v640
      %v642 = vpop.f32.mrf.mxu0
      %643 = vmatprep.mubr.f32.mxu0 0.0
      %644 = vmatmul.mubr.f32.gmra.mxu0 %v539
      %v645 = vpop.f32.mrf.mxu0
      %v646 = vadd.f32 0.0, %v645
      %v647 = vpop.f32.mrf.mxu0
      %648 = vdwg.mxu0
      %v649 = vadd.f32 %v499, %v611
      %v650 = vadd.f32 %v500, %v616
      %v651 = vadd.f32 %v501, %v621
      %v652 = vadd.f32 %v502, %v626
      %v653 = vadd.f32 %v503, %v631
      %v654 = vadd.f32 %v504, %v636
      %v655 = vadd.f32 %v505, %v641
      %v656 = vadd.f32 %v506, %v646
      %v657 = vld [vmem:[%s356 + $0x1] sm:$0xff]
      %v658 = vld [vmem:[%s356 + $0x11] sm:$0xff]
      %v659 = vld [vmem:[%s356 + $0x21] sm:$0xff]
      %v660 = vld [vmem:[%s356 + $0x31] sm:$0xff]
      %v661 = vld [vmem:[%s356 + $0x41] sm:$0xff]
      %v662 = vld [vmem:[%s356 + $0x51] sm:$0xff]
      %v663 = vld [vmem:[%s356 + $0x61] sm:$0xff]
      %v664 = vld [vmem:[%s356 + $0x71] sm:$0xff]
      %s665 = scalar_lea.vmem %s1, 12
      %v666 = vld [vmem:[%s665] sm:$0xf]
      %v668 = vsel %vm213, %v657, 0
      %v671 = vsel %vm213, %v658, 0
      %v674 = vsel %vm213, %v659, 0
      %v677 = vsel %vm213, %v660, 0
      %v680 = vsel %vm213, %v661, 0
      %v683 = vsel %vm213, %v662, 0
      %v686 = vsel %vm213, %v663, 0
      %v689 = vsel %vm213, %v664, 0
      %v692 = vsel %vm238, %v666, 0
      %694 = vmatprep.subr.mxu0 0.0
      %695 = vmatpush1.msra.mxu0 0.0
      %696 = vmatprep.subr.mxu0 0.0
      %697 = vmatpush1.msra.mxu0 0.0
      %698 = vmatprep.subr.mxu0 0.0
      %699 = vmatpush1.msra.mxu0 0.0
      %700 = vmatprep.subr.mxu0 0.0
      %701 = vmatpush1.msra.mxu0 0.0
      %702 = vmatprep.subr.mxu0 0.0
      %703 = vmatpush1.msra.mxu0 0.0
      %704 = vmatprep.subr.mxu0 0.0
      %705 = vmatpush1.msra.mxu0 0.0
      %706 = vmatprep.subr.mxu0 0.0
      %707 = vmatpush1.msra.mxu0 0.0
      %708 = vmatprep.subr.mxu0 0.0
      %709 = vmatpush1.msra.mxu0 0.0
      %710 = vmatprep.subr.mxu0 0.0
      %711 = vmatpush1.msra.mxu0 0.0
      %712 = vmatprep.subr.mxu0 0.0
      %713 = vmatpush1.msra.mxu0 0.0
      %714 = vmatprep.subr.mxu0 0.0
      %715 = vmatpush1.msra.mxu0 0.0
      %716 = vmatprep.subr.mxu0 0.0
      %717 = vmatpush1.msra.mxu0 0.0
      %718 = vmatprep.subr.mxu0 0.0
      %719 = vmatpush1.msra.mxu0 0.0
      %720 = vmatprep.subr.mxu0 0.0
      %721 = vmatpush1.msra.mxu0 0.0
      %722 = vmatprep.subr.mxu0 0.0
      %723 = vmatpush1.msra.mxu0 0.0
      %724 = vmatprep.subr.mxu0 0.0
      %725 = vmatpush1.msra.mxu0 %v692
      %726 = vmatprep.subr.mxu0 0.0
      %727 = vmatpush2.msra.mxu0 0.0
      %728 = vmatprep.subr.mxu0 0.0
      %729 = vmatpush2.msra.mxu0 0.0
      %730 = vmatprep.subr.mxu0 0.0
      %731 = vmatpush2.msra.mxu0 0.0
      %732 = vmatprep.subr.mxu0 0.0
      %733 = vmatpush2.msra.mxu0 0.0
      %734 = vmatprep.subr.mxu0 0.0
      %735 = vmatpush2.msra.mxu0 0.0
      %736 = vmatprep.subr.mxu0 0.0
      %737 = vmatpush2.msra.mxu0 0.0
      %738 = vmatprep.subr.mxu0 0.0
      %739 = vmatpush2.msra.mxu0 0.0
      %740 = vmatprep.subr.mxu0 0.0
      %741 = vmatpush2.msra.mxu0 0.0
      %742 = vmatprep.subr.mxu0 0.0
      %743 = vmatpush2.msra.mxu0 0.0
      %744 = vmatprep.subr.mxu0 0.0
      %745 = vmatpush2.msra.mxu0 0.0
      %746 = vmatprep.subr.mxu0 0.0
      %747 = vmatpush2.msra.mxu0 0.0
      %748 = vmatprep.subr.mxu0 0.0
      %749 = vmatpush2.msra.mxu0 0.0
      %750 = vmatprep.subr.mxu0 0.0
      %751 = vmatpush2.msra.mxu0 0.0
      %752 = vmatprep.subr.mxu0 0.0
      %753 = vmatpush2.msra.mxu0 0.0
      %754 = vmatprep.subr.mxu0 0.0
      %755 = vmatpush2.msra.mxu0 0.0
      %756 = vmatprep.subr.mxu0 0.0
      %757 = vmatpush2.msra.mxu0 0.0
      %758 = vmatprep.mubr.f32.mxu0 0.0
      %759 = vmatmul.mubr.f32.gmra.mxu0 %v668
      %v760 = vpop.f32.mrf.mxu0
      %v761 = vadd.f32 0.0, %v760
      %v762 = vpop.f32.mrf.mxu0
      %763 = vmatprep.mubr.f32.mxu0 0.0
      %764 = vmatmul.mubr.f32.gmra.mxu0 %v671
      %v765 = vpop.f32.mrf.mxu0
      %v766 = vadd.f32 0.0, %v765
      %v767 = vpop.f32.mrf.mxu0
      %768 = vmatprep.mubr.f32.mxu0 0.0
      %769 = vmatmul.mubr.f32.gmra.mxu0 %v674
      %v770 = vpop.f32.mrf.mxu0
      %v771 = vadd.f32 0.0, %v770
      %v772 = vpop.f32.mrf.mxu0
      %773 = vmatprep.mubr.f32.mxu0 0.0
      %774 = vmatmul.mubr.f32.gmra.mxu0 %v677
      %v775 = vpop.f32.mrf.mxu0
      %v776 = vadd.f32 0.0, %v775
      %v777 = vpop.f32.mrf.mxu0
      %778 = vmatprep.mubr.f32.mxu0 0.0
      %779 = vmatmul.mubr.f32.gmra.mxu0 %v680
      %v780 = vpop.f32.mrf.mxu0
      %v781 = vadd.f32 0.0, %v780
      %v782 = vpop.f32.mrf.mxu0
      %783 = vmatprep.mubr.f32.mxu0 0.0
      %784 = vmatmul.mubr.f32.gmra.mxu0 %v683
      %v785 = vpop.f32.mrf.mxu0
      %v786 = vadd.f32 0.0, %v785
      %v787 = vpop.f32.mrf.mxu0
      %788 = vmatprep.mubr.f32.mxu0 0.0
      %789 = vmatmul.mubr.f32.gmra.mxu0 %v686
      %v790 = vpop.f32.mrf.mxu0
      %v791 = vadd.f32 0.0, %v790
      %v792 = vpop.f32.mrf.mxu0
      %793 = vmatprep.mubr.f32.mxu0 0.0
      %794 = vmatmul.mubr.f32.gmra.mxu0 %v689
      %v795 = vpop.f32.mrf.mxu0
      %v796 = vadd.f32 0.0, %v795
      %v797 = vpop.f32.mrf.mxu0
      %798 = vdwg.mxu0
      %v799 = vadd.f32 %v649, %v761
      %v800 = vadd.f32 %v650, %v766
      %v801 = vadd.f32 %v651, %v771
      %v802 = vadd.f32 %v652, %v776
      %v803 = vadd.f32 %v653, %v781
      %v804 = vadd.f32 %v654, %v786
      %v805 = vadd.f32 %v655, %v791
      %v806 = vadd.f32 %v656, %v796
      %v807 = vld [vmem:[%s203 + $0x2] sm:$0xff]
      %v808 = vld [vmem:[%s203 + $0x12] sm:$0xff]
      %v809 = vld [vmem:[%s203 + $0x22] sm:$0xff]
      %v810 = vld [vmem:[%s203 + $0x32] sm:$0xff]
      %v811 = vld [vmem:[%s203 + $0x42] sm:$0xff]
      %v812 = vld [vmem:[%s203 + $0x52] sm:$0xff]
      %v813 = vld [vmem:[%s203 + $0x62] sm:$0xff]
      %v814 = vld [vmem:[%s203 + $0x72] sm:$0xff]
      %s815 = scalar_lea.vmem %s1, 16
      %v816 = vld [vmem:[%s815] sm:$0xf]
      %v818 = vsel %vm213, %v807, 0
      %v821 = vsel %vm213, %v808, 0
      %v824 = vsel %vm213, %v809, 0
      %v827 = vsel %vm213, %v810, 0
      %v830 = vsel %vm213, %v811, 0
      %v833 = vsel %vm213, %v812, 0
      %v836 = vsel %vm213, %v813, 0
      %v839 = vsel %vm213, %v814, 0
      %v842 = vsel %vm238, %v816, 0
      %844 = vmatprep.subr.mxu0 0.0
      %845 = vmatpush1.msra.mxu0 0.0
      %846 = vmatprep.subr.mxu0 0.0
      %847 = vmatpush1.msra.mxu0 0.0
      %848 = vmatprep.subr.mxu0 0.0
      %849 = vmatpush1.msra.mxu0 0.0
      %850 = vmatprep.subr.mxu0 0.0
      %851 = vmatpush1.msra.mxu0 0.0
      %852 = vmatprep.subr.mxu0 0.0
      %853 = vmatpush1.msra.mxu0 0.0
      %854 = vmatprep.subr.mxu0 0.0
      %855 = vmatpush1.msra.mxu0 0.0
      %856 = vmatprep.subr.mxu0 0.0
      %857 = vmatpush1.msra.mxu0 0.0
      %858 = vmatprep.subr.mxu0 0.0
      %859 = vmatpush1.msra.mxu0 0.0
      %860 = vmatprep.subr.mxu0 0.0
      %861 = vmatpush1.msra.mxu0 0.0
      %862 = vmatprep.subr.mxu0 0.0
      %863 = vmatpush1.msra.mxu0 0.0
      %864 = vmatprep.subr.mxu0 0.0
      %865 = vmatpush1.msra.mxu0 0.0
      %866 = vmatprep.subr.mxu0 0.0
      %867 = vmatpush1.msra.mxu0 0.0
      %868 = vmatprep.subr.mxu0 0.0
      %869 = vmatpush1.msra.mxu0 0.0
      %870 = vmatprep.subr.mxu0 0.0
      %871 = vmatpush1.msra.mxu0 0.0
      %872 = vmatprep.subr.mxu0 0.0
      %873 = vmatpush1.msra.mxu0 0.0
      %874 = vmatprep.subr.mxu0 0.0
      %875 = vmatpush1.msra.mxu0 %v842
      %876 = vmatprep.subr.mxu0 0.0
      %877 = vmatpush2.msra.mxu0 0.0
      %878 = vmatprep.subr.mxu0 0.0
      %879 = vmatpush2.msra.mxu0 0.0
      %880 = vmatprep.subr.mxu0 0.0
      %881 = vmatpush2.msra.mxu0 0.0
      %882 = vmatprep.subr.mxu0 0.0
      %883 = vmatpush2.msra.mxu0 0.0
      %884 = vmatprep.subr.mxu0 0.0
      %885 = vmatpush2.msra.mxu0 0.0
      %886 = vmatprep.subr.mxu0 0.0
      %887 = vmatpush2.msra.mxu0 0.0
      %888 = vmatprep.subr.mxu0 0.0
      %889 = vmatpush2.msra.mxu0 0.0
      %890 = vmatprep.subr.mxu0 0.0
      %891 = vmatpush2.msra.mxu0 0.0
      %892 = vmatprep.subr.mxu0 0.0
      %893 = vmatpush2.msra.mxu0 0.0
      %894 = vmatprep.subr.mxu0 0.0
      %895 = vmatpush2.msra.mxu0 0.0
      %896 = vmatprep.subr.mxu0 0.0
      %897 = vmatpush2.msra.mxu0 0.0
      %898 = vmatprep.subr.mxu0 0.0
      %899 = vmatpush2.msra.mxu0 0.0
      %900 = vmatprep.subr.mxu0 0.0
      %901 = vmatpush2.msra.mxu0 0.0
      %902 = vmatprep.subr.mxu0 0.0
      %903 = vmatpush2.msra.mxu0 0.0
      %904 = vmatprep.subr.mxu0 0.0
      %905 = vmatpush2.msra.mxu0 0.0
      %906 = vmatprep.subr.mxu0 0.0
      %907 = vmatpush2.msra.mxu0 0.0
      %908 = vmatprep.mubr.f32.mxu0 0.0
      %909 = vmatmul.mubr.f32.gmra.mxu0 %v818
      %v910 = vpop.f32.mrf.mxu0
      %v911 = vadd.f32 0.0, %v910
      %v912 = vpop.f32.mrf.mxu0
      %913 = vmatprep.mubr.f32.mxu0 0.0
      %914 = vmatmul.mubr.f32.gmra.mxu0 %v821
      %v915 = vpop.f32.mrf.mxu0
      %v916 = vadd.f32 0.0, %v915
      %v917 = vpop.f32.mrf.mxu0
      %918 = vmatprep.mubr.f32.mxu0 0.0
      %919 = vmatmul.mubr.f32.gmra.mxu0 %v824
      %v920 = vpop.f32.mrf.mxu0
      %v921 = vadd.f32 0.0, %v920
      %v922 = vpop.f32.mrf.mxu0
      %923 = vmatprep.mubr.f32.mxu0 0.0
      %924 = vmatmul.mubr.f32.gmra.mxu0 %v827
      %v925 = vpop.f32.mrf.mxu0
      %v926 = vadd.f32 0.0, %v925
      %v927 = vpop.f32.mrf.mxu0
      %928 = vmatprep.mubr.f32.mxu0 0.0
      %929 = vmatmul.mubr.f32.gmra.mxu0 %v830
      %v930 = vpop.f32.mrf.mxu0
      %v931 = vadd.f32 0.0, %v930
      %v932 = vpop.f32.mrf.mxu0
      %933 = vmatprep.mubr.f32.mxu0 0.0
      %934 = vmatmul.mubr.f32.gmra.mxu0 %v833
      %v935 = vpop.f32.mrf.mxu0
      %v936 = vadd.f32 0.0, %v935
      %v937 = vpop.f32.mrf.mxu0
      %938 = vmatprep.mubr.f32.mxu0 0.0
      %939 = vmatmul.mubr.f32.gmra.mxu0 %v836
      %v940 = vpop.f32.mrf.mxu0
      %v941 = vadd.f32 0.0, %v940
      %v942 = vpop.f32.mrf.mxu0
      %943 = vmatprep.mubr.f32.mxu0 0.0
      %944 = vmatmul.mubr.f32.gmra.mxu0 %v839
      %v945 = vpop.f32.mrf.mxu0
      %v946 = vadd.f32 0.0, %v945
      %v947 = vpop.f32.mrf.mxu0
      %948 = vdwg.mxu0
      %v949 = vadd.f32 %v799, %v911
      %v950 = vadd.f32 %v800, %v916
      %v951 = vadd.f32 %v801, %v921
      %v952 = vadd.f32 %v802, %v926
      %v953 = vadd.f32 %v803, %v931
      %v954 = vadd.f32 %v804, %v936
      %v955 = vadd.f32 %v805, %v941
      %v956 = vadd.f32 %v806, %v946
      %s957 = sadd.s32 %s202, 320
      %s958 = scalar_lea.vmem %s183, %s957
      %v959 = vld [vmem:[%s958] sm:$0xff]
      %v960 = vld [vmem:[%s958 + $0x10] sm:$0xff]
      %v961 = vld [vmem:[%s958 + $0x20] sm:$0xff]
      %v962 = vld [vmem:[%s958 + $0x30] sm:$0xff]
      %v963 = vld [vmem:[%s958 + $0x40] sm:$0xff]
      %v964 = vld [vmem:[%s958 + $0x50] sm:$0xff]
      %v965 = vld [vmem:[%s958 + $0x60] sm:$0xff]
      %v966 = vld [vmem:[%s958 + $0x70] sm:$0xff]
      %s967 = scalar_lea.vmem %s1, 20
      %v968 = vld [vmem:[%s967] sm:$0xf]
      %v970 = vsel %vm213, %v959, 0
      %v973 = vsel %vm213, %v960, 0
      %v976 = vsel %vm213, %v961, 0
      %v979 = vsel %vm213, %v962, 0
      %v982 = vsel %vm213, %v963, 0
      %v985 = vsel %vm213, %v964, 0
      %v988 = vsel %vm213, %v965, 0
      %v991 = vsel %vm213, %v966, 0
      %v994 = vsel %vm238, %v968, 0
      %996 = vmatprep.subr.mxu0 0.0
      %997 = vmatpush1.msra.mxu0 0.0
      %998 = vmatprep.subr.mxu0 0.0
      %999 = vmatpush1.msra.mxu0 0.0
      %1000 = vmatprep.subr.mxu0 0.0
      %1001 = vmatpush1.msra.mxu0 0.0
      %1002 = vmatprep.subr.mxu0 0.0
      %1003 = vmatpush1.msra.mxu0 0.0
      %1004 = vmatprep.subr.mxu0 0.0
      %1005 = vmatpush1.msra.mxu0 0.0
      %1006 = vmatprep.subr.mxu0 0.0
      %1007 = vmatpush1.msra.mxu0 0.0
      %1008 = vmatprep.subr.mxu0 0.0
      %1009 = vmatpush1.msra.mxu0 0.0
      %1010 = vmatprep.subr.mxu0 0.0
      %1011 = vmatpush1.msra.mxu0 0.0
      %1012 = vmatprep.subr.mxu0 0.0
      %1013 = vmatpush1.msra.mxu0 0.0
      %1014 = vmatprep.subr.mxu0 0.0
      %1015 = vmatpush1.msra.mxu0 0.0
      %1016 = vmatprep.subr.mxu0 0.0
      %1017 = vmatpush1.msra.mxu0 0.0
      %1018 = vmatprep.subr.mxu0 0.0
      %1019 = vmatpush1.msra.mxu0 0.0
      %1020 = vmatprep.subr.mxu0 0.0
      %1021 = vmatpush1.msra.mxu0 0.0
      %1022 = vmatprep.subr.mxu0 0.0
      %1023 = vmatpush1.msra.mxu0 0.0
      %1024 = vmatprep.subr.mxu0 0.0
      %1025 = vmatpush1.msra.mxu0 0.0
      %1026 = vmatprep.subr.mxu0 0.0
      %1027 = vmatpush1.msra.mxu0 %v994
      %1028 = vmatprep.subr.mxu0 0.0
      %1029 = vmatpush2.msra.mxu0 0.0
      %1030 = vmatprep.subr.mxu0 0.0
      %1031 = vmatpush2.msra.mxu0 0.0
      %1032 = vmatprep.subr.mxu0 0.0
      %1033 = vmatpush2.msra.mxu0 0.0
      %1034 = vmatprep.subr.mxu0 0.0
      %1035 = vmatpush2.msra.mxu0 0.0
      %1036 = vmatprep.subr.mxu0 0.0
      %1037 = vmatpush2.msra.mxu0 0.0
      %1038 = vmatprep.subr.mxu0 0.0
      %1039 = vmatpush2.msra.mxu0 0.0
      %1040 = vmatprep.subr.mxu0 0.0
      %1041 = vmatpush2.msra.mxu0 0.0
      %1042 = vmatprep.subr.mxu0 0.0
      %1043 = vmatpush2.msra.mxu0 0.0
      %1044 = vmatprep.subr.mxu0 0.0
      %1045 = vmatpush2.msra.mxu0 0.0
      %1046 = vmatprep.subr.mxu0 0.0
      %1047 = vmatpush2.msra.mxu0 0.0
      %1048 = vmatprep.subr.mxu0 0.0
      %1049 = vmatpush2.msra.mxu0 0.0
      %1050 = vmatprep.subr.mxu0 0.0
      %1051 = vmatpush2.msra.mxu0 0.0
      %1052 = vmatprep.subr.mxu0 0.0
      %1053 = vmatpush2.msra.mxu0 0.0
      %1054 = vmatprep.subr.mxu0 0.0
      %1055 = vmatpush2.msra.mxu0 0.0
      %1056 = vmatprep.subr.mxu0 0.0
      %1057 = vmatpush2.msra.mxu0 0.0
      %1058 = vmatprep.subr.mxu0 0.0
      %1059 = vmatpush2.msra.mxu0 0.0
      %1060 = vmatprep.mubr.f32.mxu0 0.0
      %1061 = vmatmul.mubr.f32.gmra.mxu0 %v970
      %v1062 = vpop.f32.mrf.mxu0
      %v1063 = vadd.f32 0.0, %v1062
      %v1064 = vpop.f32.mrf.mxu0
      %1065 = vmatprep.mubr.f32.mxu0 0.0
      %1066 = vmatmul.mubr.f32.gmra.mxu0 %v973
      %v1067 = vpop.f32.mrf.mxu0
      %v1068 = vadd.f32 0.0, %v1067
      %v1069 = vpop.f32.mrf.mxu0
      %1070 = vmatprep.mubr.f32.mxu0 0.0
      %1071 = vmatmul.mubr.f32.gmra.mxu0 %v976
      %v1072 = vpop.f32.mrf.mxu0
      %v1073 = vadd.f32 0.0, %v1072
      %v1074 = vpop.f32.mrf.mxu0
      %1075 = vmatprep.mubr.f32.mxu0 0.0
      %1076 = vmatmul.mubr.f32.gmra.mxu0 %v979
      %v1077 = vpop.f32.mrf.mxu0
      %v1078 = vadd.f32 0.0, %v1077
      %v1079 = vpop.f32.mrf.mxu0
      %1080 = vmatprep.mubr.f32.mxu0 0.0
      %1081 = vmatmul.mubr.f32.gmra.mxu0 %v982
      %v1082 = vpop.f32.mrf.mxu0
      %v1083 = vadd.f32 0.0, %v1082
      %v1084 = vpop.f32.mrf.mxu0
      %1085 = vmatprep.mubr.f32.mxu0 0.0
      %1086 = vmatmul.mubr.f32.gmra.mxu0 %v985
      %v1087 = vpop.f32.mrf.mxu0
      %v1088 = vadd.f32 0.0, %v1087
      %v1089 = vpop.f32.mrf.mxu0
      %1090 = vmatprep.mubr.f32.mxu0 0.0
      %1091 = vmatmul.mubr.f32.gmra.mxu0 %v988
      %v1092 = vpop.f32.mrf.mxu0
      %v1093 = vadd.f32 0.0, %v1092
      %v1094 = vpop.f32.mrf.mxu0
      %1095 = vmatprep.mubr.f32.mxu0 0.0
      %1096 = vmatmul.mubr.f32.gmra.mxu0 %v991
      %v1097 = vpop.f32.mrf.mxu0
      %v1098 = vadd.f32 0.0, %v1097
      %v1099 = vpop.f32.mrf.mxu0
      %1100 = vdwg.mxu0
      %v1101 = vadd.f32 %v949, %v1063
      %v1102 = vadd.f32 %v950, %v1068
      %v1103 = vadd.f32 %v951, %v1073
      %v1104 = vadd.f32 %v952, %v1078
      %v1105 = vadd.f32 %v953, %v1083
      %v1106 = vadd.f32 %v954, %v1088
      %v1107 = vadd.f32 %v955, %v1093
      %v1108 = vadd.f32 %v956, %v1098
      %s1109 = sadd.s32 %s202, 480
      %s1110 = scalar_lea.vmem %s183, %s1109
      %v1111 = vld [vmem:[%s1110] sm:$0xff]
      %v1112 = vld [vmem:[%s1110 + $0x10] sm:$0xff]
      %v1113 = vld [vmem:[%s1110 + $0x20] sm:$0xff]
      %v1114 = vld [vmem:[%s1110 + $0x30] sm:$0xff]
      %v1115 = vld [vmem:[%s1110 + $0x40] sm:$0xff]
      %v1116 = vld [vmem:[%s1110 + $0x50] sm:$0xff]
      %v1117 = vld [vmem:[%s1110 + $0x60] sm:$0xff]
      %v1118 = vld [vmem:[%s1110 + $0x70] sm:$0xff]
      %s1119 = scalar_lea.vmem %s1, 24
      %v1120 = vld [vmem:[%s1119] sm:$0xf]
      %v1122 = vsel %vm213, %v1111, 0
      %v1125 = vsel %vm213, %v1112, 0
      %v1128 = vsel %vm213, %v1113, 0
      %v1131 = vsel %vm213, %v1114, 0
      %v1134 = vsel %vm213, %v1115, 0
      %v1137 = vsel %vm213, %v1116, 0
      %v1140 = vsel %vm213, %v1117, 0
      %v1143 = vsel %vm213, %v1118, 0
      %v1146 = vsel %vm238, %v1120, 0
      %1148 = vmatprep.subr.mxu0 0.0
      %1149 = vmatpush1.msra.mxu0 0.0
      %1150 = vmatprep.subr.mxu0 0.0
      %1151 = vmatpush1.msra.mxu0 0.0
      %1152 = vmatprep.subr.mxu0 0.0
      %1153 = vmatpush1.msra.mxu0 0.0
      %1154 = vmatprep.subr.mxu0 0.0
      %1155 = vmatpush1.msra.mxu0 0.0
      %1156 = vmatprep.subr.mxu0 0.0
      %1157 = vmatpush1.msra.mxu0 0.0
      %1158 = vmatprep.subr.mxu0 0.0
      %1159 = vmatpush1.msra.mxu0 0.0
      %1160 = vmatprep.subr.mxu0 0.0
      %1161 = vmatpush1.msra.mxu0 0.0
      %1162 = vmatprep.subr.mxu0 0.0
      %1163 = vmatpush1.msra.mxu0 0.0
      %1164 = vmatprep.subr.mxu0 0.0
      %1165 = vmatpush1.msra.mxu0 0.0
      %1166 = vmatprep.subr.mxu0 0.0
      %1167 = vmatpush1.msra.mxu0 0.0
      %1168 = vmatprep.subr.mxu0 0.0
      %1169 = vmatpush1.msra.mxu0 0.0
      %1170 = vmatprep.subr.mxu0 0.0
      %1171 = vmatpush1.msra.mxu0 0.0
      %1172 = vmatprep.subr.mxu0 0.0
      %1173 = vmatpush1.msra.mxu0 0.0
      %1174 = vmatprep.subr.mxu0 0.0
      %1175 = vmatpush1.msra.mxu0 0.0
      %1176 = vmatprep.subr.mxu0 0.0
      %1177 = vmatpush1.msra.mxu0 0.0
      %1178 = vmatprep.subr.mxu0 0.0
      %1179 = vmatpush1.msra.mxu0 %v1146
      %1180 = vmatprep.subr.mxu0 0.0
      %1181 = vmatpush2.msra.mxu0 0.0
      %1182 = vmatprep.subr.mxu0 0.0
      %1183 = vmatpush2.msra.mxu0 0.0
      %1184 = vmatprep.subr.mxu0 0.0
      %1185 = vmatpush2.msra.mxu0 0.0
      %1186 = vmatprep.subr.mxu0 0.0
      %1187 = vmatpush2.msra.mxu0 0.0
      %1188 = vmatprep.subr.mxu0 0.0
      %1189 = vmatpush2.msra.mxu0 0.0
      %1190 = vmatprep.subr.mxu0 0.0
      %1191 = vmatpush2.msra.mxu0 0.0
      %1192 = vmatprep.subr.mxu0 0.0
      %1193 = vmatpush2.msra.mxu0 0.0
      %1194 = vmatprep.subr.mxu0 0.0
      %1195 = vmatpush2.msra.mxu0 0.0
      %1196 = vmatprep.subr.mxu0 0.0
      %1197 = vmatpush2.msra.mxu0 0.0
      %1198 = vmatprep.subr.mxu0 0.0
      %1199 = vmatpush2.msra.mxu0 0.0
      %1200 = vmatprep.subr.mxu0 0.0
      %1201 = vmatpush2.msra.mxu0 0.0
      %1202 = vmatprep.subr.mxu0 0.0
      %1203 = vmatpush2.msra.mxu0 0.0
      %1204 = vmatprep.subr.mxu0 0.0
      %1205 = vmatpush2.msra.mxu0 0.0
      %1206 = vmatprep.subr.mxu0 0.0
      %1207 = vmatpush2.msra.mxu0 0.0
      %1208 = vmatprep.subr.mxu0 0.0
      %1209 = vmatpush2.msra.mxu0 0.0
      %1210 = vmatprep.subr.mxu0 0.0
      %1211 = vmatpush2.msra.mxu0 0.0
      %1212 = vmatprep.mubr.f32.mxu0 0.0
      %1213 = vmatmul.mubr.f32.gmra.mxu0 %v1122
      %v1214 = vpop.f32.mrf.mxu0
      %v1215 = vadd.f32 0.0, %v1214
      %v1216 = vpop.f32.mrf.mxu0
      %1217 = vmatprep.mubr.f32.mxu0 0.0
      %1218 = vmatmul.mubr.f32.gmra.mxu0 %v1125
      %v1219 = vpop.f32.mrf.mxu0
      %v1220 = vadd.f32 0.0, %v1219
      %v1221 = vpop.f32.mrf.mxu0
      %1222 = vmatprep.mubr.f32.mxu0 0.0
      %1223 = vmatmul.mubr.f32.gmra.mxu0 %v1128
      %v1224 = vpop.f32.mrf.mxu0
      %v1225 = vadd.f32 0.0, %v1224
      %v1226 = vpop.f32.mrf.mxu0
      %1227 = vmatprep.mubr.f32.mxu0 0.0
      %1228 = vmatmul.mubr.f32.gmra.mxu0 %v1131
      %v1229 = vpop.f32.mrf.mxu0
      %v1230 = vadd.f32 0.0, %v1229
      %v1231 = vpop.f32.mrf.mxu0
      %1232 = vmatprep.mubr.f32.mxu0 0.0
      %1233 = vmatmul.mubr.f32.gmra.mxu0 %v1134
      %v1234 = vpop.f32.mrf.mxu0
      %v1235 = vadd.f32 0.0, %v1234
      %v1236 = vpop.f32.mrf.mxu0
      %1237 = vmatprep.mubr.f32.mxu0 0.0
      %1238 = vmatmul.mubr.f32.gmra.mxu0 %v1137
      %v1239 = vpop.f32.mrf.mxu0
      %v1240 = vadd.f32 0.0, %v1239
      %v1241 = vpop.f32.mrf.mxu0
      %1242 = vmatprep.mubr.f32.mxu0 0.0
      %1243 = vmatmul.mubr.f32.gmra.mxu0 %v1140
      %v1244 = vpop.f32.mrf.mxu0
      %v1245 = vadd.f32 0.0, %v1244
      %v1246 = vpop.f32.mrf.mxu0
      %1247 = vmatprep.mubr.f32.mxu0 0.0
      %1248 = vmatmul.mubr.f32.gmra.mxu0 %v1143
      %v1249 = vpop.f32.mrf.mxu0
      %v1250 = vadd.f32 0.0, %v1249
      %v1251 = vpop.f32.mrf.mxu0
      %1252 = vdwg.mxu0
      %v1253 = vadd.f32 %v1101, %v1215
      %v1254 = vadd.f32 %v1102, %v1220
      %v1255 = vadd.f32 %v1103, %v1225
      %v1256 = vadd.f32 %v1104, %v1230
      %v1257 = vadd.f32 %v1105, %v1235
      %v1258 = vadd.f32 %v1106, %v1240
      %v1259 = vadd.f32 %v1107, %v1245
      %v1260 = vadd.f32 %v1108, %v1250
      %v1261 = vld [vmem:[%s958 + $0x1] sm:$0xff]
      %v1262 = vld [vmem:[%s958 + $0x11] sm:$0xff]
      %v1263 = vld [vmem:[%s958 + $0x21] sm:$0xff]
      %v1264 = vld [vmem:[%s958 + $0x31] sm:$0xff]
      %v1265 = vld [vmem:[%s958 + $0x41] sm:$0xff]
      %v1266 = vld [vmem:[%s958 + $0x51] sm:$0xff]
      %v1267 = vld [vmem:[%s958 + $0x61] sm:$0xff]
      %v1268 = vld [vmem:[%s958 + $0x71] sm:$0xff]
      %s1269 = scalar_lea.vmem %s1, 28
      %v1270 = vld [vmem:[%s1269] sm:$0xf]
      %v1272 = vsel %vm213, %v1261, 0
      %v1275 = vsel %vm213, %v1262, 0
      %v1278 = vsel %vm213, %v1263, 0
      %v1281 = vsel %vm213, %v1264, 0
      %v1284 = vsel %vm213, %v1265, 0
      %v1287 = vsel %vm213, %v1266, 0
      %v1290 = vsel %vm213, %v1267, 0
      %v1293 = vsel %vm213, %v1268, 0
      %v1296 = vsel %vm238, %v1270, 0
      %1298 = vmatprep.subr.mxu0 0.0
      %1299 = vmatpush1.msra.mxu0 0.0
      %1300 = vmatprep.subr.mxu0 0.0
      %1301 = vmatpush1.msra.mxu0 0.0
      %1302 = vmatprep.subr.mxu0 0.0
      %1303 = vmatpush1.msra.mxu0 0.0
      %1304 = vmatprep.subr.mxu0 0.0
      %1305 = vmatpush1.msra.mxu0 0.0
      %1306 = vmatprep.subr.mxu0 0.0
      %1307 = vmatpush1.msra.mxu0 0.0
      %1308 = vmatprep.subr.mxu0 0.0
      %1309 = vmatpush1.msra.mxu0 0.0
      %1310 = vmatprep.subr.mxu0 0.0
      %1311 = vmatpush1.msra.mxu0 0.0
      %1312 = vmatprep.subr.mxu0 0.0
      %1313 = vmatpush1.msra.mxu0 0.0
      %1314 = vmatprep.subr.mxu0 0.0
      %1315 = vmatpush1.msra.mxu0 0.0
      %1316 = vmatprep.subr.mxu0 0.0
      %1317 = vmatpush1.msra.mxu0 0.0
      %1318 = vmatprep.subr.mxu0 0.0
      %1319 = vmatpush1.msra.mxu0 0.0
      %1320 = vmatprep.subr.mxu0 0.0
      %1321 = vmatpush1.msra.mxu0 0.0
      %1322 = vmatprep.subr.mxu0 0.0
      %1323 = vmatpush1.msra.mxu0 0.0
      %1324 = vmatprep.subr.mxu0 0.0
      %1325 = vmatpush1.msra.mxu0 0.0
      %1326 = vmatprep.subr.mxu0 0.0
      %1327 = vmatpush1.msra.mxu0 0.0
      %1328 = vmatprep.subr.mxu0 0.0
      %1329 = vmatpush1.msra.mxu0 %v1296
      %1330 = vmatprep.subr.mxu0 0.0
      %1331 = vmatpush2.msra.mxu0 0.0
      %1332 = vmatprep.subr.mxu0 0.0
      %1333 = vmatpush2.msra.mxu0 0.0
      %1334 = vmatprep.subr.mxu0 0.0
      %1335 = vmatpush2.msra.mxu0 0.0
      %1336 = vmatprep.subr.mxu0 0.0
      %1337 = vmatpush2.msra.mxu0 0.0
      %1338 = vmatprep.subr.mxu0 0.0
      %1339 = vmatpush2.msra.mxu0 0.0
      %1340 = vmatprep.subr.mxu0 0.0
      %1341 = vmatpush2.msra.mxu0 0.0
      %1342 = vmatprep.subr.mxu0 0.0
      %1343 = vmatpush2.msra.mxu0 0.0
      %1344 = vmatprep.subr.mxu0 0.0
      %1345 = vmatpush2.msra.mxu0 0.0
      %1346 = vmatprep.subr.mxu0 0.0
      %1347 = vmatpush2.msra.mxu0 0.0
      %1348 = vmatprep.subr.mxu0 0.0
      %1349 = vmatpush2.msra.mxu0 0.0
      %1350 = vmatprep.subr.mxu0 0.0
      %1351 = vmatpush2.msra.mxu0 0.0
      %1352 = vmatprep.subr.mxu0 0.0
      %1353 = vmatpush2.msra.mxu0 0.0
      %1354 = vmatprep.subr.mxu0 0.0
      %1355 = vmatpush2.msra.mxu0 0.0
      %1356 = vmatprep.subr.mxu0 0.0
      %1357 = vmatpush2.msra.mxu0 0.0
      %1358 = vmatprep.subr.mxu0 0.0
      %1359 = vmatpush2.msra.mxu0 0.0
      %1360 = vmatprep.subr.mxu0 0.0
      %1361 = vmatpush2.msra.mxu0 0.0
      %1362 = vmatprep.mubr.f32.mxu0 0.0
      %1363 = vmatmul.mubr.f32.gmra.mxu0 %v1272
      %v1364 = vpop.f32.mrf.mxu0
      %v1365 = vadd.f32 0.0, %v1364
      %v1366 = vpop.f32.mrf.mxu0
      %1367 = vmatprep.mubr.f32.mxu0 0.0
      %1368 = vmatmul.mubr.f32.gmra.mxu0 %v1275
      %v1369 = vpop.f32.mrf.mxu0
      %v1370 = vadd.f32 0.0, %v1369
      %v1371 = vpop.f32.mrf.mxu0
      %1372 = vmatprep.mubr.f32.mxu0 0.0
      %1373 = vmatmul.mubr.f32.gmra.mxu0 %v1278
      %v1374 = vpop.f32.mrf.mxu0
      %v1375 = vadd.f32 0.0, %v1374
      %v1376 = vpop.f32.mrf.mxu0
      %1377 = vmatprep.mubr.f32.mxu0 0.0
      %1378 = vmatmul.mubr.f32.gmra.mxu0 %v1281
      %v1379 = vpop.f32.mrf.mxu0
      %v1380 = vadd.f32 0.0, %v1379
      %v1381 = vpop.f32.mrf.mxu0
      %1382 = vmatprep.mubr.f32.mxu0 0.0
      %1383 = vmatmul.mubr.f32.gmra.mxu0 %v1284
      %v1384 = vpop.f32.mrf.mxu0
      %v1385 = vadd.f32 0.0, %v1384
      %v1386 = vpop.f32.mrf.mxu0
      %1387 = vmatprep.mubr.f32.mxu0 0.0
      %1388 = vmatmul.mubr.f32.gmra.mxu0 %v1287
      %v1389 = vpop.f32.mrf.mxu0
      %v1390 = vadd.f32 0.0, %v1389
      %v1391 = vpop.f32.mrf.mxu0
      %1392 = vmatprep.mubr.f32.mxu0 0.0
      %1393 = vmatmul.mubr.f32.gmra.mxu0 %v1290
      %v1394 = vpop.f32.mrf.mxu0
      %v1395 = vadd.f32 0.0, %v1394
      %v1396 = vpop.f32.mrf.mxu0
      %1397 = vmatprep.mubr.f32.mxu0 0.0
      %1398 = vmatmul.mubr.f32.gmra.mxu0 %v1293
      %v1399 = vpop.f32.mrf.mxu0
      %v1400 = vadd.f32 0.0, %v1399
      %v1401 = vpop.f32.mrf.mxu0
      %1402 = vdwg.mxu0
      %v1403 = vadd.f32 %v1253, %v1365
      %v1404 = vadd.f32 %v1254, %v1370
      %v1405 = vadd.f32 %v1255, %v1375
      %v1406 = vadd.f32 %v1256, %v1380
      %v1407 = vadd.f32 %v1257, %v1385
      %v1408 = vadd.f32 %v1258, %v1390
      %v1409 = vadd.f32 %v1259, %v1395
      %v1410 = vadd.f32 %v1260, %v1400
      %v1411 = vld [vmem:[%s1110 + $0x1] sm:$0xff]
      %v1412 = vld [vmem:[%s1110 + $0x11] sm:$0xff]
      %v1413 = vld [vmem:[%s1110 + $0x21] sm:$0xff]
      %v1414 = vld [vmem:[%s1110 + $0x31] sm:$0xff]
      %v1415 = vld [vmem:[%s1110 + $0x41] sm:$0xff]
      %v1416 = vld [vmem:[%s1110 + $0x51] sm:$0xff]
      %v1417 = vld [vmem:[%s1110 + $0x61] sm:$0xff]
      %v1418 = vld [vmem:[%s1110 + $0x71] sm:$0xff]
      %s1419 = scalar_lea.vmem %s1, 32
      %v1420 = vld [vmem:[%s1419] sm:$0xf]
      %v1422 = vsel %vm213, %v1411, 0
      %v1425 = vsel %vm213, %v1412, 0
      %v1428 = vsel %vm213, %v1413, 0
      %v1431 = vsel %vm213, %v1414, 0
      %v1434 = vsel %vm213, %v1415, 0
      %v1437 = vsel %vm213, %v1416, 0
      %v1440 = vsel %vm213, %v1417, 0
      %v1443 = vsel %vm213, %v1418, 0
      %v1446 = vsel %vm238, %v1420, 0
      %1448 = vmatprep.subr.mxu0 0.0
      %1449 = vmatpush1.msra.mxu0 0.0
      %1450 = vmatprep.subr.mxu0 0.0
      %1451 = vmatpush1.msra.mxu0 0.0
      %1452 = vmatprep.subr.mxu0 0.0
      %1453 = vmatpush1.msra.mxu0 0.0
      %1454 = vmatprep.subr.mxu0 0.0
      %1455 = vmatpush1.msra.mxu0 0.0
      %1456 = vmatprep.subr.mxu0 0.0
      %1457 = vmatpush1.msra.mxu0 0.0
      %1458 = vmatprep.subr.mxu0 0.0
      %1459 = vmatpush1.msra.mxu0 0.0
      %1460 = vmatprep.subr.mxu0 0.0
      %1461 = vmatpush1.msra.mxu0 0.0
      %1462 = vmatprep.subr.mxu0 0.0
      %1463 = vmatpush1.msra.mxu0 0.0
      %1464 = vmatprep.subr.mxu0 0.0
      %1465 = vmatpush1.msra.mxu0 0.0
      %1466 = vmatprep.subr.mxu0 0.0
      %1467 = vmatpush1.msra.mxu0 0.0
      %1468 = vmatprep.subr.mxu0 0.0
      %1469 = vmatpush1.msra.mxu0 0.0
      %1470 = vmatprep.subr.mxu0 0.0
      %1471 = vmatpush1.msra.mxu0 0.0
      %1472 = vmatprep.subr.mxu0 0.0
      %1473 = vmatpush1.msra.mxu0 0.0
      %1474 = vmatprep.subr.mxu0 0.0
      %1475 = vmatpush1.msra.mxu0 0.0
      %1476 = vmatprep.subr.mxu0 0.0
      %1477 = vmatpush1.msra.mxu0 0.0
      %1478 = vmatprep.subr.mxu0 0.0
      %1479 = vmatpush1.msra.mxu0 %v1446
      %1480 = vmatprep.subr.mxu0 0.0
      %1481 = vmatpush2.msra.mxu0 0.0
      %1482 = vmatprep.subr.mxu0 0.0
      %1483 = vmatpush2.msra.mxu0 0.0
      %1484 = vmatprep.subr.mxu0 0.0
      %1485 = vmatpush2.msra.mxu0 0.0
      %1486 = vmatprep.subr.mxu0 0.0
      %1487 = vmatpush2.msra.mxu0 0.0
      %1488 = vmatprep.subr.mxu0 0.0
      %1489 = vmatpush2.msra.mxu0 0.0
      %1490 = vmatprep.subr.mxu0 0.0
      %1491 = vmatpush2.msra.mxu0 0.0
      %1492 = vmatprep.subr.mxu0 0.0
      %1493 = vmatpush2.msra.mxu0 0.0
      %1494 = vmatprep.subr.mxu0 0.0
      %1495 = vmatpush2.msra.mxu0 0.0
      %1496 = vmatprep.subr.mxu0 0.0
      %1497 = vmatpush2.msra.mxu0 0.0
      %1498 = vmatprep.subr.mxu0 0.0
      %1499 = vmatpush2.msra.mxu0 0.0
      %1500 = vmatprep.subr.mxu0 0.0
      %1501 = vmatpush2.msra.mxu0 0.0
      %1502 = vmatprep.subr.mxu0 0.0
      %1503 = vmatpush2.msra.mxu0 0.0
      %1504 = vmatprep.subr.mxu0 0.0
      %1505 = vmatpush2.msra.mxu0 0.0
      %1506 = vmatprep.subr.mxu0 0.0
      %1507 = vmatpush2.msra.mxu0 0.0
      %1508 = vmatprep.subr.mxu0 0.0
      %1509 = vmatpush2.msra.mxu0 0.0
      %1510 = vmatprep.subr.mxu0 0.0
      %1511 = vmatpush2.msra.mxu0 0.0
      %1512 = vmatprep.mubr.f32.mxu0 0.0
      %1513 = vmatmul.mubr.f32.gmra.mxu0 %v1422
      %v1514 = vpop.f32.mrf.mxu0
      %v1515 = vadd.f32 0.0, %v1514
      %v1516 = vpop.f32.mrf.mxu0
      %1517 = vmatprep.mubr.f32.mxu0 0.0
      %1518 = vmatmul.mubr.f32.gmra.mxu0 %v1425
      %v1519 = vpop.f32.mrf.mxu0
      %v1520 = vadd.f32 0.0, %v1519
      %v1521 = vpop.f32.mrf.mxu0
      %1522 = vmatprep.mubr.f32.mxu0 0.0
      %1523 = vmatmul.mubr.f32.gmra.mxu0 %v1428
      %v1524 = vpop.f32.mrf.mxu0
      %v1525 = vadd.f32 0.0, %v1524
      %v1526 = vpop.f32.mrf.mxu0
      %1527 = vmatprep.mubr.f32.mxu0 0.0
      %1528 = vmatmul.mubr.f32.gmra.mxu0 %v1431
      %v1529 = vpop.f32.mrf.mxu0
      %v1530 = vadd.f32 0.0, %v1529
      %v1531 = vpop.f32.mrf.mxu0
      %1532 = vmatprep.mubr.f32.mxu0 0.0
      %1533 = vmatmul.mubr.f32.gmra.mxu0 %v1434
      %v1534 = vpop.f32.mrf.mxu0
      %v1535 = vadd.f32 0.0, %v1534
      %v1536 = vpop.f32.mrf.mxu0
      %1537 = vmatprep.mubr.f32.mxu0 0.0
      %1538 = vmatmul.mubr.f32.gmra.mxu0 %v1437
      %v1539 = vpop.f32.mrf.mxu0
      %v1540 = vadd.f32 0.0, %v1539
      %v1541 = vpop.f32.mrf.mxu0
      %1542 = vmatprep.mubr.f32.mxu0 0.0
      %1543 = vmatmul.mubr.f32.gmra.mxu0 %v1440
      %v1544 = vpop.f32.mrf.mxu0
      %v1545 = vadd.f32 0.0, %v1544
      %v1546 = vpop.f32.mrf.mxu0
      %1547 = vmatprep.mubr.f32.mxu0 0.0
      %1548 = vmatmul.mubr.f32.gmra.mxu0 %v1443
      %v1549 = vpop.f32.mrf.mxu0
      %v1550 = vadd.f32 0.0, %v1549
      %v1551 = vpop.f32.mrf.mxu0
      %1552 = vdwg.mxu0
      %v1553 = vadd.f32 %v1403, %v1515
      %v1554 = vadd.f32 %v1404, %v1520
      %v1555 = vadd.f32 %v1405, %v1525
      %v1556 = vadd.f32 %v1406, %v1530
      %v1557 = vadd.f32 %v1407, %v1535
      %v1558 = vadd.f32 %v1408, %v1540
      %v1559 = vadd.f32 %v1409, %v1545
      %v1560 = vadd.f32 %v1410, %v1550
      %v1561 = vld [vmem:[%s958 + $0x2] sm:$0xff]
      %v1562 = vld [vmem:[%s958 + $0x12] sm:$0xff]
      %v1563 = vld [vmem:[%s958 + $0x22] sm:$0xff]
      %v1564 = vld [vmem:[%s958 + $0x32] sm:$0xff]
      %v1565 = vld [vmem:[%s958 + $0x42] sm:$0xff]
      %v1566 = vld [vmem:[%s958 + $0x52] sm:$0xff]
      %v1567 = vld [vmem:[%s958 + $0x62] sm:$0xff]
      %v1568 = vld [vmem:[%s958 + $0x72] sm:$0xff]
      %s1569 = scalar_lea.vmem %s1, 36
      %v1570 = vld [vmem:[%s1569] sm:$0xf]
      %v1572 = vsel %vm213, %v1561, 0
      %v1575 = vsel %vm213, %v1562, 0
      %v1578 = vsel %vm213, %v1563, 0
      %v1581 = vsel %vm213, %v1564, 0
      %v1584 = vsel %vm213, %v1565, 0
      %v1587 = vsel %vm213, %v1566, 0
      %v1590 = vsel %vm213, %v1567, 0
      %v1593 = vsel %vm213, %v1568, 0
      %v1596 = vsel %vm238, %v1570, 0
      %1598 = vmatprep.subr.mxu0 0.0
      %1599 = vmatpush1.msra.mxu0 0.0
      %1600 = vmatprep.subr.mxu0 0.0
      %1601 = vmatpush1.msra.mxu0 0.0
      %1602 = vmatprep.subr.mxu0 0.0
      %1603 = vmatpush1.msra.mxu0 0.0
      %1604 = vmatprep.subr.mxu0 0.0
      %1605 = vmatpush1.msra.mxu0 0.0
      %1606 = vmatprep.subr.mxu0 0.0
      %1607 = vmatpush1.msra.mxu0 0.0
      %1608 = vmatprep.subr.mxu0 0.0
      %1609 = vmatpush1.msra.mxu0 0.0
      %1610 = vmatprep.subr.mxu0 0.0
      %1611 = vmatpush1.msra.mxu0 0.0
      %1612 = vmatprep.subr.mxu0 0.0
      %1613 = vmatpush1.msra.mxu0 0.0
      %1614 = vmatprep.subr.mxu0 0.0
      %1615 = vmatpush1.msra.mxu0 0.0
      %1616 = vmatprep.subr.mxu0 0.0
      %1617 = vmatpush1.msra.mxu0 0.0
      %1618 = vmatprep.subr.mxu0 0.0
      %1619 = vmatpush1.msra.mxu0 0.0
      %1620 = vmatprep.subr.mxu0 0.0
      %1621 = vmatpush1.msra.mxu0 0.0
      %1622 = vmatprep.subr.mxu0 0.0
      %1623 = vmatpush1.msra.mxu0 0.0
      %1624 = vmatprep.subr.mxu0 0.0
      %1625 = vmatpush1.msra.mxu0 0.0
      %1626 = vmatprep.subr.mxu0 0.0
      %1627 = vmatpush1.msra.mxu0 0.0
      %1628 = vmatprep.subr.mxu0 0.0
      %1629 = vmatpush1.msra.mxu0 %v1596
      %1630 = vmatprep.subr.mxu0 0.0
      %1631 = vmatpush2.msra.mxu0 0.0
      %1632 = vmatprep.subr.mxu0 0.0
      %1633 = vmatpush2.msra.mxu0 0.0
      %1634 = vmatprep.subr.mxu0 0.0
      %1635 = vmatpush2.msra.mxu0 0.0
      %1636 = vmatprep.subr.mxu0 0.0
      %1637 = vmatpush2.msra.mxu0 0.0
      %1638 = vmatprep.subr.mxu0 0.0
      %1639 = vmatpush2.msra.mxu0 0.0
      %1640 = vmatprep.subr.mxu0 0.0
      %1641 = vmatpush2.msra.mxu0 0.0
      %1642 = vmatprep.subr.mxu0 0.0
      %1643 = vmatpush2.msra.mxu0 0.0
      %1644 = vmatprep.subr.mxu0 0.0
      %1645 = vmatpush2.msra.mxu0 0.0
      %1646 = vmatprep.subr.mxu0 0.0
      %1647 = vmatpush2.msra.mxu0 0.0
      %1648 = vmatprep.subr.mxu0 0.0
      %1649 = vmatpush2.msra.mxu0 0.0
      %1650 = vmatprep.subr.mxu0 0.0
      %1651 = vmatpush2.msra.mxu0 0.0
      %1652 = vmatprep.subr.mxu0 0.0
      %1653 = vmatpush2.msra.mxu0 0.0
      %1654 = vmatprep.subr.mxu0 0.0
      %1655 = vmatpush2.msra.mxu0 0.0
      %1656 = vmatprep.subr.mxu0 0.0
      %1657 = vmatpush2.msra.mxu0 0.0
      %1658 = vmatprep.subr.mxu0 0.0
      %1659 = vmatpush2.msra.mxu0 0.0
      %1660 = vmatprep.subr.mxu0 0.0
      %1661 = vmatpush2.msra.mxu0 0.0
      %1662 = vmatprep.mubr.f32.mxu0 0.0
      %1663 = vmatmul.mubr.f32.gmra.mxu0 %v1572
      %v1664 = vpop.f32.mrf.mxu0
      %v1665 = vadd.f32 0.0, %v1664
      %v1666 = vpop.f32.mrf.mxu0
      %1667 = vmatprep.mubr.f32.mxu0 0.0
      %1668 = vmatmul.mubr.f32.gmra.mxu0 %v1575
      %v1669 = vpop.f32.mrf.mxu0
      %v1670 = vadd.f32 0.0, %v1669
      %v1671 = vpop.f32.mrf.mxu0
      %1672 = vmatprep.mubr.f32.mxu0 0.0
      %1673 = vmatmul.mubr.f32.gmra.mxu0 %v1578
      %v1674 = vpop.f32.mrf.mxu0
      %v1675 = vadd.f32 0.0, %v1674
      %v1676 = vpop.f32.mrf.mxu0
      %1677 = vmatprep.mubr.f32.mxu0 0.0
      %1678 = vmatmul.mubr.f32.gmra.mxu0 %v1581
      %v1679 = vpop.f32.mrf.mxu0
      %v1680 = vadd.f32 0.0, %v1679
      %v1681 = vpop.f32.mrf.mxu0
      %1682 = vmatprep.mubr.f32.mxu0 0.0
      %1683 = vmatmul.mubr.f32.gmra.mxu0 %v1584
      %v1684 = vpop.f32.mrf.mxu0
      %v1685 = vadd.f32 0.0, %v1684
      %v1686 = vpop.f32.mrf.mxu0
      %1687 = vmatprep.mubr.f32.mxu0 0.0
      %1688 = vmatmul.mubr.f32.gmra.mxu0 %v1587
      %v1689 = vpop.f32.mrf.mxu0
      %v1690 = vadd.f32 0.0, %v1689
      %v1691 = vpop.f32.mrf.mxu0
      %1692 = vmatprep.mubr.f32.mxu0 0.0
      %1693 = vmatmul.mubr.f32.gmra.mxu0 %v1590
      %v1694 = vpop.f32.mrf.mxu0
      %v1695 = vadd.f32 0.0, %v1694
      %v1696 = vpop.f32.mrf.mxu0
      %1697 = vmatprep.mubr.f32.mxu0 0.0
      %1698 = vmatmul.mubr.f32.gmra.mxu0 %v1593
      %v1699 = vpop.f32.mrf.mxu0
      %v1700 = vadd.f32 0.0, %v1699
      %v1701 = vpop.f32.mrf.mxu0
      %1702 = vdwg.mxu0
      %v1703 = vadd.f32 %v1553, %v1665
      %v1704 = vadd.f32 %v1554, %v1670
      %v1705 = vadd.f32 %v1555, %v1675
      %v1706 = vadd.f32 %v1556, %v1680
      %v1707 = vadd.f32 %v1557, %v1685
      %v1708 = vadd.f32 %v1558, %v1690
      %v1709 = vadd.f32 %v1559, %v1695
      %v1710 = vadd.f32 %v1560, %v1700
      %s1711 = sadd.s32 %s194, 1
      %s1712 = smul.u32 %s1711, 16
      %s1713 = scalar_lea.vmem %s183, %s1712
      %v1714 = vld [vmem:[%s1713] sm:$0xff]
      %v1715 = vld [vmem:[%s1713 + $0x10] sm:$0xff]
      %v1716 = vld [vmem:[%s1713 + $0x20] sm:$0xff]
      %v1717 = vld [vmem:[%s1713 + $0x30] sm:$0xff]
      %v1718 = vld [vmem:[%s1713 + $0x40] sm:$0xff]
      %v1719 = vld [vmem:[%s1713 + $0x50] sm:$0xff]
      %v1720 = vld [vmem:[%s1713 + $0x60] sm:$0xff]
      %v1721 = vld [vmem:[%s1713 + $0x70] sm:$0xff]
      %s1722 = scalar_lea.vmem %s1, 40
      %v1723 = vld [vmem:[%s1722] sm:$0xf]
      %v1725 = vsel %vm213, %v1714, 0
      %v1728 = vsel %vm213, %v1715, 0
      %v1731 = vsel %vm213, %v1716, 0
      %v1734 = vsel %vm213, %v1717, 0
      %v1737 = vsel %vm213, %v1718, 0
      %v1740 = vsel %vm213, %v1719, 0
      %v1743 = vsel %vm213, %v1720, 0
      %v1746 = vsel %vm213, %v1721, 0
      %v1749 = vsel %vm238, %v1723, 0
      %1751 = vmatprep.subr.mxu0 0.0
      %1752 = vmatpush1.msra.mxu0 0.0
      %1753 = vmatprep.subr.mxu0 0.0
      %1754 = vmatpush1.msra.mxu0 0.0
      %1755 = vmatprep.subr.mxu0 0.0
      %1756 = vmatpush1.msra.mxu0 0.0
      %1757 = vmatprep.subr.mxu0 0.0
      %1758 = vmatpush1.msra.mxu0 0.0
      %1759 = vmatprep.subr.mxu0 0.0
      %1760 = vmatpush1.msra.mxu0 0.0
      %1761 = vmatprep.subr.mxu0 0.0
      %1762 = vmatpush1.msra.mxu0 0.0
      %1763 = vmatprep.subr.mxu0 0.0
      %1764 = vmatpush1.msra.mxu0 0.0
      %1765 = vmatprep.subr.mxu0 0.0
      %1766 = vmatpush1.msra.mxu0 0.0
      %1767 = vmatprep.subr.mxu0 0.0
      %1768 = vmatpush1.msra.mxu0 0.0
      %1769 = vmatprep.subr.mxu0 0.0
      %1770 = vmatpush1.msra.mxu0 0.0
      %1771 = vmatprep.subr.mxu0 0.0
      %1772 = vmatpush1.msra.mxu0 0.0
      %1773 = vmatprep.subr.mxu0 0.0
      %1774 = vmatpush1.msra.mxu0 0.0
      %1775 = vmatprep.subr.mxu0 0.0
      %1776 = vmatpush1.msra.mxu0 0.0
      %1777 = vmatprep.subr.mxu0 0.0
      %1778 = vmatpush1.msra.mxu0 0.0
      %1779 = vmatprep.subr.mxu0 0.0
      %1780 = vmatpush1.msra.mxu0 0.0
      %1781 = vmatprep.subr.mxu0 0.0
      %1782 = vmatpush1.msra.mxu0 %v1749
      %1783 = vmatprep.subr.mxu0 0.0
      %1784 = vmatpush2.msra.mxu0 0.0
      %1785 = vmatprep.subr.mxu0 0.0
      %1786 = vmatpush2.msra.mxu0 0.0
      %1787 = vmatprep.subr.mxu0 0.0
      %1788 = vmatpush2.msra.mxu0 0.0
      %1789 = vmatprep.subr.mxu0 0.0
      %1790 = vmatpush2.msra.mxu0 0.0
      %1791 = vmatprep.subr.mxu0 0.0
      %1792 = vmatpush2.msra.mxu0 0.0
      %1793 = vmatprep.subr.mxu0 0.0
      %1794 = vmatpush2.msra.mxu0 0.0
      %1795 = vmatprep.subr.mxu0 0.0
      %1796 = vmatpush2.msra.mxu0 0.0
      %1797 = vmatprep.subr.mxu0 0.0
      %1798 = vmatpush2.msra.mxu0 0.0
      %1799 = vmatprep.subr.mxu0 0.0
      %1800 = vmatpush2.msra.mxu0 0.0
      %1801 = vmatprep.subr.mxu0 0.0
      %1802 = vmatpush2.msra.mxu0 0.0
      %1803 = vmatprep.subr.mxu0 0.0
      %1804 = vmatpush2.msra.mxu0 0.0
      %1805 = vmatprep.subr.mxu0 0.0
      %1806 = vmatpush2.msra.mxu0 0.0
      %1807 = vmatprep.subr.mxu0 0.0
      %1808 = vmatpush2.msra.mxu0 0.0
      %1809 = vmatprep.subr.mxu0 0.0
      %1810 = vmatpush2.msra.mxu0 0.0
      %1811 = vmatprep.subr.mxu0 0.0
      %1812 = vmatpush2.msra.mxu0 0.0
      %1813 = vmatprep.subr.mxu0 0.0
      %1814 = vmatpush2.msra.mxu0 0.0
      %1815 = vmatprep.mubr.f32.mxu0 0.0
      %1816 = vmatmul.mubr.f32.gmra.mxu0 %v1725
      %v1817 = vpop.f32.mrf.mxu0
      %v1818 = vadd.f32 0.0, %v1817
      %v1819 = vpop.f32.mrf.mxu0
      %1820 = vmatprep.mubr.f32.mxu0 0.0
      %1821 = vmatmul.mubr.f32.gmra.mxu0 %v1728
      %v1822 = vpop.f32.mrf.mxu0
      %v1823 = vadd.f32 0.0, %v1822
      %v1824 = vpop.f32.mrf.mxu0
      %1825 = vmatprep.mubr.f32.mxu0 0.0
      %1826 = vmatmul.mubr.f32.gmra.mxu0 %v1731
      %v1827 = vpop.f32.mrf.mxu0
      %v1828 = vadd.f32 0.0, %v1827
      %v1829 = vpop.f32.mrf.mxu0
      %1830 = vmatprep.mubr.f32.mxu0 0.0
      %1831 = vmatmul.mubr.f32.gmra.mxu0 %v1734
      %v1832 = vpop.f32.mrf.mxu0
      %v1833 = vadd.f32 0.0, %v1832
      %v1834 = vpop.f32.mrf.mxu0
      %1835 = vmatprep.mubr.f32.mxu0 0.0
      %1836 = vmatmul.mubr.f32.gmra.mxu0 %v1737
      %v1837 = vpop.f32.mrf.mxu0
      %v1838 = vadd.f32 0.0, %v1837
      %v1839 = vpop.f32.mrf.mxu0
      %1840 = vmatprep.mubr.f32.mxu0 0.0
      %1841 = vmatmul.mubr.f32.gmra.mxu0 %v1740
      %v1842 = vpop.f32.mrf.mxu0
      %v1843 = vadd.f32 0.0, %v1842
      %v1844 = vpop.f32.mrf.mxu0
      %1845 = vmatprep.mubr.f32.mxu0 0.0
      %1846 = vmatmul.mubr.f32.gmra.mxu0 %v1743
      %v1847 = vpop.f32.mrf.mxu0
      %v1848 = vadd.f32 0.0, %v1847
      %v1849 = vpop.f32.mrf.mxu0
      %1850 = vmatprep.mubr.f32.mxu0 0.0
      %1851 = vmatmul.mubr.f32.gmra.mxu0 %v1746
      %v1852 = vpop.f32.mrf.mxu0
      %v1853 = vadd.f32 0.0, %v1852
      %v1854 = vpop.f32.mrf.mxu0
      %1855 = vdwg.mxu0
      %v1856 = vadd.f32 %v1703, %v1818
      %v1857 = vadd.f32 %v1704, %v1823
      %v1858 = vadd.f32 %v1705, %v1828
      %v1859 = vadd.f32 %v1706, %v1833
      %v1860 = vadd.f32 %v1707, %v1838
      %v1861 = vadd.f32 %v1708, %v1843
      %v1862 = vadd.f32 %v1709, %v1848
      %v1863 = vadd.f32 %v1710, %v1853
      %s1864 = sadd.s32 %s1712, 160
      %s1865 = scalar_lea.vmem %s183, %s1864
      %v1866 = vld [vmem:[%s1865] sm:$0xff]
      %v1867 = vld [vmem:[%s1865 + $0x10] sm:$0xff]
      %v1868 = vld [vmem:[%s1865 + $0x20] sm:$0xff]
      %v1869 = vld [vmem:[%s1865 + $0x30] sm:$0xff]
      %v1870 = vld [vmem:[%s1865 + $0x40] sm:$0xff]
      %v1871 = vld [vmem:[%s1865 + $0x50] sm:$0xff]
      %v1872 = vld [vmem:[%s1865 + $0x60] sm:$0xff]
      %v1873 = vld [vmem:[%s1865 + $0x70] sm:$0xff]
      %s1874 = scalar_lea.vmem %s1, 44
      %v1875 = vld [vmem:[%s1874] sm:$0xf]
      %v1877 = vsel %vm213, %v1866, 0
      %v1880 = vsel %vm213, %v1867, 0
      %v1883 = vsel %vm213, %v1868, 0
      %v1886 = vsel %vm213, %v1869, 0
      %v1889 = vsel %vm213, %v1870, 0
      %v1892 = vsel %vm213, %v1871, 0
      %v1895 = vsel %vm213, %v1872, 0
      %v1898 = vsel %vm213, %v1873, 0
      %v1901 = vsel %vm238, %v1875, 0
      %1903 = vmatprep.subr.mxu0 0.0
      %1904 = vmatpush1.msra.mxu0 0.0
      %1905 = vmatprep.subr.mxu0 0.0
      %1906 = vmatpush1.msra.mxu0 0.0
      %1907 = vmatprep.subr.mxu0 0.0
      %1908 = vmatpush1.msra.mxu0 0.0
      %1909 = vmatprep.subr.mxu0 0.0
      %1910 = vmatpush1.msra.mxu0 0.0
      %1911 = vmatprep.subr.mxu0 0.0
      %1912 = vmatpush1.msra.mxu0 0.0
      %1913 = vmatprep.subr.mxu0 0.0
      %1914 = vmatpush1.msra.mxu0 0.0
      %1915 = vmatprep.subr.mxu0 0.0
      %1916 = vmatpush1.msra.mxu0 0.0
      %1917 = vmatprep.subr.mxu0 0.0
      %1918 = vmatpush1.msra.mxu0 0.0
      %1919 = vmatprep.subr.mxu0 0.0
      %1920 = vmatpush1.msra.mxu0 0.0
      %1921 = vmatprep.subr.mxu0 0.0
      %1922 = vmatpush1.msra.mxu0 0.0
      %1923 = vmatprep.subr.mxu0 0.0
      %1924 = vmatpush1.msra.mxu0 0.0
      %1925 = vmatprep.subr.mxu0 0.0
      %1926 = vmatpush1.msra.mxu0 0.0
      %1927 = vmatprep.subr.mxu0 0.0
      %1928 = vmatpush1.msra.mxu0 0.0
      %1929 = vmatprep.subr.mxu0 0.0
      %1930 = vmatpush1.msra.mxu0 0.0
      %1931 = vmatprep.subr.mxu0 0.0
      %1932 = vmatpush1.msra.mxu0 0.0
      %1933 = vmatprep.subr.mxu0 0.0
      %1934 = vmatpush1.msra.mxu0 %v1901
      %1935 = vmatprep.subr.mxu0 0.0
      %1936 = vmatpush2.msra.mxu0 0.0
      %1937 = vmatprep.subr.mxu0 0.0
      %1938 = vmatpush2.msra.mxu0 0.0
      %1939 = vmatprep.subr.mxu0 0.0
      %1940 = vmatpush2.msra.mxu0 0.0
      %1941 = vmatprep.subr.mxu0 0.0
      %1942 = vmatpush2.msra.mxu0 0.0
      %1943 = vmatprep.subr.mxu0 0.0
      %1944 = vmatpush2.msra.mxu0 0.0
      %1945 = vmatprep.subr.mxu0 0.0
      %1946 = vmatpush2.msra.mxu0 0.0
      %1947 = vmatprep.subr.mxu0 0.0
      %1948 = vmatpush2.msra.mxu0 0.0
      %1949 = vmatprep.subr.mxu0 0.0
      %1950 = vmatpush2.msra.mxu0 0.0
      %1951 = vmatprep.subr.mxu0 0.0
      %1952 = vmatpush2.msra.mxu0 0.0
      %1953 = vmatprep.subr.mxu0 0.0
      %1954 = vmatpush2.msra.mxu0 0.0
      %1955 = vmatprep.subr.mxu0 0.0
      %1956 = vmatpush2.msra.mxu0 0.0
      %1957 = vmatprep.subr.mxu0 0.0
      %1958 = vmatpush2.msra.mxu0 0.0
      %1959 = vmatprep.subr.mxu0 0.0
      %1960 = vmatpush2.msra.mxu0 0.0
      %1961 = vmatprep.subr.mxu0 0.0
      %1962 = vmatpush2.msra.mxu0 0.0
      %1963 = vmatprep.subr.mxu0 0.0
      %1964 = vmatpush2.msra.mxu0 0.0
      %1965 = vmatprep.subr.mxu0 0.0
      %1966 = vmatpush2.msra.mxu0 0.0
      %1967 = vmatprep.mubr.f32.mxu0 0.0
      %1968 = vmatmul.mubr.f32.gmra.mxu0 %v1877
      %v1969 = vpop.f32.mrf.mxu0
      %v1970 = vadd.f32 0.0, %v1969
      %v1971 = vpop.f32.mrf.mxu0
      %1972 = vmatprep.mubr.f32.mxu0 0.0
      %1973 = vmatmul.mubr.f32.gmra.mxu0 %v1880
      %v1974 = vpop.f32.mrf.mxu0
      %v1975 = vadd.f32 0.0, %v1974
      %v1976 = vpop.f32.mrf.mxu0
      %1977 = vmatprep.mubr.f32.mxu0 0.0
      %1978 = vmatmul.mubr.f32.gmra.mxu0 %v1883
      %v1979 = vpop.f32.mrf.mxu0
      %v1980 = vadd.f32 0.0, %v1979
      %v1981 = vpop.f32.mrf.mxu0
      %1982 = vmatprep.mubr.f32.mxu0 0.0
      %1983 = vmatmul.mubr.f32.gmra.mxu0 %v1886
      %v1984 = vpop.f32.mrf.mxu0
      %v1985 = vadd.f32 0.0, %v1984
      %v1986 = vpop.f32.mrf.mxu0
      %1987 = vmatprep.mubr.f32.mxu0 0.0
      %1988 = vmatmul.mubr.f32.gmra.mxu0 %v1889
      %v1989 = vpop.f32.mrf.mxu0
      %v1990 = vadd.f32 0.0, %v1989
      %v1991 = vpop.f32.mrf.mxu0
      %1992 = vmatprep.mubr.f32.mxu0 0.0
      %1993 = vmatmul.mubr.f32.gmra.mxu0 %v1892
      %v1994 = vpop.f32.mrf.mxu0
      %v1995 = vadd.f32 0.0, %v1994
      %v1996 = vpop.f32.mrf.mxu0
      %1997 = vmatprep.mubr.f32.mxu0 0.0
      %1998 = vmatmul.mubr.f32.gmra.mxu0 %v1895
      %v1999 = vpop.f32.mrf.mxu0
      %v2000 = vadd.f32 0.0, %v1999
      %v2001 = vpop.f32.mrf.mxu0
      %2002 = vmatprep.mubr.f32.mxu0 0.0
      %2003 = vmatmul.mubr.f32.gmra.mxu0 %v1898
      %v2004 = vpop.f32.mrf.mxu0
      %v2005 = vadd.f32 0.0, %v2004
      %v2006 = vpop.f32.mrf.mxu0
      %2007 = vdwg.mxu0
      %v2008 = vadd.f32 %v1856, %v1970
      %v2009 = vadd.f32 %v1857, %v1975
      %v2010 = vadd.f32 %v1858, %v1980
      %v2011 = vadd.f32 %v1859, %v1985
      %v2012 = vadd.f32 %v1860, %v1990
      %v2013 = vadd.f32 %v1861, %v1995
      %v2014 = vadd.f32 %v1862, %v2000
      %v2015 = vadd.f32 %v1863, %v2005
      %v2016 = vld [vmem:[%s1713 + $0x1] sm:$0xff]
      %v2017 = vld [vmem:[%s1713 + $0x11] sm:$0xff]
      %v2018 = vld [vmem:[%s1713 + $0x21] sm:$0xff]
      %v2019 = vld [vmem:[%s1713 + $0x31] sm:$0xff]
      %v2020 = vld [vmem:[%s1713 + $0x41] sm:$0xff]
      %v2021 = vld [vmem:[%s1713 + $0x51] sm:$0xff]
      %v2022 = vld [vmem:[%s1713 + $0x61] sm:$0xff]
      %v2023 = vld [vmem:[%s1713 + $0x71] sm:$0xff]
      %s2024 = scalar_lea.vmem %s1, 48
      %v2025 = vld [vmem:[%s2024] sm:$0xf]
      %v2027 = vsel %vm213, %v2016, 0
      %v2030 = vsel %vm213, %v2017, 0
      %v2033 = vsel %vm213, %v2018, 0
      %v2036 = vsel %vm213, %v2019, 0
      %v2039 = vsel %vm213, %v2020, 0
      %v2042 = vsel %vm213, %v2021, 0
      %v2045 = vsel %vm213, %v2022, 0
      %v2048 = vsel %vm213, %v2023, 0
      %v2051 = vsel %vm238, %v2025, 0
      %2053 = vmatprep.subr.mxu0 0.0
      %2054 = vmatpush1.msra.mxu0 0.0
      %2055 = vmatprep.subr.mxu0 0.0
      %2056 = vmatpush1.msra.mxu0 0.0
      %2057 = vmatprep.subr.mxu0 0.0
      %2058 = vmatpush1.msra.mxu0 0.0
      %2059 = vmatprep.subr.mxu0 0.0
      %2060 = vmatpush1.msra.mxu0 0.0
      %2061 = vmatprep.subr.mxu0 0.0
      %2062 = vmatpush1.msra.mxu0 0.0
      %2063 = vmatprep.subr.mxu0 0.0
      %2064 = vmatpush1.msra.mxu0 0.0
      %2065 = vmatprep.subr.mxu0 0.0
      %2066 = vmatpush1.msra.mxu0 0.0
      %2067 = vmatprep.subr.mxu0 0.0
      %2068 = vmatpush1.msra.mxu0 0.0
      %2069 = vmatprep.subr.mxu0 0.0
      %2070 = vmatpush1.msra.mxu0 0.0
      %2071 = vmatprep.subr.mxu0 0.0
      %2072 = vmatpush1.msra.mxu0 0.0
      %2073 = vmatprep.subr.mxu0 0.0
      %2074 = vmatpush1.msra.mxu0 0.0
      %2075 = vmatprep.subr.mxu0 0.0
      %2076 = vmatpush1.msra.mxu0 0.0
      %2077 = vmatprep.subr.mxu0 0.0
      %2078 = vmatpush1.msra.mxu0 0.0
      %2079 = vmatprep.subr.mxu0 0.0
      %2080 = vmatpush1.msra.mxu0 0.0
      %2081 = vmatprep.subr.mxu0 0.0
      %2082 = vmatpush1.msra.mxu0 0.0
      %2083 = vmatprep.subr.mxu0 0.0
      %2084 = vmatpush1.msra.mxu0 %v2051
      %2085 = vmatprep.subr.mxu0 0.0
      %2086 = vmatpush2.msra.mxu0 0.0
      %2087 = vmatprep.subr.mxu0 0.0
      %2088 = vmatpush2.msra.mxu0 0.0
      %2089 = vmatprep.subr.mxu0 0.0
      %2090 = vmatpush2.msra.mxu0 0.0
      %2091 = vmatprep.subr.mxu0 0.0
      %2092 = vmatpush2.msra.mxu0 0.0
      %2093 = vmatprep.subr.mxu0 0.0
      %2094 = vmatpush2.msra.mxu0 0.0
      %2095 = vmatprep.subr.mxu0 0.0
      %2096 = vmatpush2.msra.mxu0 0.0
      %2097 = vmatprep.subr.mxu0 0.0
      %2098 = vmatpush2.msra.mxu0 0.0
      %2099 = vmatprep.subr.mxu0 0.0
      %2100 = vmatpush2.msra.mxu0 0.0
      %2101 = vmatprep.subr.mxu0 0.0
      %2102 = vmatpush2.msra.mxu0 0.0
      %2103 = vmatprep.subr.mxu0 0.0
      %2104 = vmatpush2.msra.mxu0 0.0
      %2105 = vmatprep.subr.mxu0 0.0
      %2106 = vmatpush2.msra.mxu0 0.0
      %2107 = vmatprep.subr.mxu0 0.0
      %2108 = vmatpush2.msra.mxu0 0.0
      %2109 = vmatprep.subr.mxu0 0.0
      %2110 = vmatpush2.msra.mxu0 0.0
      %2111 = vmatprep.subr.mxu0 0.0
      %2112 = vmatpush2.msra.mxu0 0.0
      %2113 = vmatprep.subr.mxu0 0.0
      %2114 = vmatpush2.msra.mxu0 0.0
      %2115 = vmatprep.subr.mxu0 0.0
      %2116 = vmatpush2.msra.mxu0 0.0
      %2117 = vmatprep.mubr.f32.mxu0 0.0
      %2118 = vmatmul.mubr.f32.gmra.mxu0 %v2027
      %v2119 = vpop.f32.mrf.mxu0
      %v2120 = vadd.f32 0.0, %v2119
      %v2121 = vpop.f32.mrf.mxu0
      %2122 = vmatprep.mubr.f32.mxu0 0.0
      %2123 = vmatmul.mubr.f32.gmra.mxu0 %v2030
      %v2124 = vpop.f32.mrf.mxu0
      %v2125 = vadd.f32 0.0, %v2124
      %v2126 = vpop.f32.mrf.mxu0
      %2127 = vmatprep.mubr.f32.mxu0 0.0
      %2128 = vmatmul.mubr.f32.gmra.mxu0 %v2033
      %v2129 = vpop.f32.mrf.mxu0
      %v2130 = vadd.f32 0.0, %v2129
      %v2131 = vpop.f32.mrf.mxu0
      %2132 = vmatprep.mubr.f32.mxu0 0.0
      %2133 = vmatmul.mubr.f32.gmra.mxu0 %v2036
      %v2134 = vpop.f32.mrf.mxu0
      %v2135 = vadd.f32 0.0, %v2134
      %v2136 = vpop.f32.mrf.mxu0
      %2137 = vmatprep.mubr.f32.mxu0 0.0
      %2138 = vmatmul.mubr.f32.gmra.mxu0 %v2039
      %v2139 = vpop.f32.mrf.mxu0
      %v2140 = vadd.f32 0.0, %v2139
      %v2141 = vpop.f32.mrf.mxu0
      %2142 = vmatprep.mubr.f32.mxu0 0.0
      %2143 = vmatmul.mubr.f32.gmra.mxu0 %v2042
      %v2144 = vpop.f32.mrf.mxu0
      %v2145 = vadd.f32 0.0, %v2144
      %v2146 = vpop.f32.mrf.mxu0
      %2147 = vmatprep.mubr.f32.mxu0 0.0
      %2148 = vmatmul.mubr.f32.gmra.mxu0 %v2045
      %v2149 = vpop.f32.mrf.mxu0
      %v2150 = vadd.f32 0.0, %v2149
      %v2151 = vpop.f32.mrf.mxu0
      %2152 = vmatprep.mubr.f32.mxu0 0.0
      %2153 = vmatmul.mubr.f32.gmra.mxu0 %v2048
      %v2154 = vpop.f32.mrf.mxu0
      %v2155 = vadd.f32 0.0, %v2154
      %v2156 = vpop.f32.mrf.mxu0
      %2157 = vdwg.mxu0
      %v2158 = vadd.f32 %v2008, %v2120
      %v2159 = vadd.f32 %v2009, %v2125
      %v2160 = vadd.f32 %v2010, %v2130
      %v2161 = vadd.f32 %v2011, %v2135
      %v2162 = vadd.f32 %v2012, %v2140
      %v2163 = vadd.f32 %v2013, %v2145
      %v2164 = vadd.f32 %v2014, %v2150
      %v2165 = vadd.f32 %v2015, %v2155
      %v2166 = vld [vmem:[%s1865 + $0x1] sm:$0xff]
      %v2167 = vld [vmem:[%s1865 + $0x11] sm:$0xff]
      %v2168 = vld [vmem:[%s1865 + $0x21] sm:$0xff]
      %v2169 = vld [vmem:[%s1865 + $0x31] sm:$0xff]
      %v2170 = vld [vmem:[%s1865 + $0x41] sm:$0xff]
      %v2171 = vld [vmem:[%s1865 + $0x51] sm:$0xff]
      %v2172 = vld [vmem:[%s1865 + $0x61] sm:$0xff]
      %v2173 = vld [vmem:[%s1865 + $0x71] sm:$0xff]
      %s2174 = scalar_lea.vmem %s1, 52
      %v2175 = vld [vmem:[%s2174] sm:$0xf]
      %v2177 = vsel %vm213, %v2166, 0
      %v2180 = vsel %vm213, %v2167, 0
      %v2183 = vsel %vm213, %v2168, 0
      %v2186 = vsel %vm213, %v2169, 0
      %v2189 = vsel %vm213, %v2170, 0
      %v2192 = vsel %vm213, %v2171, 0
      %v2195 = vsel %vm213, %v2172, 0
      %v2198 = vsel %vm213, %v2173, 0
      %v2201 = vsel %vm238, %v2175, 0
      %2203 = vmatprep.subr.mxu0 0.0
      %2204 = vmatpush1.msra.mxu0 0.0
      %2205 = vmatprep.subr.mxu0 0.0
      %2206 = vmatpush1.msra.mxu0 0.0
      %2207 = vmatprep.subr.mxu0 0.0
      %2208 = vmatpush1.msra.mxu0 0.0
      %2209 = vmatprep.subr.mxu0 0.0
      %2210 = vmatpush1.msra.mxu0 0.0
      %2211 = vmatprep.subr.mxu0 0.0
      %2212 = vmatpush1.msra.mxu0 0.0
      %2213 = vmatprep.subr.mxu0 0.0
      %2214 = vmatpush1.msra.mxu0 0.0
      %2215 = vmatprep.subr.mxu0 0.0
      %2216 = vmatpush1.msra.mxu0 0.0
      %2217 = vmatprep.subr.mxu0 0.0
      %2218 = vmatpush1.msra.mxu0 0.0
      %2219 = vmatprep.subr.mxu0 0.0
      %2220 = vmatpush1.msra.mxu0 0.0
      %2221 = vmatprep.subr.mxu0 0.0
      %2222 = vmatpush1.msra.mxu0 0.0
      %2223 = vmatprep.subr.mxu0 0.0
      %2224 = vmatpush1.msra.mxu0 0.0
      %2225 = vmatprep.subr.mxu0 0.0
      %2226 = vmatpush1.msra.mxu0 0.0
      %2227 = vmatprep.subr.mxu0 0.0
      %2228 = vmatpush1.msra.mxu0 0.0
      %2229 = vmatprep.subr.mxu0 0.0
      %2230 = vmatpush1.msra.mxu0 0.0
      %2231 = vmatprep.subr.mxu0 0.0
      %2232 = vmatpush1.msra.mxu0 0.0
      %2233 = vmatprep.subr.mxu0 0.0
      %2234 = vmatpush1.msra.mxu0 %v2201
      %2235 = vmatprep.subr.mxu0 0.0
      %2236 = vmatpush2.msra.mxu0 0.0
      %2237 = vmatprep.subr.mxu0 0.0
      %2238 = vmatpush2.msra.mxu0 0.0
      %2239 = vmatprep.subr.mxu0 0.0
      %2240 = vmatpush2.msra.mxu0 0.0
      %2241 = vmatprep.subr.mxu0 0.0
      %2242 = vmatpush2.msra.mxu0 0.0
      %2243 = vmatprep.subr.mxu0 0.0
      %2244 = vmatpush2.msra.mxu0 0.0
      %2245 = vmatprep.subr.mxu0 0.0
      %2246 = vmatpush2.msra.mxu0 0.0
      %2247 = vmatprep.subr.mxu0 0.0
      %2248 = vmatpush2.msra.mxu0 0.0
      %2249 = vmatprep.subr.mxu0 0.0
      %2250 = vmatpush2.msra.mxu0 0.0
      %2251 = vmatprep.subr.mxu0 0.0
      %2252 = vmatpush2.msra.mxu0 0.0
      %2253 = vmatprep.subr.mxu0 0.0
      %2254 = vmatpush2.msra.mxu0 0.0
      %2255 = vmatprep.subr.mxu0 0.0
      %2256 = vmatpush2.msra.mxu0 0.0
      %2257 = vmatprep.subr.mxu0 0.0
      %2258 = vmatpush2.msra.mxu0 0.0
      %2259 = vmatprep.subr.mxu0 0.0
      %2260 = vmatpush2.msra.mxu0 0.0
      %2261 = vmatprep.subr.mxu0 0.0
      %2262 = vmatpush2.msra.mxu0 0.0
      %2263 = vmatprep.subr.mxu0 0.0
      %2264 = vmatpush2.msra.mxu0 0.0
      %2265 = vmatprep.subr.mxu0 0.0
      %2266 = vmatpush2.msra.mxu0 0.0
      %2267 = vmatprep.mubr.f32.mxu0 0.0
      %2268 = vmatmul.mubr.f32.gmra.mxu0 %v2177
      %v2269 = vpop.f32.mrf.mxu0
      %v2270 = vadd.f32 0.0, %v2269
      %v2271 = vpop.f32.mrf.mxu0
      %2272 = vmatprep.mubr.f32.mxu0 0.0
      %2273 = vmatmul.mubr.f32.gmra.mxu0 %v2180
      %v2274 = vpop.f32.mrf.mxu0
      %v2275 = vadd.f32 0.0, %v2274
      %v2276 = vpop.f32.mrf.mxu0
      %2277 = vmatprep.mubr.f32.mxu0 0.0
      %2278 = vmatmul.mubr.f32.gmra.mxu0 %v2183
      %v2279 = vpop.f32.mrf.mxu0
      %v2280 = vadd.f32 0.0, %v2279
      %v2281 = vpop.f32.mrf.mxu0
      %2282 = vmatprep.mubr.f32.mxu0 0.0
      %2283 = vmatmul.mubr.f32.gmra.mxu0 %v2186
      %v2284 = vpop.f32.mrf.mxu0
      %v2285 = vadd.f32 0.0, %v2284
      %v2286 = vpop.f32.mrf.mxu0
      %2287 = vmatprep.mubr.f32.mxu0 0.0
      %2288 = vmatmul.mubr.f32.gmra.mxu0 %v2189
      %v2289 = vpop.f32.mrf.mxu0
      %v2290 = vadd.f32 0.0, %v2289
      %v2291 = vpop.f32.mrf.mxu0
      %2292 = vmatprep.mubr.f32.mxu0 0.0
      %2293 = vmatmul.mubr.f32.gmra.mxu0 %v2192
      %v2294 = vpop.f32.mrf.mxu0
      %v2295 = vadd.f32 0.0, %v2294
      %v2296 = vpop.f32.mrf.mxu0
      %2297 = vmatprep.mubr.f32.mxu0 0.0
      %2298 = vmatmul.mubr.f32.gmra.mxu0 %v2195
      %v2299 = vpop.f32.mrf.mxu0
      %v2300 = vadd.f32 0.0, %v2299
      %v2301 = vpop.f32.mrf.mxu0
      %2302 = vmatprep.mubr.f32.mxu0 0.0
      %2303 = vmatmul.mubr.f32.gmra.mxu0 %v2198
      %v2304 = vpop.f32.mrf.mxu0
      %v2305 = vadd.f32 0.0, %v2304
      %v2306 = vpop.f32.mrf.mxu0
      %2307 = vdwg.mxu0
      %v2308 = vadd.f32 %v2158, %v2270
      %v2309 = vadd.f32 %v2159, %v2275
      %v2310 = vadd.f32 %v2160, %v2280
      %v2311 = vadd.f32 %v2161, %v2285
      %v2312 = vadd.f32 %v2162, %v2290
      %v2313 = vadd.f32 %v2163, %v2295
      %v2314 = vadd.f32 %v2164, %v2300
      %v2315 = vadd.f32 %v2165, %v2305
      %v2316 = vld [vmem:[%s1713 + $0x2] sm:$0xff]
      %v2317 = vld [vmem:[%s1713 + $0x12] sm:$0xff]
      %v2318 = vld [vmem:[%s1713 + $0x22] sm:$0xff]
      %v2319 = vld [vmem:[%s1713 + $0x32] sm:$0xff]
      %v2320 = vld [vmem:[%s1713 + $0x42] sm:$0xff]
      %v2321 = vld [vmem:[%s1713 + $0x52] sm:$0xff]
      %v2322 = vld [vmem:[%s1713 + $0x62] sm:$0xff]
      %v2323 = vld [vmem:[%s1713 + $0x72] sm:$0xff]
      %s2324 = scalar_lea.vmem %s1, 56
      %v2325 = vld [vmem:[%s2324] sm:$0xf]
      %v2327 = vsel %vm213, %v2316, 0
      %v2330 = vsel %vm213, %v2317, 0
      %v2333 = vsel %vm213, %v2318, 0
      %v2336 = vsel %vm213, %v2319, 0
      %v2339 = vsel %vm213, %v2320, 0
      %v2342 = vsel %vm213, %v2321, 0
      %v2345 = vsel %vm213, %v2322, 0
      %v2348 = vsel %vm213, %v2323, 0
      %v2351 = vsel %vm238, %v2325, 0
      %2353 = vmatprep.subr.mxu0 0.0
      %2354 = vmatpush1.msra.mxu0 0.0
      %2355 = vmatprep.subr.mxu0 0.0
      %2356 = vmatpush1.msra.mxu0 0.0
      %2357 = vmatprep.subr.mxu0 0.0
      %2358 = vmatpush1.msra.mxu0 0.0
      %2359 = vmatprep.subr.mxu0 0.0
      %2360 = vmatpush1.msra.mxu0 0.0
      %2361 = vmatprep.subr.mxu0 0.0
      %2362 = vmatpush1.msra.mxu0 0.0
      %2363 = vmatprep.subr.mxu0 0.0
      %2364 = vmatpush1.msra.mxu0 0.0
      %2365 = vmatprep.subr.mxu0 0.0
      %2366 = vmatpush1.msra.mxu0 0.0
      %2367 = vmatprep.subr.mxu0 0.0
      %2368 = vmatpush1.msra.mxu0 0.0
      %2369 = vmatprep.subr.mxu0 0.0
      %2370 = vmatpush1.msra.mxu0 0.0
      %2371 = vmatprep.subr.mxu0 0.0
      %2372 = vmatpush1.msra.mxu0 0.0
      %2373 = vmatprep.subr.mxu0 0.0
      %2374 = vmatpush1.msra.mxu0 0.0
      %2375 = vmatprep.subr.mxu0 0.0
      %2376 = vmatpush1.msra.mxu0 0.0
      %2377 = vmatprep.subr.mxu0 0.0
      %2378 = vmatpush1.msra.mxu0 0.0
      %2379 = vmatprep.subr.mxu0 0.0
      %2380 = vmatpush1.msra.mxu0 0.0
      %2381 = vmatprep.subr.mxu0 0.0
      %2382 = vmatpush1.msra.mxu0 0.0
      %2383 = vmatprep.subr.mxu0 0.0
      %2384 = vmatpush1.msra.mxu0 %v2351
      %2385 = vmatprep.subr.mxu0 0.0
      %2386 = vmatpush2.msra.mxu0 0.0
      %2387 = vmatprep.subr.mxu0 0.0
      %2388 = vmatpush2.msra.mxu0 0.0
      %2389 = vmatprep.subr.mxu0 0.0
      %2390 = vmatpush2.msra.mxu0 0.0
      %2391 = vmatprep.subr.mxu0 0.0
      %2392 = vmatpush2.msra.mxu0 0.0
      %2393 = vmatprep.subr.mxu0 0.0
      %2394 = vmatpush2.msra.mxu0 0.0
      %2395 = vmatprep.subr.mxu0 0.0
      %2396 = vmatpush2.msra.mxu0 0.0
      %2397 = vmatprep.subr.mxu0 0.0
      %2398 = vmatpush2.msra.mxu0 0.0
      %2399 = vmatprep.subr.mxu0 0.0
      %2400 = vmatpush2.msra.mxu0 0.0
      %2401 = vmatprep.subr.mxu0 0.0
      %2402 = vmatpush2.msra.mxu0 0.0
      %2403 = vmatprep.subr.mxu0 0.0
      %2404 = vmatpush2.msra.mxu0 0.0
      %2405 = vmatprep.subr.mxu0 0.0
      %2406 = vmatpush2.msra.mxu0 0.0
      %2407 = vmatprep.subr.mxu0 0.0
      %2408 = vmatpush2.msra.mxu0 0.0
      %2409 = vmatprep.subr.mxu0 0.0
      %2410 = vmatpush2.msra.mxu0 0.0
      %2411 = vmatprep.subr.mxu0 0.0
      %2412 = vmatpush2.msra.mxu0 0.0
      %2413 = vmatprep.subr.mxu0 0.0
      %2414 = vmatpush2.msra.mxu0 0.0
      %2415 = vmatprep.subr.mxu0 0.0
      %2416 = vmatpush2.msra.mxu0 0.0
      %2417 = vmatprep.mubr.f32.mxu0 0.0
      %2418 = vmatmul.mubr.f32.gmra.mxu0 %v2327
      %v2419 = vpop.f32.mrf.mxu0
      %v2420 = vadd.f32 0.0, %v2419
      %v2421 = vpop.f32.mrf.mxu0
      %2422 = vmatprep.mubr.f32.mxu0 0.0
      %2423 = vmatmul.mubr.f32.gmra.mxu0 %v2330
      %v2424 = vpop.f32.mrf.mxu0
      %v2425 = vadd.f32 0.0, %v2424
      %v2426 = vpop.f32.mrf.mxu0
      %2427 = vmatprep.mubr.f32.mxu0 0.0
      %2428 = vmatmul.mubr.f32.gmra.mxu0 %v2333
      %v2429 = vpop.f32.mrf.mxu0
      %v2430 = vadd.f32 0.0, %v2429
      %v2431 = vpop.f32.mrf.mxu0
      %2432 = vmatprep.mubr.f32.mxu0 0.0
      %2433 = vmatmul.mubr.f32.gmra.mxu0 %v2336
      %v2434 = vpop.f32.mrf.mxu0
      %v2435 = vadd.f32 0.0, %v2434
      %v2436 = vpop.f32.mrf.mxu0
      %2437 = vmatprep.mubr.f32.mxu0 0.0
      %2438 = vmatmul.mubr.f32.gmra.mxu0 %v2339
      %v2439 = vpop.f32.mrf.mxu0
      %v2440 = vadd.f32 0.0, %v2439
      %v2441 = vpop.f32.mrf.mxu0
      %2442 = vmatprep.mubr.f32.mxu0 0.0
      %2443 = vmatmul.mubr.f32.gmra.mxu0 %v2342
      %v2444 = vpop.f32.mrf.mxu0
      %v2445 = vadd.f32 0.0, %v2444
      %v2446 = vpop.f32.mrf.mxu0
      %2447 = vmatprep.mubr.f32.mxu0 0.0
      %2448 = vmatmul.mubr.f32.gmra.mxu0 %v2345
      %v2449 = vpop.f32.mrf.mxu0
      %v2450 = vadd.f32 0.0, %v2449
      %v2451 = vpop.f32.mrf.mxu0
      %2452 = vmatprep.mubr.f32.mxu0 0.0
      %2453 = vmatmul.mubr.f32.gmra.mxu0 %v2348
      %v2454 = vpop.f32.mrf.mxu0
      %v2455 = vadd.f32 0.0, %v2454
      %v2456 = vpop.f32.mrf.mxu0
      %2457 = vdwg.mxu0
      %v2458 = vadd.f32 %v2308, %v2420
      %v2459 = vadd.f32 %v2309, %v2425
      %v2460 = vadd.f32 %v2310, %v2430
      %v2461 = vadd.f32 %v2311, %v2435
      %v2462 = vadd.f32 %v2312, %v2440
      %v2463 = vadd.f32 %v2313, %v2445
      %v2464 = vadd.f32 %v2314, %v2450
      %v2465 = vadd.f32 %v2315, %v2455
      %s2466 = sadd.s32 %s1712, 320
      %s2467 = scalar_lea.vmem %s183, %s2466
      %v2468 = vld [vmem:[%s2467] sm:$0xff]
      %v2469 = vld [vmem:[%s2467 + $0x10] sm:$0xff]
      %v2470 = vld [vmem:[%s2467 + $0x20] sm:$0xff]
      %v2471 = vld [vmem:[%s2467 + $0x30] sm:$0xff]
      %v2472 = vld [vmem:[%s2467 + $0x40] sm:$0xff]
      %v2473 = vld [vmem:[%s2467 + $0x50] sm:$0xff]
      %v2474 = vld [vmem:[%s2467 + $0x60] sm:$0xff]
      %v2475 = vld [vmem:[%s2467 + $0x70] sm:$0xff]
      %s2476 = scalar_lea.vmem %s1, 60
      %v2477 = vld [vmem:[%s2476] sm:$0xf]
      %v2479 = vsel %vm213, %v2468, 0
      %v2482 = vsel %vm213, %v2469, 0
      %v2485 = vsel %vm213, %v2470, 0
      %v2488 = vsel %vm213, %v2471, 0
      %v2491 = vsel %vm213, %v2472, 0
      %v2494 = vsel %vm213, %v2473, 0
      %v2497 = vsel %vm213, %v2474, 0
      %v2500 = vsel %vm213, %v2475, 0
      %v2503 = vsel %vm238, %v2477, 0
      %2505 = vmatprep.subr.mxu0 0.0
      %2506 = vmatpush1.msra.mxu0 0.0
      %2507 = vmatprep.subr.mxu0 0.0
      %2508 = vmatpush1.msra.mxu0 0.0
      %2509 = vmatprep.subr.mxu0 0.0
      %2510 = vmatpush1.msra.mxu0 0.0
      %2511 = vmatprep.subr.mxu0 0.0
      %2512 = vmatpush1.msra.mxu0 0.0
      %2513 = vmatprep.subr.mxu0 0.0
      %2514 = vmatpush1.msra.mxu0 0.0
      %2515 = vmatprep.subr.mxu0 0.0
      %2516 = vmatpush1.msra.mxu0 0.0
      %2517 = vmatprep.subr.mxu0 0.0
      %2518 = vmatpush1.msra.mxu0 0.0
      %2519 = vmatprep.subr.mxu0 0.0
      %2520 = vmatpush1.msra.mxu0 0.0
      %2521 = vmatprep.subr.mxu0 0.0
      %2522 = vmatpush1.msra.mxu0 0.0
      %2523 = vmatprep.subr.mxu0 0.0
      %2524 = vmatpush1.msra.mxu0 0.0
      %2525 = vmatprep.subr.mxu0 0.0
      %2526 = vmatpush1.msra.mxu0 0.0
      %2527 = vmatprep.subr.mxu0 0.0
      %2528 = vmatpush1.msra.mxu0 0.0
      %2529 = vmatprep.subr.mxu0 0.0
      %2530 = vmatpush1.msra.mxu0 0.0
      %2531 = vmatprep.subr.mxu0 0.0
      %2532 = vmatpush1.msra.mxu0 0.0
      %2533 = vmatprep.subr.mxu0 0.0
      %2534 = vmatpush1.msra.mxu0 0.0
      %2535 = vmatprep.subr.mxu0 0.0
      %2536 = vmatpush1.msra.mxu0 %v2503
      %2537 = vmatprep.subr.mxu0 0.0
      %2538 = vmatpush2.msra.mxu0 0.0
      %2539 = vmatprep.subr.mxu0 0.0
      %2540 = vmatpush2.msra.mxu0 0.0
      %2541 = vmatprep.subr.mxu0 0.0
      %2542 = vmatpush2.msra.mxu0 0.0
      %2543 = vmatprep.subr.mxu0 0.0
      %2544 = vmatpush2.msra.mxu0 0.0
      %2545 = vmatprep.subr.mxu0 0.0
      %2546 = vmatpush2.msra.mxu0 0.0
      %2547 = vmatprep.subr.mxu0 0.0
      %2548 = vmatpush2.msra.mxu0 0.0
      %2549 = vmatprep.subr.mxu0 0.0
      %2550 = vmatpush2.msra.mxu0 0.0
      %2551 = vmatprep.subr.mxu0 0.0
      %2552 = vmatpush2.msra.mxu0 0.0
      %2553 = vmatprep.subr.mxu0 0.0
      %2554 = vmatpush2.msra.mxu0 0.0
      %2555 = vmatprep.subr.mxu0 0.0
      %2556 = vmatpush2.msra.mxu0 0.0
      %2557 = vmatprep.subr.mxu0 0.0
      %2558 = vmatpush2.msra.mxu0 0.0
      %2559 = vmatprep.subr.mxu0 0.0
      %2560 = vmatpush2.msra.mxu0 0.0
      %2561 = vmatprep.subr.mxu0 0.0
      %2562 = vmatpush2.msra.mxu0 0.0
      %2563 = vmatprep.subr.mxu0 0.0
      %2564 = vmatpush2.msra.mxu0 0.0
      %2565 = vmatprep.subr.mxu0 0.0
      %2566 = vmatpush2.msra.mxu0 0.0
      %2567 = vmatprep.subr.mxu0 0.0
      %2568 = vmatpush2.msra.mxu0 0.0
      %2569 = vmatprep.mubr.f32.mxu0 0.0
      %2570 = vmatmul.mubr.f32.gmra.mxu0 %v2479
      %v2571 = vpop.f32.mrf.mxu0
      %v2572 = vadd.f32 0.0, %v2571
      %v2573 = vpop.f32.mrf.mxu0
      %2574 = vmatprep.mubr.f32.mxu0 0.0
      %2575 = vmatmul.mubr.f32.gmra.mxu0 %v2482
      %v2576 = vpop.f32.mrf.mxu0
      %v2577 = vadd.f32 0.0, %v2576
      %v2578 = vpop.f32.mrf.mxu0
      %2579 = vmatprep.mubr.f32.mxu0 0.0
      %2580 = vmatmul.mubr.f32.gmra.mxu0 %v2485
      %v2581 = vpop.f32.mrf.mxu0
      %v2582 = vadd.f32 0.0, %v2581
      %v2583 = vpop.f32.mrf.mxu0
      %2584 = vmatprep.mubr.f32.mxu0 0.0
      %2585 = vmatmul.mubr.f32.gmra.mxu0 %v2488
      %v2586 = vpop.f32.mrf.mxu0
      %v2587 = vadd.f32 0.0, %v2586
      %v2588 = vpop.f32.mrf.mxu0
      %2589 = vmatprep.mubr.f32.mxu0 0.0
      %2590 = vmatmul.mubr.f32.gmra.mxu0 %v2491
      %v2591 = vpop.f32.mrf.mxu0
      %v2592 = vadd.f32 0.0, %v2591
      %v2593 = vpop.f32.mrf.mxu0
      %2594 = vmatprep.mubr.f32.mxu0 0.0
      %2595 = vmatmul.mubr.f32.gmra.mxu0 %v2494
      %v2596 = vpop.f32.mrf.mxu0
      %v2597 = vadd.f32 0.0, %v2596
      %v2598 = vpop.f32.mrf.mxu0
      %2599 = vmatprep.mubr.f32.mxu0 0.0
      %2600 = vmatmul.mubr.f32.gmra.mxu0 %v2497
      %v2601 = vpop.f32.mrf.mxu0
      %v2602 = vadd.f32 0.0, %v2601
      %v2603 = vpop.f32.mrf.mxu0
      %2604 = vmatprep.mubr.f32.mxu0 0.0
      %2605 = vmatmul.mubr.f32.gmra.mxu0 %v2500
      %v2606 = vpop.f32.mrf.mxu0
      %v2607 = vadd.f32 0.0, %v2606
      %v2608 = vpop.f32.mrf.mxu0
      %2609 = vdwg.mxu0
      %v2610 = vadd.f32 %v2458, %v2572
      %v2611 = vadd.f32 %v2459, %v2577
      %v2612 = vadd.f32 %v2460, %v2582
      %v2613 = vadd.f32 %v2461, %v2587
      %v2614 = vadd.f32 %v2462, %v2592
      %v2615 = vadd.f32 %v2463, %v2597
      %v2616 = vadd.f32 %v2464, %v2602
      %v2617 = vadd.f32 %v2465, %v2607
      %s2618 = sadd.s32 %s1712, 480
      %s2619 = scalar_lea.vmem %s183, %s2618
      %v2620 = vld [vmem:[%s2619] sm:$0xff]
      %v2621 = vld [vmem:[%s2619 + $0x10] sm:$0xff]
      %v2622 = vld [vmem:[%s2619 + $0x20] sm:$0xff]
      %v2623 = vld [vmem:[%s2619 + $0x30] sm:$0xff]
      %v2624 = vld [vmem:[%s2619 + $0x40] sm:$0xff]
      %v2625 = vld [vmem:[%s2619 + $0x50] sm:$0xff]
      %v2626 = vld [vmem:[%s2619 + $0x60] sm:$0xff]
      %v2627 = vld [vmem:[%s2619 + $0x70] sm:$0xff]
      %s2628 = scalar_lea.vmem %s1, 64
      %v2629 = vld [vmem:[%s2628] sm:$0xf]
      %v2631 = vsel %vm213, %v2620, 0
      %v2634 = vsel %vm213, %v2621, 0
      %v2637 = vsel %vm213, %v2622, 0
      %v2640 = vsel %vm213, %v2623, 0
      %v2643 = vsel %vm213, %v2624, 0
      %v2646 = vsel %vm213, %v2625, 0
      %v2649 = vsel %vm213, %v2626, 0
      %v2652 = vsel %vm213, %v2627, 0
      %v2655 = vsel %vm238, %v2629, 0
      %2657 = vmatprep.subr.mxu0 0.0
      %2658 = vmatpush1.msra.mxu0 0.0
      %2659 = vmatprep.subr.mxu0 0.0
      %2660 = vmatpush1.msra.mxu0 0.0
      %2661 = vmatprep.subr.mxu0 0.0
      %2662 = vmatpush1.msra.mxu0 0.0
      %2663 = vmatprep.subr.mxu0 0.0
      %2664 = vmatpush1.msra.mxu0 0.0
      %2665 = vmatprep.subr.mxu0 0.0
      %2666 = vmatpush1.msra.mxu0 0.0
      %2667 = vmatprep.subr.mxu0 0.0
      %2668 = vmatpush1.msra.mxu0 0.0
      %2669 = vmatprep.subr.mxu0 0.0
      %2670 = vmatpush1.msra.mxu0 0.0
      %2671 = vmatprep.subr.mxu0 0.0
      %2672 = vmatpush1.msra.mxu0 0.0
      %2673 = vmatprep.subr.mxu0 0.0
      %2674 = vmatpush1.msra.mxu0 0.0
      %2675 = vmatprep.subr.mxu0 0.0
      %2676 = vmatpush1.msra.mxu0 0.0
      %2677 = vmatprep.subr.mxu0 0.0
      %2678 = vmatpush1.msra.mxu0 0.0
      %2679 = vmatprep.subr.mxu0 0.0
      %2680 = vmatpush1.msra.mxu0 0.0
      %2681 = vmatprep.subr.mxu0 0.0
      %2682 = vmatpush1.msra.mxu0 0.0
      %2683 = vmatprep.subr.mxu0 0.0
      %2684 = vmatpush1.msra.mxu0 0.0
      %2685 = vmatprep.subr.mxu0 0.0
      %2686 = vmatpush1.msra.mxu0 0.0
      %2687 = vmatprep.subr.mxu0 0.0
      %2688 = vmatpush1.msra.mxu0 %v2655
      %2689 = vmatprep.subr.mxu0 0.0
      %2690 = vmatpush2.msra.mxu0 0.0
      %2691 = vmatprep.subr.mxu0 0.0
      %2692 = vmatpush2.msra.mxu0 0.0
      %2693 = vmatprep.subr.mxu0 0.0
      %2694 = vmatpush2.msra.mxu0 0.0
      %2695 = vmatprep.subr.mxu0 0.0
      %2696 = vmatpush2.msra.mxu0 0.0
      %2697 = vmatprep.subr.mxu0 0.0
      %2698 = vmatpush2.msra.mxu0 0.0
      %2699 = vmatprep.subr.mxu0 0.0
      %2700 = vmatpush2.msra.mxu0 0.0
      %2701 = vmatprep.subr.mxu0 0.0
      %2702 = vmatpush2.msra.mxu0 0.0
      %2703 = vmatprep.subr.mxu0 0.0
      %2704 = vmatpush2.msra.mxu0 0.0
      %2705 = vmatprep.subr.mxu0 0.0
      %2706 = vmatpush2.msra.mxu0 0.0
      %2707 = vmatprep.subr.mxu0 0.0
      %2708 = vmatpush2.msra.mxu0 0.0
      %2709 = vmatprep.subr.mxu0 0.0
      %2710 = vmatpush2.msra.mxu0 0.0
      %2711 = vmatprep.subr.mxu0 0.0
      %2712 = vmatpush2.msra.mxu0 0.0
      %2713 = vmatprep.subr.mxu0 0.0
      %2714 = vmatpush2.msra.mxu0 0.0
      %2715 = vmatprep.subr.mxu0 0.0
      %2716 = vmatpush2.msra.mxu0 0.0
      %2717 = vmatprep.subr.mxu0 0.0
      %2718 = vmatpush2.msra.mxu0 0.0
      %2719 = vmatprep.subr.mxu0 0.0
      %2720 = vmatpush2.msra.mxu0 0.0
      %2721 = vmatprep.mubr.f32.mxu0 0.0
      %2722 = vmatmul.mubr.f32.gmra.mxu0 %v2631
      %v2723 = vpop.f32.mrf.mxu0
      %v2724 = vadd.f32 0.0, %v2723
      %v2725 = vpop.f32.mrf.mxu0
      %2726 = vmatprep.mubr.f32.mxu0 0.0
      %2727 = vmatmul.mubr.f32.gmra.mxu0 %v2634
      %v2728 = vpop.f32.mrf.mxu0
      %v2729 = vadd.f32 0.0, %v2728
      %v2730 = vpop.f32.mrf.mxu0
      %2731 = vmatprep.mubr.f32.mxu0 0.0
      %2732 = vmatmul.mubr.f32.gmra.mxu0 %v2637
      %v2733 = vpop.f32.mrf.mxu0
      %v2734 = vadd.f32 0.0, %v2733
      %v2735 = vpop.f32.mrf.mxu0
      %2736 = vmatprep.mubr.f32.mxu0 0.0
      %2737 = vmatmul.mubr.f32.gmra.mxu0 %v2640
      %v2738 = vpop.f32.mrf.mxu0
      %v2739 = vadd.f32 0.0, %v2738
      %v2740 = vpop.f32.mrf.mxu0
      %2741 = vmatprep.mubr.f32.mxu0 0.0
      %2742 = vmatmul.mubr.f32.gmra.mxu0 %v2643
      %v2743 = vpop.f32.mrf.mxu0
      %v2744 = vadd.f32 0.0, %v2743
      %v2745 = vpop.f32.mrf.mxu0
      %2746 = vmatprep.mubr.f32.mxu0 0.0
      %2747 = vmatmul.mubr.f32.gmra.mxu0 %v2646
      %v2748 = vpop.f32.mrf.mxu0
      %v2749 = vadd.f32 0.0, %v2748
      %v2750 = vpop.f32.mrf.mxu0
      %2751 = vmatprep.mubr.f32.mxu0 0.0
      %2752 = vmatmul.mubr.f32.gmra.mxu0 %v2649
      %v2753 = vpop.f32.mrf.mxu0
      %v2754 = vadd.f32 0.0, %v2753
      %v2755 = vpop.f32.mrf.mxu0
      %2756 = vmatprep.mubr.f32.mxu0 0.0
      %2757 = vmatmul.mubr.f32.gmra.mxu0 %v2652
      %v2758 = vpop.f32.mrf.mxu0
      %v2759 = vadd.f32 0.0, %v2758
      %v2760 = vpop.f32.mrf.mxu0
      %2761 = vdwg.mxu0
      %v2762 = vadd.f32 %v2610, %v2724
      %v2763 = vadd.f32 %v2611, %v2729
      %v2764 = vadd.f32 %v2612, %v2734
      %v2765 = vadd.f32 %v2613, %v2739
      %v2766 = vadd.f32 %v2614, %v2744
      %v2767 = vadd.f32 %v2615, %v2749
      %v2768 = vadd.f32 %v2616, %v2754
      %v2769 = vadd.f32 %v2617, %v2759
      %v2770 = vld [vmem:[%s2467 + $0x1] sm:$0xff]
      %v2771 = vld [vmem:[%s2467 + $0x11] sm:$0xff]
      %v2772 = vld [vmem:[%s2467 + $0x21] sm:$0xff]
      %v2773 = vld [vmem:[%s2467 + $0x31] sm:$0xff]
      %v2774 = vld [vmem:[%s2467 + $0x41] sm:$0xff]
      %v2775 = vld [vmem:[%s2467 + $0x51] sm:$0xff]
      %v2776 = vld [vmem:[%s2467 + $0x61] sm:$0xff]
      %v2777 = vld [vmem:[%s2467 + $0x71] sm:$0xff]
      %s2778 = scalar_lea.vmem %s1, 68
      %v2779 = vld [vmem:[%s2778] sm:$0xf]
      %v2781 = vsel %vm213, %v2770, 0
      %v2784 = vsel %vm213, %v2771, 0
      %v2787 = vsel %vm213, %v2772, 0
      %v2790 = vsel %vm213, %v2773, 0
      %v2793 = vsel %vm213, %v2774, 0
      %v2796 = vsel %vm213, %v2775, 0
      %v2799 = vsel %vm213, %v2776, 0
      %v2802 = vsel %vm213, %v2777, 0
      %v2805 = vsel %vm238, %v2779, 0
      %2807 = vmatprep.subr.mxu0 0.0
      %2808 = vmatpush1.msra.mxu0 0.0
      %2809 = vmatprep.subr.mxu0 0.0
      %2810 = vmatpush1.msra.mxu0 0.0
      %2811 = vmatprep.subr.mxu0 0.0
      %2812 = vmatpush1.msra.mxu0 0.0
      %2813 = vmatprep.subr.mxu0 0.0
      %2814 = vmatpush1.msra.mxu0 0.0
      %2815 = vmatprep.subr.mxu0 0.0
      %2816 = vmatpush1.msra.mxu0 0.0
      %2817 = vmatprep.subr.mxu0 0.0
      %2818 = vmatpush1.msra.mxu0 0.0
      %2819 = vmatprep.subr.mxu0 0.0
      %2820 = vmatpush1.msra.mxu0 0.0
      %2821 = vmatprep.subr.mxu0 0.0
      %2822 = vmatpush1.msra.mxu0 0.0
      %2823 = vmatprep.subr.mxu0 0.0
      %2824 = vmatpush1.msra.mxu0 0.0
      %2825 = vmatprep.subr.mxu0 0.0
      %2826 = vmatpush1.msra.mxu0 0.0
      %2827 = vmatprep.subr.mxu0 0.0
      %2828 = vmatpush1.msra.mxu0 0.0
      %2829 = vmatprep.subr.mxu0 0.0
      %2830 = vmatpush1.msra.mxu0 0.0
      %2831 = vmatprep.subr.mxu0 0.0
      %2832 = vmatpush1.msra.mxu0 0.0
      %2833 = vmatprep.subr.mxu0 0.0
      %2834 = vmatpush1.msra.mxu0 0.0
      %2835 = vmatprep.subr.mxu0 0.0
      %2836 = vmatpush1.msra.mxu0 0.0
      %2837 = vmatprep.subr.mxu0 0.0
      %2838 = vmatpush1.msra.mxu0 %v2805
      %2839 = vmatprep.subr.mxu0 0.0
      %2840 = vmatpush2.msra.mxu0 0.0
      %2841 = vmatprep.subr.mxu0 0.0
      %2842 = vmatpush2.msra.mxu0 0.0
      %2843 = vmatprep.subr.mxu0 0.0
      %2844 = vmatpush2.msra.mxu0 0.0
      %2845 = vmatprep.subr.mxu0 0.0
      %2846 = vmatpush2.msra.mxu0 0.0
      %2847 = vmatprep.subr.mxu0 0.0
      %2848 = vmatpush2.msra.mxu0 0.0
      %2849 = vmatprep.subr.mxu0 0.0
      %2850 = vmatpush2.msra.mxu0 0.0
      %2851 = vmatprep.subr.mxu0 0.0
      %2852 = vmatpush2.msra.mxu0 0.0
      %2853 = vmatprep.subr.mxu0 0.0
      %2854 = vmatpush2.msra.mxu0 0.0
      %2855 = vmatprep.subr.mxu0 0.0
      %2856 = vmatpush2.msra.mxu0 0.0
      %2857 = vmatprep.subr.mxu0 0.0
      %2858 = vmatpush2.msra.mxu0 0.0
      %2859 = vmatprep.subr.mxu0 0.0
      %2860 = vmatpush2.msra.mxu0 0.0
      %2861 = vmatprep.subr.mxu0 0.0
      %2862 = vmatpush2.msra.mxu0 0.0
      %2863 = vmatprep.subr.mxu0 0.0
      %2864 = vmatpush2.msra.mxu0 0.0
      %2865 = vmatprep.subr.mxu0 0.0
      %2866 = vmatpush2.msra.mxu0 0.0
      %2867 = vmatprep.subr.mxu0 0.0
      %2868 = vmatpush2.msra.mxu0 0.0
      %2869 = vmatprep.subr.mxu0 0.0
      %2870 = vmatpush2.msra.mxu0 0.0
      %2871 = vmatprep.mubr.f32.mxu0 0.0
      %2872 = vmatmul.mubr.f32.gmra.mxu0 %v2781
      %v2873 = vpop.f32.mrf.mxu0
      %v2874 = vadd.f32 0.0, %v2873
      %v2875 = vpop.f32.mrf.mxu0
      %2876 = vmatprep.mubr.f32.mxu0 0.0
      %2877 = vmatmul.mubr.f32.gmra.mxu0 %v2784
      %v2878 = vpop.f32.mrf.mxu0
      %v2879 = vadd.f32 0.0, %v2878
      %v2880 = vpop.f32.mrf.mxu0
      %2881 = vmatprep.mubr.f32.mxu0 0.0
      %2882 = vmatmul.mubr.f32.gmra.mxu0 %v2787
      %v2883 = vpop.f32.mrf.mxu0
      %v2884 = vadd.f32 0.0, %v2883
      %v2885 = vpop.f32.mrf.mxu0
      %2886 = vmatprep.mubr.f32.mxu0 0.0
      %2887 = vmatmul.mubr.f32.gmra.mxu0 %v2790
      %v2888 = vpop.f32.mrf.mxu0
      %v2889 = vadd.f32 0.0, %v2888
      %v2890 = vpop.f32.mrf.mxu0
      %2891 = vmatprep.mubr.f32.mxu0 0.0
      %2892 = vmatmul.mubr.f32.gmra.mxu0 %v2793
      %v2893 = vpop.f32.mrf.mxu0
      %v2894 = vadd.f32 0.0, %v2893
      %v2895 = vpop.f32.mrf.mxu0
      %2896 = vmatprep.mubr.f32.mxu0 0.0
      %2897 = vmatmul.mubr.f32.gmra.mxu0 %v2796
      %v2898 = vpop.f32.mrf.mxu0
      %v2899 = vadd.f32 0.0, %v2898
      %v2900 = vpop.f32.mrf.mxu0
      %2901 = vmatprep.mubr.f32.mxu0 0.0
      %2902 = vmatmul.mubr.f32.gmra.mxu0 %v2799
      %v2903 = vpop.f32.mrf.mxu0
      %v2904 = vadd.f32 0.0, %v2903
      %v2905 = vpop.f32.mrf.mxu0
      %2906 = vmatprep.mubr.f32.mxu0 0.0
      %2907 = vmatmul.mubr.f32.gmra.mxu0 %v2802
      %v2908 = vpop.f32.mrf.mxu0
      %v2909 = vadd.f32 0.0, %v2908
      %v2910 = vpop.f32.mrf.mxu0
      %2911 = vdwg.mxu0
      %v2912 = vadd.f32 %v2762, %v2874
      %v2913 = vadd.f32 %v2763, %v2879
      %v2914 = vadd.f32 %v2764, %v2884
      %v2915 = vadd.f32 %v2765, %v2889
      %v2916 = vadd.f32 %v2766, %v2894
      %v2917 = vadd.f32 %v2767, %v2899
      %v2918 = vadd.f32 %v2768, %v2904
      %v2919 = vadd.f32 %v2769, %v2909
      %v2920 = vld [vmem:[%s2619 + $0x1] sm:$0xff]
      %v2921 = vld [vmem:[%s2619 + $0x11] sm:$0xff]
      %v2922 = vld [vmem:[%s2619 + $0x21] sm:$0xff]
      %v2923 = vld [vmem:[%s2619 + $0x31] sm:$0xff]
      %v2924 = vld [vmem:[%s2619 + $0x41] sm:$0xff]
      %v2925 = vld [vmem:[%s2619 + $0x51] sm:$0xff]
      %v2926 = vld [vmem:[%s2619 + $0x61] sm:$0xff]
      %v2927 = vld [vmem:[%s2619 + $0x71] sm:$0xff]
      %s2928 = scalar_lea.vmem %s1, 72
      %v2929 = vld [vmem:[%s2928] sm:$0xf]
      %v2931 = vsel %vm213, %v2920, 0
      %v2934 = vsel %vm213, %v2921, 0
      %v2937 = vsel %vm213, %v2922, 0
      %v2940 = vsel %vm213, %v2923, 0
      %v2943 = vsel %vm213, %v2924, 0
      %v2946 = vsel %vm213, %v2925, 0
      %v2949 = vsel %vm213, %v2926, 0
      %v2952 = vsel %vm213, %v2927, 0
      %v2955 = vsel %vm238, %v2929, 0
      %2957 = vmatprep.subr.mxu0 0.0
      %2958 = vmatpush1.msra.mxu0 0.0
      %2959 = vmatprep.subr.mxu0 0.0
      %2960 = vmatpush1.msra.mxu0 0.0
      %2961 = vmatprep.subr.mxu0 0.0
      %2962 = vmatpush1.msra.mxu0 0.0
      %2963 = vmatprep.subr.mxu0 0.0
      %2964 = vmatpush1.msra.mxu0 0.0
      %2965 = vmatprep.subr.mxu0 0.0
      %2966 = vmatpush1.msra.mxu0 0.0
      %2967 = vmatprep.subr.mxu0 0.0
      %2968 = vmatpush1.msra.mxu0 0.0
      %2969 = vmatprep.subr.mxu0 0.0
      %2970 = vmatpush1.msra.mxu0 0.0
      %2971 = vmatprep.subr.mxu0 0.0
      %2972 = vmatpush1.msra.mxu0 0.0
      %2973 = vmatprep.subr.mxu0 0.0
      %2974 = vmatpush1.msra.mxu0 0.0
      %2975 = vmatprep.subr.mxu0 0.0
      %2976 = vmatpush1.msra.mxu0 0.0
      %2977 = vmatprep.subr.mxu0 0.0
      %2978 = vmatpush1.msra.mxu0 0.0
      %2979 = vmatprep.subr.mxu0 0.0
      %2980 = vmatpush1.msra.mxu0 0.0
      %2981 = vmatprep.subr.mxu0 0.0
      %2982 = vmatpush1.msra.mxu0 0.0
      %2983 = vmatprep.subr.mxu0 0.0
      %2984 = vmatpush1.msra.mxu0 0.0
      %2985 = vmatprep.subr.mxu0 0.0
      %2986 = vmatpush1.msra.mxu0 0.0
      %2987 = vmatprep.subr.mxu0 0.0
      %2988 = vmatpush1.msra.mxu0 %v2955
      %2989 = vmatprep.subr.mxu0 0.0
      %2990 = vmatpush2.msra.mxu0 0.0
      %2991 = vmatprep.subr.mxu0 0.0
      %2992 = vmatpush2.msra.mxu0 0.0
      %2993 = vmatprep.subr.mxu0 0.0
      %2994 = vmatpush2.msra.mxu0 0.0
      %2995 = vmatprep.subr.mxu0 0.0
      %2996 = vmatpush2.msra.mxu0 0.0
      %2997 = vmatprep.subr.mxu0 0.0
      %2998 = vmatpush2.msra.mxu0 0.0
      %2999 = vmatprep.subr.mxu0 0.0
      %3000 = vmatpush2.msra.mxu0 0.0
      %3001 = vmatprep.subr.mxu0 0.0
      %3002 = vmatpush2.msra.mxu0 0.0
      %3003 = vmatprep.subr.mxu0 0.0
      %3004 = vmatpush2.msra.mxu0 0.0
      %3005 = vmatprep.subr.mxu0 0.0
      %3006 = vmatpush2.msra.mxu0 0.0
      %3007 = vmatprep.subr.mxu0 0.0
      %3008 = vmatpush2.msra.mxu0 0.0
      %3009 = vmatprep.subr.mxu0 0.0
      %3010 = vmatpush2.msra.mxu0 0.0
      %3011 = vmatprep.subr.mxu0 0.0
      %3012 = vmatpush2.msra.mxu0 0.0
      %3013 = vmatprep.subr.mxu0 0.0
      %3014 = vmatpush2.msra.mxu0 0.0
      %3015 = vmatprep.subr.mxu0 0.0
      %3016 = vmatpush2.msra.mxu0 0.0
      %3017 = vmatprep.subr.mxu0 0.0
      %3018 = vmatpush2.msra.mxu0 0.0
      %3019 = vmatprep.subr.mxu0 0.0
      %3020 = vmatpush2.msra.mxu0 0.0
      %3021 = vmatprep.mubr.f32.mxu0 0.0
      %3022 = vmatmul.mubr.f32.gmra.mxu0 %v2931
      %v3023 = vpop.f32.mrf.mxu0
      %v3024 = vadd.f32 0.0, %v3023
      %v3025 = vpop.f32.mrf.mxu0
      %3026 = vmatprep.mubr.f32.mxu0 0.0
      %3027 = vmatmul.mubr.f32.gmra.mxu0 %v2934
      %v3028 = vpop.f32.mrf.mxu0
      %v3029 = vadd.f32 0.0, %v3028
      %v3030 = vpop.f32.mrf.mxu0
      %3031 = vmatprep.mubr.f32.mxu0 0.0
      %3032 = vmatmul.mubr.f32.gmra.mxu0 %v2937
      %v3033 = vpop.f32.mrf.mxu0
      %v3034 = vadd.f32 0.0, %v3033
      %v3035 = vpop.f32.mrf.mxu0
      %3036 = vmatprep.mubr.f32.mxu0 0.0
      %3037 = vmatmul.mubr.f32.gmra.mxu0 %v2940
      %v3038 = vpop.f32.mrf.mxu0
      %v3039 = vadd.f32 0.0, %v3038
      %v3040 = vpop.f32.mrf.mxu0
      %3041 = vmatprep.mubr.f32.mxu0 0.0
      %3042 = vmatmul.mubr.f32.gmra.mxu0 %v2943
      %v3043 = vpop.f32.mrf.mxu0
      %v3044 = vadd.f32 0.0, %v3043
      %v3045 = vpop.f32.mrf.mxu0
      %3046 = vmatprep.mubr.f32.mxu0 0.0
      %3047 = vmatmul.mubr.f32.gmra.mxu0 %v2946
      %v3048 = vpop.f32.mrf.mxu0
      %v3049 = vadd.f32 0.0, %v3048
      %v3050 = vpop.f32.mrf.mxu0
      %3051 = vmatprep.mubr.f32.mxu0 0.0
      %3052 = vmatmul.mubr.f32.gmra.mxu0 %v2949
      %v3053 = vpop.f32.mrf.mxu0
      %v3054 = vadd.f32 0.0, %v3053
      %v3055 = vpop.f32.mrf.mxu0
      %3056 = vmatprep.mubr.f32.mxu0 0.0
      %3057 = vmatmul.mubr.f32.gmra.mxu0 %v2952
      %v3058 = vpop.f32.mrf.mxu0
      %v3059 = vadd.f32 0.0, %v3058
      %v3060 = vpop.f32.mrf.mxu0
      %3061 = vdwg.mxu0
      %v3062 = vadd.f32 %v2912, %v3024
      %v3063 = vadd.f32 %v2913, %v3029
      %v3064 = vadd.f32 %v2914, %v3034
      %v3065 = vadd.f32 %v2915, %v3039
      %v3066 = vadd.f32 %v2916, %v3044
      %v3067 = vadd.f32 %v2917, %v3049
      %v3068 = vadd.f32 %v2918, %v3054
      %v3069 = vadd.f32 %v2919, %v3059
      %v3070 = vld [vmem:[%s2467 + $0x2] sm:$0xff]
      %v3071 = vld [vmem:[%s2467 + $0x12] sm:$0xff]
      %v3072 = vld [vmem:[%s2467 + $0x22] sm:$0xff]
      %v3073 = vld [vmem:[%s2467 + $0x32] sm:$0xff]
      %v3074 = vld [vmem:[%s2467 + $0x42] sm:$0xff]
      %v3075 = vld [vmem:[%s2467 + $0x52] sm:$0xff]
      %v3076 = vld [vmem:[%s2467 + $0x62] sm:$0xff]
      %v3077 = vld [vmem:[%s2467 + $0x72] sm:$0xff]
      %s3078 = scalar_lea.vmem %s1, 76
      %v3079 = vld [vmem:[%s3078] sm:$0xf]
      %v3081 = vsel %vm213, %v3070, 0
      %v3084 = vsel %vm213, %v3071, 0
      %v3087 = vsel %vm213, %v3072, 0
      %v3090 = vsel %vm213, %v3073, 0
      %v3093 = vsel %vm213, %v3074, 0
      %v3096 = vsel %vm213, %v3075, 0
      %v3099 = vsel %vm213, %v3076, 0
      %v3102 = vsel %vm213, %v3077, 0
      %v3105 = vsel %vm238, %v3079, 0
      %3107 = vmatprep.subr.mxu0 0.0
      %3108 = vmatpush1.msra.mxu0 0.0
      %3109 = vmatprep.subr.mxu0 0.0
      %3110 = vmatpush1.msra.mxu0 0.0
      %3111 = vmatprep.subr.mxu0 0.0
      %3112 = vmatpush1.msra.mxu0 0.0
      %3113 = vmatprep.subr.mxu0 0.0
      %3114 = vmatpush1.msra.mxu0 0.0
      %3115 = vmatprep.subr.mxu0 0.0
      %3116 = vmatpush1.msra.mxu0 0.0
      %3117 = vmatprep.subr.mxu0 0.0
      %3118 = vmatpush1.msra.mxu0 0.0
      %3119 = vmatprep.subr.mxu0 0.0
      %3120 = vmatpush1.msra.mxu0 0.0
      %3121 = vmatprep.subr.mxu0 0.0
      %3122 = vmatpush1.msra.mxu0 0.0
      %3123 = vmatprep.subr.mxu0 0.0
      %3124 = vmatpush1.msra.mxu0 0.0
      %3125 = vmatprep.subr.mxu0 0.0
      %3126 = vmatpush1.msra.mxu0 0.0
      %3127 = vmatprep.subr.mxu0 0.0
      %3128 = vmatpush1.msra.mxu0 0.0
      %3129 = vmatprep.subr.mxu0 0.0
      %3130 = vmatpush1.msra.mxu0 0.0
      %3131 = vmatprep.subr.mxu0 0.0
      %3132 = vmatpush1.msra.mxu0 0.0
      %3133 = vmatprep.subr.mxu0 0.0
      %3134 = vmatpush1.msra.mxu0 0.0
      %3135 = vmatprep.subr.mxu0 0.0
      %3136 = vmatpush1.msra.mxu0 0.0
      %3137 = vmatprep.subr.mxu0 0.0
      %3138 = vmatpush1.msra.mxu0 %v3105
      %3139 = vmatprep.subr.mxu0 0.0
      %3140 = vmatpush2.msra.mxu0 0.0
      %3141 = vmatprep.subr.mxu0 0.0
      %3142 = vmatpush2.msra.mxu0 0.0
      %3143 = vmatprep.subr.mxu0 0.0
      %3144 = vmatpush2.msra.mxu0 0.0
      %3145 = vmatprep.subr.mxu0 0.0
      %3146 = vmatpush2.msra.mxu0 0.0
      %3147 = vmatprep.subr.mxu0 0.0
      %3148 = vmatpush2.msra.mxu0 0.0
      %3149 = vmatprep.subr.mxu0 0.0
      %3150 = vmatpush2.msra.mxu0 0.0
      %3151 = vmatprep.subr.mxu0 0.0
      %3152 = vmatpush2.msra.mxu0 0.0
      %3153 = vmatprep.subr.mxu0 0.0
      %3154 = vmatpush2.msra.mxu0 0.0
      %3155 = vmatprep.subr.mxu0 0.0
      %3156 = vmatpush2.msra.mxu0 0.0
      %3157 = vmatprep.subr.mxu0 0.0
      %3158 = vmatpush2.msra.mxu0 0.0
      %3159 = vmatprep.subr.mxu0 0.0
      %3160 = vmatpush2.msra.mxu0 0.0
      %3161 = vmatprep.subr.mxu0 0.0
      %3162 = vmatpush2.msra.mxu0 0.0
      %3163 = vmatprep.subr.mxu0 0.0
      %3164 = vmatpush2.msra.mxu0 0.0
      %3165 = vmatprep.subr.mxu0 0.0
      %3166 = vmatpush2.msra.mxu0 0.0
      %3167 = vmatprep.subr.mxu0 0.0
      %3168 = vmatpush2.msra.mxu0 0.0
      %3169 = vmatprep.subr.mxu0 0.0
      %3170 = vmatpush2.msra.mxu0 0.0
      %3171 = vmatprep.mubr.f32.mxu0 0.0
      %3172 = vmatmul.mubr.f32.gmra.mxu0 %v3081
      %v3173 = vpop.f32.mrf.mxu0
      %v3174 = vadd.f32 0.0, %v3173
      %v3175 = vpop.f32.mrf.mxu0
      %3176 = vmatprep.mubr.f32.mxu0 0.0
      %3177 = vmatmul.mubr.f32.gmra.mxu0 %v3084
      %v3178 = vpop.f32.mrf.mxu0
      %v3179 = vadd.f32 0.0, %v3178
      %v3180 = vpop.f32.mrf.mxu0
      %3181 = vmatprep.mubr.f32.mxu0 0.0
      %3182 = vmatmul.mubr.f32.gmra.mxu0 %v3087
      %v3183 = vpop.f32.mrf.mxu0
      %v3184 = vadd.f32 0.0, %v3183
      %v3185 = vpop.f32.mrf.mxu0
      %3186 = vmatprep.mubr.f32.mxu0 0.0
      %3187 = vmatmul.mubr.f32.gmra.mxu0 %v3090
      %v3188 = vpop.f32.mrf.mxu0
      %v3189 = vadd.f32 0.0, %v3188
      %v3190 = vpop.f32.mrf.mxu0
      %3191 = vmatprep.mubr.f32.mxu0 0.0
      %3192 = vmatmul.mubr.f32.gmra.mxu0 %v3093
      %v3193 = vpop.f32.mrf.mxu0
      %v3194 = vadd.f32 0.0, %v3193
      %v3195 = vpop.f32.mrf.mxu0
      %3196 = vmatprep.mubr.f32.mxu0 0.0
      %3197 = vmatmul.mubr.f32.gmra.mxu0 %v3096
      %v3198 = vpop.f32.mrf.mxu0
      %v3199 = vadd.f32 0.0, %v3198
      %v3200 = vpop.f32.mrf.mxu0
      %3201 = vmatprep.mubr.f32.mxu0 0.0
      %3202 = vmatmul.mubr.f32.gmra.mxu0 %v3099
      %v3203 = vpop.f32.mrf.mxu0
      %v3204 = vadd.f32 0.0, %v3203
      %v3205 = vpop.f32.mrf.mxu0
      %3206 = vmatprep.mubr.f32.mxu0 0.0
      %3207 = vmatmul.mubr.f32.gmra.mxu0 %v3102
      %v3208 = vpop.f32.mrf.mxu0
      %v3209 = vadd.f32 0.0, %v3208
      %v3210 = vpop.f32.mrf.mxu0
      %3211 = vdwg.mxu0
      %v3212 = vadd.f32 %v3062, %v3174
      %v3213 = vadd.f32 %v3063, %v3179
      %v3214 = vadd.f32 %v3064, %v3184
      %v3215 = vadd.f32 %v3065, %v3189
      %v3216 = vadd.f32 %v3066, %v3194
      %v3217 = vadd.f32 %v3067, %v3199
      %v3218 = vadd.f32 %v3068, %v3204
      %v3219 = vadd.f32 %v3069, %v3209
      %s3220 = sadd.s32 %s194, 2
      %s3221 = smul.u32 %s3220, 16
      %s3222 = scalar_lea.vmem %s183, %s3221
      %v3223 = vld [vmem:[%s3222] sm:$0xff]
      %v3224 = vld [vmem:[%s3222 + $0x10] sm:$0xff]
      %v3225 = vld [vmem:[%s3222 + $0x20] sm:$0xff]
      %v3226 = vld [vmem:[%s3222 + $0x30] sm:$0xff]
      %v3227 = vld [vmem:[%s3222 + $0x40] sm:$0xff]
      %v3228 = vld [vmem:[%s3222 + $0x50] sm:$0xff]
      %v3229 = vld [vmem:[%s3222 + $0x60] sm:$0xff]
      %v3230 = vld [vmem:[%s3222 + $0x70] sm:$0xff]
      %s3231 = scalar_lea.vmem %s1, 80
      %v3232 = vld [vmem:[%s3231] sm:$0xf]
      %v3234 = vsel %vm213, %v3223, 0
      %v3237 = vsel %vm213, %v3224, 0
      %v3240 = vsel %vm213, %v3225, 0
      %v3243 = vsel %vm213, %v3226, 0
      %v3246 = vsel %vm213, %v3227, 0
      %v3249 = vsel %vm213, %v3228, 0
      %v3252 = vsel %vm213, %v3229, 0
      %v3255 = vsel %vm213, %v3230, 0
      %v3258 = vsel %vm238, %v3232, 0
      %3260 = vmatprep.subr.mxu0 0.0
      %3261 = vmatpush1.msra.mxu0 0.0
      %3262 = vmatprep.subr.mxu0 0.0
      %3263 = vmatpush1.msra.mxu0 0.0
      %3264 = vmatprep.subr.mxu0 0.0
      %3265 = vmatpush1.msra.mxu0 0.0
      %3266 = vmatprep.subr.mxu0 0.0
      %3267 = vmatpush1.msra.mxu0 0.0
      %3268 = vmatprep.subr.mxu0 0.0
      %3269 = vmatpush1.msra.mxu0 0.0
      %3270 = vmatprep.subr.mxu0 0.0
      %3271 = vmatpush1.msra.mxu0 0.0
      %3272 = vmatprep.subr.mxu0 0.0
      %3273 = vmatpush1.msra.mxu0 0.0
      %3274 = vmatprep.subr.mxu0 0.0
      %3275 = vmatpush1.msra.mxu0 0.0
      %3276 = vmatprep.subr.mxu0 0.0
      %3277 = vmatpush1.msra.mxu0 0.0
      %3278 = vmatprep.subr.mxu0 0.0
      %3279 = vmatpush1.msra.mxu0 0.0
      %3280 = vmatprep.subr.mxu0 0.0
      %3281 = vmatpush1.msra.mxu0 0.0
      %3282 = vmatprep.subr.mxu0 0.0
      %3283 = vmatpush1.msra.mxu0 0.0
      %3284 = vmatprep.subr.mxu0 0.0
      %3285 = vmatpush1.msra.mxu0 0.0
      %3286 = vmatprep.subr.mxu0 0.0
      %3287 = vmatpush1.msra.mxu0 0.0
      %3288 = vmatprep.subr.mxu0 0.0
      %3289 = vmatpush1.msra.mxu0 0.0
      %3290 = vmatprep.subr.mxu0 0.0
      %3291 = vmatpush1.msra.mxu0 %v3258
      %3292 = vmatprep.subr.mxu0 0.0
      %3293 = vmatpush2.msra.mxu0 0.0
      %3294 = vmatprep.subr.mxu0 0.0
      %3295 = vmatpush2.msra.mxu0 0.0
      %3296 = vmatprep.subr.mxu0 0.0
      %3297 = vmatpush2.msra.mxu0 0.0
      %3298 = vmatprep.subr.mxu0 0.0
      %3299 = vmatpush2.msra.mxu0 0.0
      %3300 = vmatprep.subr.mxu0 0.0
      %3301 = vmatpush2.msra.mxu0 0.0
      %3302 = vmatprep.subr.mxu0 0.0
      %3303 = vmatpush2.msra.mxu0 0.0
      %3304 = vmatprep.subr.mxu0 0.0
      %3305 = vmatpush2.msra.mxu0 0.0
      %3306 = vmatprep.subr.mxu0 0.0
      %3307 = vmatpush2.msra.mxu0 0.0
      %3308 = vmatprep.subr.mxu0 0.0
      %3309 = vmatpush2.msra.mxu0 0.0
      %3310 = vmatprep.subr.mxu0 0.0
      %3311 = vmatpush2.msra.mxu0 0.0
      %3312 = vmatprep.subr.mxu0 0.0
      %3313 = vmatpush2.msra.mxu0 0.0
      %3314 = vmatprep.subr.mxu0 0.0
      %3315 = vmatpush2.msra.mxu0 0.0
      %3316 = vmatprep.subr.mxu0 0.0
      %3317 = vmatpush2.msra.mxu0 0.0
      %3318 = vmatprep.subr.mxu0 0.0
      %3319 = vmatpush2.msra.mxu0 0.0
      %3320 = vmatprep.subr.mxu0 0.0
      %3321 = vmatpush2.msra.mxu0 0.0
      %3322 = vmatprep.subr.mxu0 0.0
      %3323 = vmatpush2.msra.mxu0 0.0
      %3324 = vmatprep.mubr.f32.mxu0 0.0
      %3325 = vmatmul.mubr.f32.gmra.mxu0 %v3234
      %v3326 = vpop.f32.mrf.mxu0
      %v3327 = vadd.f32 0.0, %v3326
      %v3328 = vpop.f32.mrf.mxu0
      %3329 = vmatprep.mubr.f32.mxu0 0.0
      %3330 = vmatmul.mubr.f32.gmra.mxu0 %v3237
      %v3331 = vpop.f32.mrf.mxu0
      %v3332 = vadd.f32 0.0, %v3331
      %v3333 = vpop.f32.mrf.mxu0
      %3334 = vmatprep.mubr.f32.mxu0 0.0
      %3335 = vmatmul.mubr.f32.gmra.mxu0 %v3240
      %v3336 = vpop.f32.mrf.mxu0
      %v3337 = vadd.f32 0.0, %v3336
      %v3338 = vpop.f32.mrf.mxu0
      %3339 = vmatprep.mubr.f32.mxu0 0.0
      %3340 = vmatmul.mubr.f32.gmra.mxu0 %v3243
      %v3341 = vpop.f32.mrf.mxu0
      %v3342 = vadd.f32 0.0, %v3341
      %v3343 = vpop.f32.mrf.mxu0
      %3344 = vmatprep.mubr.f32.mxu0 0.0
      %3345 = vmatmul.mubr.f32.gmra.mxu0 %v3246
      %v3346 = vpop.f32.mrf.mxu0
      %v3347 = vadd.f32 0.0, %v3346
      %v3348 = vpop.f32.mrf.mxu0
      %3349 = vmatprep.mubr.f32.mxu0 0.0
      %3350 = vmatmul.mubr.f32.gmra.mxu0 %v3249
      %v3351 = vpop.f32.mrf.mxu0
      %v3352 = vadd.f32 0.0, %v3351
      %v3353 = vpop.f32.mrf.mxu0
      %3354 = vmatprep.mubr.f32.mxu0 0.0
      %3355 = vmatmul.mubr.f32.gmra.mxu0 %v3252
      %v3356 = vpop.f32.mrf.mxu0
      %v3357 = vadd.f32 0.0, %v3356
      %v3358 = vpop.f32.mrf.mxu0
      %3359 = vmatprep.mubr.f32.mxu0 0.0
      %3360 = vmatmul.mubr.f32.gmra.mxu0 %v3255
      %v3361 = vpop.f32.mrf.mxu0
      %v3362 = vadd.f32 0.0, %v3361
      %v3363 = vpop.f32.mrf.mxu0
      %3364 = vdwg.mxu0
      %v3365 = vadd.f32 %v3212, %v3327
      %v3366 = vadd.f32 %v3213, %v3332
      %v3367 = vadd.f32 %v3214, %v3337
      %v3368 = vadd.f32 %v3215, %v3342
      %v3369 = vadd.f32 %v3216, %v3347
      %v3370 = vadd.f32 %v3217, %v3352
      %v3371 = vadd.f32 %v3218, %v3357
      %v3372 = vadd.f32 %v3219, %v3362
      %s3373 = sadd.s32 %s3221, 160
      %s3374 = scalar_lea.vmem %s183, %s3373
      %v3375 = vld [vmem:[%s3374] sm:$0xff]
      %v3376 = vld [vmem:[%s3374 + $0x10] sm:$0xff]
      %v3377 = vld [vmem:[%s3374 + $0x20] sm:$0xff]
      %v3378 = vld [vmem:[%s3374 + $0x30] sm:$0xff]
      %v3379 = vld [vmem:[%s3374 + $0x40] sm:$0xff]
      %v3380 = vld [vmem:[%s3374 + $0x50] sm:$0xff]
      %v3381 = vld [vmem:[%s3374 + $0x60] sm:$0xff]
      %v3382 = vld [vmem:[%s3374 + $0x70] sm:$0xff]
      %s3383 = scalar_lea.vmem %s1, 84
      %v3384 = vld [vmem:[%s3383] sm:$0xf]
      %v3386 = vsel %vm213, %v3375, 0
      %v3389 = vsel %vm213, %v3376, 0
      %v3392 = vsel %vm213, %v3377, 0
      %v3395 = vsel %vm213, %v3378, 0
      %v3398 = vsel %vm213, %v3379, 0
      %v3401 = vsel %vm213, %v3380, 0
      %v3404 = vsel %vm213, %v3381, 0
      %v3407 = vsel %vm213, %v3382, 0
      %v3410 = vsel %vm238, %v3384, 0
      %3412 = vmatprep.subr.mxu0 0.0
      %3413 = vmatpush1.msra.mxu0 0.0
      %3414 = vmatprep.subr.mxu0 0.0
      %3415 = vmatpush1.msra.mxu0 0.0
      %3416 = vmatprep.subr.mxu0 0.0
      %3417 = vmatpush1.msra.mxu0 0.0
      %3418 = vmatprep.subr.mxu0 0.0
      %3419 = vmatpush1.msra.mxu0 0.0
      %3420 = vmatprep.subr.mxu0 0.0
      %3421 = vmatpush1.msra.mxu0 0.0
      %3422 = vmatprep.subr.mxu0 0.0
      %3423 = vmatpush1.msra.mxu0 0.0
      %3424 = vmatprep.subr.mxu0 0.0
      %3425 = vmatpush1.msra.mxu0 0.0
      %3426 = vmatprep.subr.mxu0 0.0
      %3427 = vmatpush1.msra.mxu0 0.0
      %3428 = vmatprep.subr.mxu0 0.0
      %3429 = vmatpush1.msra.mxu0 0.0
      %3430 = vmatprep.subr.mxu0 0.0
      %3431 = vmatpush1.msra.mxu0 0.0
      %3432 = vmatprep.subr.mxu0 0.0
      %3433 = vmatpush1.msra.mxu0 0.0
      %3434 = vmatprep.subr.mxu0 0.0
      %3435 = vmatpush1.msra.mxu0 0.0
      %3436 = vmatprep.subr.mxu0 0.0
      %3437 = vmatpush1.msra.mxu0 0.0
      %3438 = vmatprep.subr.mxu0 0.0
      %3439 = vmatpush1.msra.mxu0 0.0
      %3440 = vmatprep.subr.mxu0 0.0
      %3441 = vmatpush1.msra.mxu0 0.0
      %3442 = vmatprep.subr.mxu0 0.0
      %3443 = vmatpush1.msra.mxu0 %v3410
      %3444 = vmatprep.subr.mxu0 0.0
      %3445 = vmatpush2.msra.mxu0 0.0
      %3446 = vmatprep.subr.mxu0 0.0
      %3447 = vmatpush2.msra.mxu0 0.0
      %3448 = vmatprep.subr.mxu0 0.0
      %3449 = vmatpush2.msra.mxu0 0.0
      %3450 = vmatprep.subr.mxu0 0.0
      %3451 = vmatpush2.msra.mxu0 0.0
      %3452 = vmatprep.subr.mxu0 0.0
      %3453 = vmatpush2.msra.mxu0 0.0
      %3454 = vmatprep.subr.mxu0 0.0
      %3455 = vmatpush2.msra.mxu0 0.0
      %3456 = vmatprep.subr.mxu0 0.0
      %3457 = vmatpush2.msra.mxu0 0.0
      %3458 = vmatprep.subr.mxu0 0.0
      %3459 = vmatpush2.msra.mxu0 0.0
      %3460 = vmatprep.subr.mxu0 0.0
      %3461 = vmatpush2.msra.mxu0 0.0
      %3462 = vmatprep.subr.mxu0 0.0
      %3463 = vmatpush2.msra.mxu0 0.0
      %3464 = vmatprep.subr.mxu0 0.0
      %3465 = vmatpush2.msra.mxu0 0.0
      %3466 = vmatprep.subr.mxu0 0.0
      %3467 = vmatpush2.msra.mxu0 0.0
      %3468 = vmatprep.subr.mxu0 0.0
      %3469 = vmatpush2.msra.mxu0 0.0
      %3470 = vmatprep.subr.mxu0 0.0
      %3471 = vmatpush2.msra.mxu0 0.0
      %3472 = vmatprep.subr.mxu0 0.0
      %3473 = vmatpush2.msra.mxu0 0.0
      %3474 = vmatprep.subr.mxu0 0.0
      %3475 = vmatpush2.msra.mxu0 0.0
      %3476 = vmatprep.mubr.f32.mxu0 0.0
      %3477 = vmatmul.mubr.f32.gmra.mxu0 %v3386
      %v3478 = vpop.f32.mrf.mxu0
      %v3479 = vadd.f32 0.0, %v3478
      %v3480 = vpop.f32.mrf.mxu0
      %3481 = vmatprep.mubr.f32.mxu0 0.0
      %3482 = vmatmul.mubr.f32.gmra.mxu0 %v3389
      %v3483 = vpop.f32.mrf.mxu0
      %v3484 = vadd.f32 0.0, %v3483
      %v3485 = vpop.f32.mrf.mxu0
      %3486 = vmatprep.mubr.f32.mxu0 0.0
      %3487 = vmatmul.mubr.f32.gmra.mxu0 %v3392
      %v3488 = vpop.f32.mrf.mxu0
      %v3489 = vadd.f32 0.0, %v3488
      %v3490 = vpop.f32.mrf.mxu0
      %3491 = vmatprep.mubr.f32.mxu0 0.0
      %3492 = vmatmul.mubr.f32.gmra.mxu0 %v3395
      %v3493 = vpop.f32.mrf.mxu0
      %v3494 = vadd.f32 0.0, %v3493
      %v3495 = vpop.f32.mrf.mxu0
      %3496 = vmatprep.mubr.f32.mxu0 0.0
      %3497 = vmatmul.mubr.f32.gmra.mxu0 %v3398
      %v3498 = vpop.f32.mrf.mxu0
      %v3499 = vadd.f32 0.0, %v3498
      %v3500 = vpop.f32.mrf.mxu0
      %3501 = vmatprep.mubr.f32.mxu0 0.0
      %3502 = vmatmul.mubr.f32.gmra.mxu0 %v3401
      %v3503 = vpop.f32.mrf.mxu0
      %v3504 = vadd.f32 0.0, %v3503
      %v3505 = vpop.f32.mrf.mxu0
      %3506 = vmatprep.mubr.f32.mxu0 0.0
      %3507 = vmatmul.mubr.f32.gmra.mxu0 %v3404
      %v3508 = vpop.f32.mrf.mxu0
      %v3509 = vadd.f32 0.0, %v3508
      %v3510 = vpop.f32.mrf.mxu0
      %3511 = vmatprep.mubr.f32.mxu0 0.0
      %3512 = vmatmul.mubr.f32.gmra.mxu0 %v3407
      %v3513 = vpop.f32.mrf.mxu0
      %v3514 = vadd.f32 0.0, %v3513
      %v3515 = vpop.f32.mrf.mxu0
      %3516 = vdwg.mxu0
      %v3517 = vadd.f32 %v3365, %v3479
      %v3518 = vadd.f32 %v3366, %v3484
      %v3519 = vadd.f32 %v3367, %v3489
      %v3520 = vadd.f32 %v3368, %v3494
      %v3521 = vadd.f32 %v3369, %v3499
      %v3522 = vadd.f32 %v3370, %v3504
      %v3523 = vadd.f32 %v3371, %v3509
      %v3524 = vadd.f32 %v3372, %v3514
      %v3525 = vld [vmem:[%s3222 + $0x1] sm:$0xff]
      %v3526 = vld [vmem:[%s3222 + $0x11] sm:$0xff]
      %v3527 = vld [vmem:[%s3222 + $0x21] sm:$0xff]
      %v3528 = vld [vmem:[%s3222 + $0x31] sm:$0xff]
      %v3529 = vld [vmem:[%s3222 + $0x41] sm:$0xff]
      %v3530 = vld [vmem:[%s3222 + $0x51] sm:$0xff]
      %v3531 = vld [vmem:[%s3222 + $0x61] sm:$0xff]
      %v3532 = vld [vmem:[%s3222 + $0x71] sm:$0xff]
      %s3533 = scalar_lea.vmem %s1, 88
      %v3534 = vld [vmem:[%s3533] sm:$0xf]
      %v3536 = vsel %vm213, %v3525, 0
      %v3539 = vsel %vm213, %v3526, 0
      %v3542 = vsel %vm213, %v3527, 0
      %v3545 = vsel %vm213, %v3528, 0
      %v3548 = vsel %vm213, %v3529, 0
      %v3551 = vsel %vm213, %v3530, 0
      %v3554 = vsel %vm213, %v3531, 0
      %v3557 = vsel %vm213, %v3532, 0
      %v3560 = vsel %vm238, %v3534, 0
      %3562 = vmatprep.subr.mxu0 0.0
      %3563 = vmatpush1.msra.mxu0 0.0
      %3564 = vmatprep.subr.mxu0 0.0
      %3565 = vmatpush1.msra.mxu0 0.0
      %3566 = vmatprep.subr.mxu0 0.0
      %3567 = vmatpush1.msra.mxu0 0.0
      %3568 = vmatprep.subr.mxu0 0.0
      %3569 = vmatpush1.msra.mxu0 0.0
      %3570 = vmatprep.subr.mxu0 0.0
      %3571 = vmatpush1.msra.mxu0 0.0
      %3572 = vmatprep.subr.mxu0 0.0
      %3573 = vmatpush1.msra.mxu0 0.0
      %3574 = vmatprep.subr.mxu0 0.0
      %3575 = vmatpush1.msra.mxu0 0.0
      %3576 = vmatprep.subr.mxu0 0.0
      %3577 = vmatpush1.msra.mxu0 0.0
      %3578 = vmatprep.subr.mxu0 0.0
      %3579 = vmatpush1.msra.mxu0 0.0
      %3580 = vmatprep.subr.mxu0 0.0
      %3581 = vmatpush1.msra.mxu0 0.0
      %3582 = vmatprep.subr.mxu0 0.0
      %3583 = vmatpush1.msra.mxu0 0.0
      %3584 = vmatprep.subr.mxu0 0.0
      %3585 = vmatpush1.msra.mxu0 0.0
      %3586 = vmatprep.subr.mxu0 0.0
      %3587 = vmatpush1.msra.mxu0 0.0
      %3588 = vmatprep.subr.mxu0 0.0
      %3589 = vmatpush1.msra.mxu0 0.0
      %3590 = vmatprep.subr.mxu0 0.0
      %3591 = vmatpush1.msra.mxu0 0.0
      %3592 = vmatprep.subr.mxu0 0.0
      %3593 = vmatpush1.msra.mxu0 %v3560
      %3594 = vmatprep.subr.mxu0 0.0
      %3595 = vmatpush2.msra.mxu0 0.0
      %3596 = vmatprep.subr.mxu0 0.0
      %3597 = vmatpush2.msra.mxu0 0.0
      %3598 = vmatprep.subr.mxu0 0.0
      %3599 = vmatpush2.msra.mxu0 0.0
      %3600 = vmatprep.subr.mxu0 0.0
      %3601 = vmatpush2.msra.mxu0 0.0
      %3602 = vmatprep.subr.mxu0 0.0
      %3603 = vmatpush2.msra.mxu0 0.0
      %3604 = vmatprep.subr.mxu0 0.0
      %3605 = vmatpush2.msra.mxu0 0.0
      %3606 = vmatprep.subr.mxu0 0.0
      %3607 = vmatpush2.msra.mxu0 0.0
      %3608 = vmatprep.subr.mxu0 0.0
      %3609 = vmatpush2.msra.mxu0 0.0
      %3610 = vmatprep.subr.mxu0 0.0
      %3611 = vmatpush2.msra.mxu0 0.0
      %3612 = vmatprep.subr.mxu0 0.0
      %3613 = vmatpush2.msra.mxu0 0.0
      %3614 = vmatprep.subr.mxu0 0.0
      %3615 = vmatpush2.msra.mxu0 0.0
      %3616 = vmatprep.subr.mxu0 0.0
      %3617 = vmatpush2.msra.mxu0 0.0
      %3618 = vmatprep.subr.mxu0 0.0
      %3619 = vmatpush2.msra.mxu0 0.0
      %3620 = vmatprep.subr.mxu0 0.0
      %3621 = vmatpush2.msra.mxu0 0.0
      %3622 = vmatprep.subr.mxu0 0.0
      %3623 = vmatpush2.msra.mxu0 0.0
      %3624 = vmatprep.subr.mxu0 0.0
      %3625 = vmatpush2.msra.mxu0 0.0
      %3626 = vmatprep.mubr.f32.mxu0 0.0
      %3627 = vmatmul.mubr.f32.gmra.mxu0 %v3536
      %v3628 = vpop.f32.mrf.mxu0
      %v3629 = vadd.f32 0.0, %v3628
      %v3630 = vpop.f32.mrf.mxu0
      %3631 = vmatprep.mubr.f32.mxu0 0.0
      %3632 = vmatmul.mubr.f32.gmra.mxu0 %v3539
      %v3633 = vpop.f32.mrf.mxu0
      %v3634 = vadd.f32 0.0, %v3633
      %v3635 = vpop.f32.mrf.mxu0
      %3636 = vmatprep.mubr.f32.mxu0 0.0
      %3637 = vmatmul.mubr.f32.gmra.mxu0 %v3542
      %v3638 = vpop.f32.mrf.mxu0
      %v3639 = vadd.f32 0.0, %v3638
      %v3640 = vpop.f32.mrf.mxu0
      %3641 = vmatprep.mubr.f32.mxu0 0.0
      %3642 = vmatmul.mubr.f32.gmra.mxu0 %v3545
      %v3643 = vpop.f32.mrf.mxu0
      %v3644 = vadd.f32 0.0, %v3643
      %v3645 = vpop.f32.mrf.mxu0
      %3646 = vmatprep.mubr.f32.mxu0 0.0
      %3647 = vmatmul.mubr.f32.gmra.mxu0 %v3548
      %v3648 = vpop.f32.mrf.mxu0
      %v3649 = vadd.f32 0.0, %v3648
      %v3650 = vpop.f32.mrf.mxu0
      %3651 = vmatprep.mubr.f32.mxu0 0.0
      %3652 = vmatmul.mubr.f32.gmra.mxu0 %v3551
      %v3653 = vpop.f32.mrf.mxu0
      %v3654 = vadd.f32 0.0, %v3653
      %v3655 = vpop.f32.mrf.mxu0
      %3656 = vmatprep.mubr.f32.mxu0 0.0
      %3657 = vmatmul.mubr.f32.gmra.mxu0 %v3554
      %v3658 = vpop.f32.mrf.mxu0
      %v3659 = vadd.f32 0.0, %v3658
      %v3660 = vpop.f32.mrf.mxu0
      %3661 = vmatprep.mubr.f32.mxu0 0.0
      %3662 = vmatmul.mubr.f32.gmra.mxu0 %v3557
      %v3663 = vpop.f32.mrf.mxu0
      %v3664 = vadd.f32 0.0, %v3663
      %v3665 = vpop.f32.mrf.mxu0
      %3666 = vdwg.mxu0
      %v3667 = vadd.f32 %v3517, %v3629
      %v3668 = vadd.f32 %v3518, %v3634
      %v3669 = vadd.f32 %v3519, %v3639
      %v3670 = vadd.f32 %v3520, %v3644
      %v3671 = vadd.f32 %v3521, %v3649
      %v3672 = vadd.f32 %v3522, %v3654
      %v3673 = vadd.f32 %v3523, %v3659
      %v3674 = vadd.f32 %v3524, %v3664
      %v3675 = vld [vmem:[%s3374 + $0x1] sm:$0xff]
      %v3676 = vld [vmem:[%s3374 + $0x11] sm:$0xff]
      %v3677 = vld [vmem:[%s3374 + $0x21] sm:$0xff]
      %v3678 = vld [vmem:[%s3374 + $0x31] sm:$0xff]
      %v3679 = vld [vmem:[%s3374 + $0x41] sm:$0xff]
      %v3680 = vld [vmem:[%s3374 + $0x51] sm:$0xff]
      %v3681 = vld [vmem:[%s3374 + $0x61] sm:$0xff]
      %v3682 = vld [vmem:[%s3374 + $0x71] sm:$0xff]
      %s3683 = scalar_lea.vmem %s1, 92
      %v3684 = vld [vmem:[%s3683] sm:$0xf]
      %v3686 = vsel %vm213, %v3675, 0
      %v3689 = vsel %vm213, %v3676, 0
      %v3692 = vsel %vm213, %v3677, 0
      %v3695 = vsel %vm213, %v3678, 0
      %v3698 = vsel %vm213, %v3679, 0
      %v3701 = vsel %vm213, %v3680, 0
      %v3704 = vsel %vm213, %v3681, 0
      %v3707 = vsel %vm213, %v3682, 0
      %v3710 = vsel %vm238, %v3684, 0
      %3712 = vmatprep.subr.mxu0 0.0
      %3713 = vmatpush1.msra.mxu0 0.0
      %3714 = vmatprep.subr.mxu0 0.0
      %3715 = vmatpush1.msra.mxu0 0.0
      %3716 = vmatprep.subr.mxu0 0.0
      %3717 = vmatpush1.msra.mxu0 0.0
      %3718 = vmatprep.subr.mxu0 0.0
      %3719 = vmatpush1.msra.mxu0 0.0
      %3720 = vmatprep.subr.mxu0 0.0
      %3721 = vmatpush1.msra.mxu0 0.0
      %3722 = vmatprep.subr.mxu0 0.0
      %3723 = vmatpush1.msra.mxu0 0.0
      %3724 = vmatprep.subr.mxu0 0.0
      %3725 = vmatpush1.msra.mxu0 0.0
      %3726 = vmatprep.subr.mxu0 0.0
      %3727 = vmatpush1.msra.mxu0 0.0
      %3728 = vmatprep.subr.mxu0 0.0
      %3729 = vmatpush1.msra.mxu0 0.0
      %3730 = vmatprep.subr.mxu0 0.0
      %3731 = vmatpush1.msra.mxu0 0.0
      %3732 = vmatprep.subr.mxu0 0.0
      %3733 = vmatpush1.msra.mxu0 0.0
      %3734 = vmatprep.subr.mxu0 0.0
      %3735 = vmatpush1.msra.mxu0 0.0
      %3736 = vmatprep.subr.mxu0 0.0
      %3737 = vmatpush1.msra.mxu0 0.0
      %3738 = vmatprep.subr.mxu0 0.0
      %3739 = vmatpush1.msra.mxu0 0.0
      %3740 = vmatprep.subr.mxu0 0.0
      %3741 = vmatpush1.msra.mxu0 0.0
      %3742 = vmatprep.subr.mxu0 0.0
      %3743 = vmatpush1.msra.mxu0 %v3710
      %3744 = vmatprep.subr.mxu0 0.0
      %3745 = vmatpush2.msra.mxu0 0.0
      %3746 = vmatprep.subr.mxu0 0.0
      %3747 = vmatpush2.msra.mxu0 0.0
      %3748 = vmatprep.subr.mxu0 0.0
      %3749 = vmatpush2.msra.mxu0 0.0
      %3750 = vmatprep.subr.mxu0 0.0
      %3751 = vmatpush2.msra.mxu0 0.0
      %3752 = vmatprep.subr.mxu0 0.0
      %3753 = vmatpush2.msra.mxu0 0.0
      %3754 = vmatprep.subr.mxu0 0.0
      %3755 = vmatpush2.msra.mxu0 0.0
      %3756 = vmatprep.subr.mxu0 0.0
      %3757 = vmatpush2.msra.mxu0 0.0
      %3758 = vmatprep.subr.mxu0 0.0
      %3759 = vmatpush2.msra.mxu0 0.0
      %3760 = vmatprep.subr.mxu0 0.0
      %3761 = vmatpush2.msra.mxu0 0.0
      %3762 = vmatprep.subr.mxu0 0.0
      %3763 = vmatpush2.msra.mxu0 0.0
      %3764 = vmatprep.subr.mxu0 0.0
      %3765 = vmatpush2.msra.mxu0 0.0
      %3766 = vmatprep.subr.mxu0 0.0
      %3767 = vmatpush2.msra.mxu0 0.0
      %3768 = vmatprep.subr.mxu0 0.0
      %3769 = vmatpush2.msra.mxu0 0.0
      %3770 = vmatprep.subr.mxu0 0.0
      %3771 = vmatpush2.msra.mxu0 0.0
      %3772 = vmatprep.subr.mxu0 0.0
      %3773 = vmatpush2.msra.mxu0 0.0
      %3774 = vmatprep.subr.mxu0 0.0
      %3775 = vmatpush2.msra.mxu0 0.0
      %3776 = vmatprep.mubr.f32.mxu0 0.0
      %3777 = vmatmul.mubr.f32.gmra.mxu0 %v3686
      %v3778 = vpop.f32.mrf.mxu0
      %v3779 = vadd.f32 0.0, %v3778
      %v3780 = vpop.f32.mrf.mxu0
      %3781 = vmatprep.mubr.f32.mxu0 0.0
      %3782 = vmatmul.mubr.f32.gmra.mxu0 %v3689
      %v3783 = vpop.f32.mrf.mxu0
      %v3784 = vadd.f32 0.0, %v3783
      %v3785 = vpop.f32.mrf.mxu0
      %3786 = vmatprep.mubr.f32.mxu0 0.0
      %3787 = vmatmul.mubr.f32.gmra.mxu0 %v3692
      %v3788 = vpop.f32.mrf.mxu0
      %v3789 = vadd.f32 0.0, %v3788
      %v3790 = vpop.f32.mrf.mxu0
      %3791 = vmatprep.mubr.f32.mxu0 0.0
      %3792 = vmatmul.mubr.f32.gmra.mxu0 %v3695
      %v3793 = vpop.f32.mrf.mxu0
      %v3794 = vadd.f32 0.0, %v3793
      %v3795 = vpop.f32.mrf.mxu0
      %3796 = vmatprep.mubr.f32.mxu0 0.0
      %3797 = vmatmul.mubr.f32.gmra.mxu0 %v3698
      %v3798 = vpop.f32.mrf.mxu0
      %v3799 = vadd.f32 0.0, %v3798
      %v3800 = vpop.f32.mrf.mxu0
      %3801 = vmatprep.mubr.f32.mxu0 0.0
      %3802 = vmatmul.mubr.f32.gmra.mxu0 %v3701
      %v3803 = vpop.f32.mrf.mxu0
      %v3804 = vadd.f32 0.0, %v3803
      %v3805 = vpop.f32.mrf.mxu0
      %3806 = vmatprep.mubr.f32.mxu0 0.0
      %3807 = vmatmul.mubr.f32.gmra.mxu0 %v3704
      %v3808 = vpop.f32.mrf.mxu0
      %v3809 = vadd.f32 0.0, %v3808
      %v3810 = vpop.f32.mrf.mxu0
      %3811 = vmatprep.mubr.f32.mxu0 0.0
      %3812 = vmatmul.mubr.f32.gmra.mxu0 %v3707
      %v3813 = vpop.f32.mrf.mxu0
      %v3814 = vadd.f32 0.0, %v3813
      %v3815 = vpop.f32.mrf.mxu0
      %3816 = vdwg.mxu0
      %v3817 = vadd.f32 %v3667, %v3779
      %v3818 = vadd.f32 %v3668, %v3784
      %v3819 = vadd.f32 %v3669, %v3789
      %v3820 = vadd.f32 %v3670, %v3794
      %v3821 = vadd.f32 %v3671, %v3799
      %v3822 = vadd.f32 %v3672, %v3804
      %v3823 = vadd.f32 %v3673, %v3809
      %v3824 = vadd.f32 %v3674, %v3814
      %v3825 = vld [vmem:[%s3222 + $0x2] sm:$0xff]
      %v3826 = vld [vmem:[%s3222 + $0x12] sm:$0xff]
      %v3827 = vld [vmem:[%s3222 + $0x22] sm:$0xff]
      %v3828 = vld [vmem:[%s3222 + $0x32] sm:$0xff]
      %v3829 = vld [vmem:[%s3222 + $0x42] sm:$0xff]
      %v3830 = vld [vmem:[%s3222 + $0x52] sm:$0xff]
      %v3831 = vld [vmem:[%s3222 + $0x62] sm:$0xff]
      %v3832 = vld [vmem:[%s3222 + $0x72] sm:$0xff]
      %s3833 = scalar_lea.vmem %s1, 96
      %v3834 = vld [vmem:[%s3833] sm:$0xf]
      %v3836 = vsel %vm213, %v3825, 0
      %v3839 = vsel %vm213, %v3826, 0
      %v3842 = vsel %vm213, %v3827, 0
      %v3845 = vsel %vm213, %v3828, 0
      %v3848 = vsel %vm213, %v3829, 0
      %v3851 = vsel %vm213, %v3830, 0
      %v3854 = vsel %vm213, %v3831, 0
      %v3857 = vsel %vm213, %v3832, 0
      %v3860 = vsel %vm238, %v3834, 0
      %3862 = vmatprep.subr.mxu0 0.0
      %3863 = vmatpush1.msra.mxu0 0.0
      %3864 = vmatprep.subr.mxu0 0.0
      %3865 = vmatpush1.msra.mxu0 0.0
      %3866 = vmatprep.subr.mxu0 0.0
      %3867 = vmatpush1.msra.mxu0 0.0
      %3868 = vmatprep.subr.mxu0 0.0
      %3869 = vmatpush1.msra.mxu0 0.0
      %3870 = vmatprep.subr.mxu0 0.0
      %3871 = vmatpush1.msra.mxu0 0.0
      %3872 = vmatprep.subr.mxu0 0.0
      %3873 = vmatpush1.msra.mxu0 0.0
      %3874 = vmatprep.subr.mxu0 0.0
      %3875 = vmatpush1.msra.mxu0 0.0
      %3876 = vmatprep.subr.mxu0 0.0
      %3877 = vmatpush1.msra.mxu0 0.0
      %3878 = vmatprep.subr.mxu0 0.0
      %3879 = vmatpush1.msra.mxu0 0.0
      %3880 = vmatprep.subr.mxu0 0.0
      %3881 = vmatpush1.msra.mxu0 0.0
      %3882 = vmatprep.subr.mxu0 0.0
      %3883 = vmatpush1.msra.mxu0 0.0
      %3884 = vmatprep.subr.mxu0 0.0
      %3885 = vmatpush1.msra.mxu0 0.0
      %3886 = vmatprep.subr.mxu0 0.0
      %3887 = vmatpush1.msra.mxu0 0.0
      %3888 = vmatprep.subr.mxu0 0.0
      %3889 = vmatpush1.msra.mxu0 0.0
      %3890 = vmatprep.subr.mxu0 0.0
      %3891 = vmatpush1.msra.mxu0 0.0
      %3892 = vmatprep.subr.mxu0 0.0
      %3893 = vmatpush1.msra.mxu0 %v3860
      %3894 = vmatprep.subr.mxu0 0.0
      %3895 = vmatpush2.msra.mxu0 0.0
      %3896 = vmatprep.subr.mxu0 0.0
      %3897 = vmatpush2.msra.mxu0 0.0
      %3898 = vmatprep.subr.mxu0 0.0
      %3899 = vmatpush2.msra.mxu0 0.0
      %3900 = vmatprep.subr.mxu0 0.0
      %3901 = vmatpush2.msra.mxu0 0.0
      %3902 = vmatprep.subr.mxu0 0.0
      %3903 = vmatpush2.msra.mxu0 0.0
      %3904 = vmatprep.subr.mxu0 0.0
      %3905 = vmatpush2.msra.mxu0 0.0
      %3906 = vmatprep.subr.mxu0 0.0
      %3907 = vmatpush2.msra.mxu0 0.0
      %3908 = vmatprep.subr.mxu0 0.0
      %3909 = vmatpush2.msra.mxu0 0.0
      %3910 = vmatprep.subr.mxu0 0.0
      %3911 = vmatpush2.msra.mxu0 0.0
      %3912 = vmatprep.subr.mxu0 0.0
      %3913 = vmatpush2.msra.mxu0 0.0
      %3914 = vmatprep.subr.mxu0 0.0
      %3915 = vmatpush2.msra.mxu0 0.0
      %3916 = vmatprep.subr.mxu0 0.0
      %3917 = vmatpush2.msra.mxu0 0.0
      %3918 = vmatprep.subr.mxu0 0.0
      %3919 = vmatpush2.msra.mxu0 0.0
      %3920 = vmatprep.subr.mxu0 0.0
      %3921 = vmatpush2.msra.mxu0 0.0
      %3922 = vmatprep.subr.mxu0 0.0
      %3923 = vmatpush2.msra.mxu0 0.0
      %3924 = vmatprep.subr.mxu0 0.0
      %3925 = vmatpush2.msra.mxu0 0.0
      %3926 = vmatprep.mubr.f32.mxu0 0.0
      %3927 = vmatmul.mubr.f32.gmra.mxu0 %v3836
      %v3928 = vpop.f32.mrf.mxu0
      %v3929 = vadd.f32 0.0, %v3928
      %v3930 = vpop.f32.mrf.mxu0
      %3931 = vmatprep.mubr.f32.mxu0 0.0
      %3932 = vmatmul.mubr.f32.gmra.mxu0 %v3839
      %v3933 = vpop.f32.mrf.mxu0
      %v3934 = vadd.f32 0.0, %v3933
      %v3935 = vpop.f32.mrf.mxu0
      %3936 = vmatprep.mubr.f32.mxu0 0.0
      %3937 = vmatmul.mubr.f32.gmra.mxu0 %v3842
      %v3938 = vpop.f32.mrf.mxu0
      %v3939 = vadd.f32 0.0, %v3938
      %v3940 = vpop.f32.mrf.mxu0
      %3941 = vmatprep.mubr.f32.mxu0 0.0
      %3942 = vmatmul.mubr.f32.gmra.mxu0 %v3845
      %v3943 = vpop.f32.mrf.mxu0
      %v3944 = vadd.f32 0.0, %v3943
      %v3945 = vpop.f32.mrf.mxu0
      %3946 = vmatprep.mubr.f32.mxu0 0.0
      %3947 = vmatmul.mubr.f32.gmra.mxu0 %v3848
      %v3948 = vpop.f32.mrf.mxu0
      %v3949 = vadd.f32 0.0, %v3948
      %v3950 = vpop.f32.mrf.mxu0
      %3951 = vmatprep.mubr.f32.mxu0 0.0
      %3952 = vmatmul.mubr.f32.gmra.mxu0 %v3851
      %v3953 = vpop.f32.mrf.mxu0
      %v3954 = vadd.f32 0.0, %v3953
      %v3955 = vpop.f32.mrf.mxu0
      %3956 = vmatprep.mubr.f32.mxu0 0.0
      %3957 = vmatmul.mubr.f32.gmra.mxu0 %v3854
      %v3958 = vpop.f32.mrf.mxu0
      %v3959 = vadd.f32 0.0, %v3958
      %v3960 = vpop.f32.mrf.mxu0
      %3961 = vmatprep.mubr.f32.mxu0 0.0
      %3962 = vmatmul.mubr.f32.gmra.mxu0 %v3857
      %v3963 = vpop.f32.mrf.mxu0
      %v3964 = vadd.f32 0.0, %v3963
      %v3965 = vpop.f32.mrf.mxu0
      %3966 = vdwg.mxu0
      %v3967 = vadd.f32 %v3817, %v3929
      %v3968 = vadd.f32 %v3818, %v3934
      %v3969 = vadd.f32 %v3819, %v3939
      %v3970 = vadd.f32 %v3820, %v3944
      %v3971 = vadd.f32 %v3821, %v3949
      %v3972 = vadd.f32 %v3822, %v3954
      %v3973 = vadd.f32 %v3823, %v3959
      %v3974 = vadd.f32 %v3824, %v3964
      %vm3975 = vcmp.ge.f32.partialorder %v3967, 0.0
      %vm3976 = vcmp.ge.f32.partialorder %v3968, 0.0
      %vm3977 = vcmp.ge.f32.partialorder %v3969, 0.0
      %vm3978 = vcmp.ge.f32.partialorder %v3970, 0.0
      %vm3979 = vcmp.ge.f32.partialorder %v3971, 0.0
      %vm3980 = vcmp.ge.f32.partialorder %v3972, 0.0
      %vm3981 = vcmp.ge.f32.partialorder %v3973, 0.0
      %vm3982 = vcmp.ge.f32.partialorder %v3974, 0.0
      %v3983 = vmul.f32 %v3967, 0.1
      %v3984 = vmul.f32 %v3968, 0.1
      %v3985 = vmul.f32 %v3969, 0.1
      %v3986 = vmul.f32 %v3970, 0.1
      %v3987 = vmul.f32 %v3971, 0.1
      %v3988 = vmul.f32 %v3972, 0.1
      %v3989 = vmul.f32 %v3973, 0.1
      %v3990 = vmul.f32 %v3974, 0.1
      %v3991 = vsel %vm3975, %v3967, %v3983
      %v3992 = vsel %vm3976, %v3968, %v3984
      %v3993 = vsel %vm3977, %v3969, %v3985
      %v3994 = vsel %vm3978, %v3970, %v3986
      %v3995 = vsel %vm3979, %v3971, %v3987
      %v3996 = vsel %vm3980, %v3972, %v3988
      %v3997 = vsel %vm3981, %v3973, %v3989
      %v3998 = vsel %vm3982, %v3974, %v3990
      %vm3999 = vcmask 64512
      %4000 = vst.msk [vmem:[%s192] sm:$0xff] %vm3999, %v3991
      %4001 = vst.msk [vmem:[%s192 + $0x8] sm:$0xff] %vm3999, %v3992
      %4002 = vst.msk [vmem:[%s192 + $0x10] sm:$0xff] %vm3999, %v3993
      %4003 = vst.msk [vmem:[%s192 + $0x18] sm:$0xff] %vm3999, %v3994
      %4004 = vst.msk [vmem:[%s192 + $0x20] sm:$0xff] %vm3999, %v3995
      %4005 = vst.msk [vmem:[%s192 + $0x28] sm:$0xff] %vm3999, %v3996
      %4006 = vst.msk [vmem:[%s192 + $0x30] sm:$0xff] %vm3999, %v3997
      %4007 = vst.msk [vmem:[%s192 + $0x38] sm:$0xff] %vm3999, %v3998
      %s4008 = smul.u32 8, %s19
      %p4009 = scmp.lt.s32.totalorder %s18, 1
      %s4010 = scalar_select %p4009, %s18, 1
      %p4011 = scmp.lt.s32.totalorder %s4008, 7
      %s4012 = scalar_select %p4011, %s4008, 7
      %s4013 = smul.addr %s4010, 8
      %s4014 = sadd.s32 %s4012, %s4013
      %s4015 = smul.addr %s4014, 8
      %s4016 = scalar_lea.vmem %s3, %s4015
      // Predicated region
      $region33: #{tpu_custom_call.1} parent=31 // pred_check
        %p4017 = pneg %p114
      $region34: #{tpu_custom_call.1} parent=31 // pred_check_branch
        %4019 = sbr.rel (%p4017) target = $region36
      $region35: #{tpu_custom_call.1} parent=31 // pred_region
        %s4020 = smul.u32 8, %s19
      $region36: #{tpu_custom_call.1} parent=31 // pred_fallthru
        _
    $region32: #{tpu_custom_call.1} parent=5 // pred_fallthru
      _
    %p4021 = scmp.le.s32.totalorder 2, %s9
    // Predicated region
    $region37: #{tpu_custom_call.1} parent=5 // pred_check
      %p4022 = pneg %p4021
    $region38: #{tpu_custom_call.1} parent=5 // pred_check_branch
      %4024 = sbr.rel (%p4022) target = $region40
    $region39: #{tpu_custom_call.1} parent=5 // pred_region
      %s4025 = ssub.s32 %s9, 2
      // Predicated region
      $region41: #{tpu_custom_call.1} parent=39 // pred_check
        %p4026 = pneg %p120
      $region42: #{tpu_custom_call.1} parent=39 // pred_check_branch
        %4028 = sbr.rel (%p4026) target = $region44
      $region43: #{tpu_custom_call.1} parent=39 // pred_region
        %s4029 = smul.u32 8, %s21
        %p4030 = scmp.lt.s32.totalorder %s20, 1
        %s4031 = scalar_select %p4030, %s20, 1
        %p4032 = scmp.lt.s32.totalorder %s4029, 7
        %s4033 = scalar_select %p4032, %s4029, 7
        %s4034 = smul.addr %s4031, 8
        %s4035 = sadd.s32 %s4033, %s4034
        %s4036 = smul.addr %s4035, 8
        %s4037 = scalar_lea.vmem %s3, %s4036
      $region44: #{tpu_custom_call.1} parent=39 // pred_fallthru
        _
    $region40: #{tpu_custom_call.1} parent=5 // pred_fallthru
      _
  $region6: #{tpu_custom_call.1} parent=0 // loop_footer
    %s13 = sadd.s32 1, %s9
  $region7: #{tpu_custom_call.1} parent=0 // loop_footer_branch
    %8 = sbr.rel target = $region3
  $region8: #{tpu_custom_call.1} parent=0 // loop_exit
    _

</llo_original>
